<compile_context>
chip_gen: v5e
topology: v5e:2x2
jax: 0.10.0
libtpu: 0.0.40
codegen_flags: <defaults>
</compile_context>

<pallas_src>
import functools

import jax
import jax.numpy as jnp
from jax import lax
from jax.experimental import pallas as pl
from jax.experimental.pallas import tpu as pltpu


_L3_CHUNK = 256  # layer-3 output-column chunk (bounds live f32 intermediate)


# ----------------------------------------------------------------------------
# Fused kernel: per-point MLP (k->64->128->1024) + max over points + FC head.
# grid = (B, N // TN); the point-tile axis is a reduction ("arbitrary").
# ----------------------------------------------------------------------------
def stn_kernel(x_ref, w1_ref, b1_ref, w2_ref, b2_ref, w3_ref, b3_ref,
               w4_ref, b4_ref, w5_ref, b5_ref, w6_ref, b6i_ref,
               out_ref, acc_ref):
    n = pl.program_id(1)

    @pl.when(n == 0)
    def _():
        acc_ref[...] = jnp.full(acc_ref.shape, -jnp.inf, acc_ref.dtype)

    # ---- layers 1-2 in channels-major (C, TN): consumes the PyTorch NCW tile
    # directly with standard (cout, cin) x (cin, TN) dots (no narrow transpose).
    x = x_ref[0].astype(jnp.bfloat16)                          # (k, TN)
    h = jnp.dot(w1_ref[...], x,
                preferred_element_type=jnp.float32)            # (64, TN)
    h = jnp.maximum(h + b1_ref[...], 0.0)
    h = jnp.dot(w2_ref[...], h.astype(jnp.bfloat16),
                preferred_element_type=jnp.float32)            # (128, TN)
    h = jnp.maximum(h + b2_ref[...], 0.0)
    # Switch to points-major with a fully (8,128)-aligned f32 XLU transpose.
    h2 = h.T.astype(jnp.bfloat16)                              # (TN, 128)

    tn = h2.shape[0]
    # ---- layer 3, chunked over output columns.  Bias + ReLU commute with the
    # per-channel max over points, so they are deferred to the pooled row.
    for c0 in range(0, acc_ref.shape[1], _L3_CHUNK):
        part = jnp.dot(h2, w3_ref[:, c0:c0 + _L3_CHUNK],
                       preferred_element_type=jnp.float32)     # (TN, CHUNK)
        pmax = jnp.max(part.reshape(tn // 8, 8, _L3_CHUNK), axis=0)   # VPU (8, CHUNK)
        acc_ref[:, c0:c0 + _L3_CHUNK] = jnp.maximum(
            acc_ref[:, c0:c0 + _L3_CHUNK], pmax)

    # ---- epilogue on the last point tile: finish the pool + fused FC head.
    @pl.when(n == pl.num_programs(1) - 1)
    def _():
        pooled = jnp.max(acc_ref[...], axis=0, keepdims=True)  # (1, 1024) XLU
        pooled = jnp.maximum(pooled + b3_ref[...], 0.0)        # deferred b3 + ReLU
        # Broadcast to 8 sublanes so every MXU operand is sublane-aligned.
        h = jnp.broadcast_to(pooled, (8, pooled.shape[1]))
        h = jnp.dot(h.astype(jnp.bfloat16), w4_ref[...],
                    preferred_element_type=jnp.float32)        # (8, 512)
        h = jnp.maximum(h + b4_ref[...], 0.0)
        h = jnp.dot(h.astype(jnp.bfloat16), w5_ref[...],
                    preferred_element_type=jnp.float32)        # (8, 256)
        h = jnp.maximum(h + b5_ref[...], 0.0)
        h = jnp.dot(h.astype(jnp.bfloat16), w6_ref[...],
                    preferred_element_type=jnp.float32)        # (8, OUT_W)
        out_ref[0] = (h + b6i_ref[...])[0:1]                   # (1, OUT_W)


def stnkd_forward(x_bcn, folded, *, k, tn=512):
    """x_bcn: (B, k, N) float32 — PyTorch NCW convention.  Returns (B, k, k)."""
    (w1c, b1c), (w2c, b2c), (w3, b3), (w4, b4), (w5, b5), (w6, b6) = folded
    B, C, N = x_bcn.shape
    tn = min(tn, N)
    assert C == k, (C, k)
    assert N % tn == 0 and tn % 128 == 0, (N, tn)
    # TODO(synk): N not divisible by tn would need padded point columns masked
    # to -inf before the max; not needed for this harness.

    kk = k * k
    out_w = max(128, ((kk + 127) // 128) * 128)       # lane-dense output width
    # Fold the fc3 bias and the identity matrix into one additive row; pad to
    # the lane-dense width (exact zeros, sliced off in the wrapper).
    b6i = b6 + jnp.eye(k, dtype=jnp.float32).reshape(1, kk)
    if out_w != kk:
        w6p = jnp.pad(w6, ((0, 0), (0, out_w - kk)))
        b6ip = jnp.pad(b6i, ((0, 0), (0, out_w - kk)))
    else:
        w6p, b6ip = w6, b6i

    flops = (2 * B * N * (k * 64 + 64 * 128 + 128 * 1024)
             + 2 * B * (1024 * 512 + 512 * 256 + 256 * kk))
    bytes_accessed = (
        x_bcn.size * 4 + B * out_w * 4
        + (w1c.size + w2c.size + w3.size + w4.size + w5.size + w6p.size) * 2
        + (b1c.size + b2c.size + b3.size + b4.size + b5.size + b6ip.size) * 4)

    full = lambda a: pl.BlockSpec(a.shape, lambda b, n: (0,) * a.ndim)

    out = pl.pallas_call(
        stn_kernel,
        out_shape=jax.ShapeDtypeStruct((B, 1, out_w), jnp.float32),
        grid_spec=pltpu.PrefetchScalarGridSpec(
            num_scalar_prefetch=0,
            grid=(B, N // tn),
            in_specs=[
                pl.BlockSpec((1, k, tn), lambda b, n: (b, 0, n)),
                full(w1c), full(b1c), full(w2c), full(b2c),
                full(w3), full(b3),
                full(w4), full(b4), full(w5), full(b5),
                full(w6p), full(b6ip),
            ],
            out_specs=pl.BlockSpec((1, 1, out_w), lambda b, n: (b, 0, 0)),
            scratch_shapes=[pltpu.VMEM((8, 1024), jnp.float32)],
        ),
        compiler_params=pltpu.CompilerParams(
            dimension_semantics=("parallel", "arbitrary")),
        cost_estimate=pl.CostEstimate(
            flops=flops, transcendentals=0, bytes_accessed=bytes_accessed),
    )(x_bcn, w1c, b1c, w2c, b2c, w3, b3, w4, b4, w5, b5, w6p, b6ip)

    return out[:, 0, :kk].reshape(B, k, k)


# ----------------------------------------------------------------------------
# Deterministic parameter construction + BN(eval) folding (plain-JAX glue).
# ----------------------------------------------------------------------------
def make_params(key, k):
    ks = jax.random.split(key, 32)
    i = iter(range(32))

    def lin(cin, cout):
        w = 0.1 * jax.random.normal(ks[next(i)], (cout, cin), jnp.float32)
        b = 0.1 * jax.random.normal(ks[next(i)], (cout,), jnp.float32)
        return w, b

    def bn(c):
        gamma = jax.random.uniform(ks[next(i)], (c,), jnp.float32, 0.8, 1.2)
        beta = 0.1 * jax.random.normal(ks[next(i)], (c,), jnp.float32)
        mean = 0.1 * jax.random.normal(ks[next(i)], (c,), jnp.float32)
        var = jax.random.uniform(ks[next(i)], (c,), jnp.float32, 0.5, 1.5)
        return gamma, beta, mean, var

    return {
        "conv1": lin(k, 64),     "bn1": bn(64),
        "conv2": lin(64, 128),   "bn2": bn(128),
        "conv3": lin(128, 1024), "bn3": bn(1024),
        "fc1":   lin(1024, 512), "bn4": bn(512),
        "fc2":   lin(512, 256),  "bn5": bn(256),
        "fc3":   lin(256, k * k),
    }


def fold_bn(w, b, bn_params, eps=1e-5, *, w_dtype=jnp.bfloat16,
            channels_major=False):
    """Fold eval-mode BN into a linear layer.  w: (cout, cin)."""
    gamma, beta, mean, var = bn_params
    s = gamma / jnp.sqrt(var + eps)
    b_eff = ((b - mean) * s + beta).astype(jnp.float32)
    if channels_major:                                   # (cout, cin), bias (cout, 1)
        return (w * s[:, None]).astype(w_dtype), b_eff[:, None]
    return (w.T * s[None, :]).astype(w_dtype), b_eff[None, :]   # (cin, cout), (1, cout)


def fold_all(p):
    return (
        fold_bn(*p["conv1"], p["bn1"], channels_major=True),   # (64, k),  (64, 1)
        fold_bn(*p["conv2"], p["bn2"], channels_major=True),   # (128, 64),(128, 1)
        fold_bn(*p["conv3"], p["bn3"]),                        # (128,1024),(1,1024)
        fold_bn(*p["fc1"], p["bn4"]),                          # (1024,512),(1,512)
        fold_bn(*p["fc2"], p["bn5"]),                          # (512,256), (1,256)
        (p["fc3"][0].T.astype(jnp.bfloat16),
         p["fc3"][1][None, :].astype(jnp.float32)),            # (256,k*k), (1,k*k)
    )


# ----------------------------------------------------------------------------
# References.
#  * ref_forward_matched: same bf16 operand casts as the kernel (checks layout,
#    BN folding, deferred bias/relu, max-pool, FC fusion).
#  * ref_forward_f32: full-precision unfolded module semantics (HIGHEST
#    precision matmuls) — bounds the bf16-MXU error budget.
# ----------------------------------------------------------------------------
def ref_forward_matched(x_bcn, folded, k):
    (w1c, b1c), (w2c, b2c), (w3, b3), (w4, b4), (w5, b5), (w6, b6) = folded
    B = x_bcn.shape[0]
    f32 = jnp.float32
    h = jnp.transpose(x_bcn, (0, 2, 1)).astype(jnp.bfloat16)        # (B, N, k)
    h = jax.nn.relu(jnp.dot(h, w1c.T, preferred_element_type=f32)
                    + b1c.reshape(1, -1))
    h = jax.nn.relu(jnp.dot(h.astype(jnp.bfloat16), w2c.T,
                            preferred_element_type=f32) + b2c.reshape(1, -1))
    h = jax.nn.relu(jnp.dot(h.astype(jnp.bfloat16), w3,
                            preferred_element_type=f32) + b3)
    h = jnp.max(h, axis=1)                                          # (B, 1024)
    h = jax.nn.relu(jnp.dot(h.astype(jnp.bfloat16), w4,
                            preferred_element_type=f32) + b4)
    h = jax.nn.relu(jnp.dot(h.astype(jnp.bfloat16), w5,
                            preferred_element_type=f32) + b5)
    h = jnp.dot(h.astype(jnp.bfloat16), w6, preferred_element_type=f32) + b6
    h = h + jnp.eye(k, dtype=f32).reshape(1, k * k)
    return h.reshape(B, k, k)


def ref_forward_f32(x_bcn, p, k, eps=1e-5):
    hp = lax.Precision.HIGHEST

    def bn_apply(y, bnp):
        gamma, beta, mean, var = bnp
        return gamma * (y - mean) / jnp.sqrt(var + eps) + beta

    B = x_bcn.shape[0]
    h = jnp.transpose(x_bcn, (0, 2, 1))                             # (B, N, k)
    for conv, bn in (("conv1", "bn1"), ("conv2", "bn2"), ("conv3", "bn3")):
        w, b = p[conv]
        h = jax.nn.relu(bn_apply(jnp.dot(h, w.T, precision=hp) + b, p[bn]))
    h = jnp.max(h, axis=1)                                          # (B, 1024)
    for fc, bn in (("fc1", "bn4"), ("fc2", "bn5")):
        w, b = p[fc]
        h = jax.nn.relu(bn_apply(jnp.dot(h, w.T, precision=hp) + b, p[bn]))
    w, b = p["fc3"]
    h = jnp.dot(h, w.T, precision=hp) + b
    h = h + jnp.eye(k, dtype=h.dtype).reshape(1, k * k)
    return h.reshape(B, k, k)


if __name__ == "__main__":
    K = 16          # STNkd k (small for test; the module default k=64 also works)
    B = 2
    N = 1024        # number of points (exercises 2 reduction steps at TN=512)
    TN = 512        # MXU-aligned point tile

    key = jax.random.PRNGKey(0)
    pkey, xkey = jax.random.split(key)
    params = make_params(pkey, K)
    folded = fold_all(params)

    # PyTorch Conv1d input convention: (B, C=k, N)
    x = jax.random.normal(xkey, (B, K, N), jnp.float32)

    fwd = jax.jit(functools.partial(stnkd_forward, k=K, tn=TN))
    out = jax.block_until_ready(fwd(x, folded))
    assert out.shape == (B, K, K), out.shape
    assert bool(jnp.all(jnp.isfinite(out)))

    # Check 1: kernel logic vs a bf16-matched JAX reference (same operand casts
    # everywhere). Remaining differences are only f32 accumulation order, so the
    # scale-aware budget is generous on purpose (robust across HW / interpret).
    ref_m = ref_forward_matched(x, folded, K)
    err_m = float(jnp.max(jnp.abs(out - ref_m)))
    tol_m = 0.05 * max(1.0, float(jnp.max(jnp.abs(ref_m))))
    assert err_m < tol_m, (err_m, tol_m)

    # Check 2: full-precision (unfolded BN, f32 HIGHEST matmul) module
    # semantics — bounds the total bf16-MXU error budget.
    ref32 = ref_forward_f32(x, params, K)
    rel = float(jnp.linalg.norm(out - ref32) / jnp.linalg.norm(ref32))
    assert rel < 0.08, rel

    print("KERNEL_OK")
</pallas_src>

<mosaic_0001>
module attributes {stable_mosaic.version = 11 : i64} {
  func.func @stn_kernel(%arg0: i32, %arg1: i32, %arg2: memref<1x16x512xf32, #tpu.memory_space<vmem>>, %arg3: memref<64x16xbf16, #tpu.memory_space<vmem>>, %arg4: memref<64x1xf32, #tpu.memory_space<vmem>>, %arg5: memref<128x64xbf16, #tpu.memory_space<vmem>>, %arg6: memref<128x1xf32, #tpu.memory_space<vmem>>, %arg7: memref<128x1024xbf16, #tpu.memory_space<vmem>>, %arg8: memref<1x1024xf32, #tpu.memory_space<vmem>>, %arg9: memref<1024x512xbf16, #tpu.memory_space<vmem>>, %arg10: memref<1x512xf32, #tpu.memory_space<vmem>>, %arg11: memref<512x256xbf16, #tpu.memory_space<vmem>>, %arg12: memref<1x256xf32, #tpu.memory_space<vmem>>, %arg13: memref<256x256xbf16, #tpu.memory_space<vmem>>, %arg14: memref<1x256xf32, #tpu.memory_space<vmem>>, %arg15: memref<1x1x256xf32, #tpu.memory_space<vmem>>, %arg16: memref<8x1024xf32, #tpu.memory_space<vmem>>) attributes {dimension_semantics = [#tpu.dimension_semantics<parallel>, #tpu.dimension_semantics<arbitrary>], iteration_bounds = array<i64: 2, 2>, scalar_prefetch = 0 : i64, scratch_operands = 1 : i64, tpu.core_type = #tpu.core_type<tc>, window_params = [{transform_indices = @transform_0, window_bounds = array<i64: 1, 16, 512>}, {pipeline_mode = #tpu.pipeline_mode<synchronous>, transform_indices = @transform_1, window_bounds = array<i64: 64, 16>}, {pipeline_mode = #tpu.pipeline_mode<synchronous>, transform_indices = @transform_2, window_bounds = array<i64: 64, 1>}, {pipeline_mode = #tpu.pipeline_mode<synchronous>, transform_indices = @transform_3, window_bounds = array<i64: 128, 64>}, {pipeline_mode = #tpu.pipeline_mode<synchronous>, transform_indices = @transform_4, window_bounds = array<i64: 128, 1>}, {pipeline_mode = #tpu.pipeline_mode<synchronous>, transform_indices = @transform_5, window_bounds = array<i64: 128, 1024>}, {pipeline_mode = #tpu.pipeline_mode<synchronous>, transform_indices = @transform_6, window_bounds = array<i64: 1, 1024>}, {pipeline_mode = #tpu.pipeline_mode<synchronous>, transform_indices = @transform_7, window_bounds = array<i64: 1024, 512>}, {pipeline_mode = #tpu.pipeline_mode<synchronous>, transform_indices = @transform_8, window_bounds = array<i64: 1, 512>}, {pipeline_mode = #tpu.pipeline_mode<synchronous>, transform_indices = @transform_9, window_bounds = array<i64: 512, 256>}, {pipeline_mode = #tpu.pipeline_mode<synchronous>, transform_indices = @transform_10, window_bounds = array<i64: 1, 256>}, {pipeline_mode = #tpu.pipeline_mode<synchronous>, transform_indices = @transform_11, window_bounds = array<i64: 256, 256>}, {pipeline_mode = #tpu.pipeline_mode<synchronous>, transform_indices = @transform_12, window_bounds = array<i64: 1, 256>}, {transform_indices = @transform_13, window_bounds = array<i64: 1, 1, 256>}]} {
    %c0_i32 = arith.constant 0 : i32
    %0 = arith.cmpi eq, %arg1, %c0_i32 : i32
    %1 = arith.extui %0 : i1 to i32
    %c0_i32_0 = arith.constant 0 : i32
    %2 = arith.cmpi ne, %1, %c0_i32_0 : i32
    scf.if %2 {
      %cst_44 = arith.constant 0xFF800000 : f32
      %54 = vector.broadcast %cst_44 : f32 to vector<8x1024xf32>
      %c0_45 = arith.constant 0 : index
      %c0_46 = arith.constant 0 : index
      %55 = vector.load %arg16[%c0_45, %c0_46] : memref<8x1024xf32, #tpu.memory_space<vmem>>, vector<8x1024xf32>
      tpu.vector_store %arg16[%c0_45, %c0_46], %54 {strides = array<i32>} : memref<8x1024xf32, #tpu.memory_space<vmem>>, vector<8x1024xf32>,
    } else {
    }
    %c0 = arith.constant 0 : index
    %c0_1 = arith.constant 0 : index
    %c0_2 = arith.constant 0 : index
    %3 = vector.load %arg2[%c0, %c0_1, %c0_2] : memref<1x16x512xf32, #tpu.memory_space<vmem>>, vector<1x16x512xf32>
    %4 = vector.shape_cast %3 : vector<1x16x512xf32> to vector<16x512xf32>
    %5 = arith.truncf %4 : vector<16x512xf32> to vector<16x512xbf16>
    %c0_3 = arith.constant 0 : index
    %c0_4 = arith.constant 0 : index
    %6 = vector.load %arg3[%c0_3, %c0_4] : memref<64x16xbf16, #tpu.memory_space<vmem>>, vector<64x16xbf16>
    %cst = arith.constant dense<0.000000e+00> : vector<64x512xf32>
    %7 = tpu.matmul %6, %5, %cst {dimension_numbers = #tpu.dot_dimension_numbers<[1], [0], [0], [1], [0, 0, 1, 1], [], []>} : vector<64x16xbf16>, vector<16x512xbf16>, vector<64x512xf32> -> vector<64x512xf32>
    %c0_5 = arith.constant 0 : index
    %c0_6 = arith.constant 0 : index
    %8 = vector.load %arg4[%c0_5, %c0_6] : memref<64x1xf32, #tpu.memory_space<vmem>>, vector<64x1xf32>
    %9 = vector.broadcast %8 : vector<64x1xf32> to vector<64x512xf32>
    %10 = arith.addf %7, %9 : vector<64x512xf32>
    %cst_7 = arith.constant 0.000000e+00 : f32
    %11 = vector.broadcast %cst_7 : f32 to vector<64x512xf32>
    %12 = arith.maximumf %10, %11 : vector<64x512xf32>
    %c0_8 = arith.constant 0 : index
    %c0_9 = arith.constant 0 : index
    %13 = vector.load %arg5[%c0_8, %c0_9] : memref<128x64xbf16, #tpu.memory_space<vmem>>, vector<128x64xbf16>
    %14 = arith.truncf %12 : vector<64x512xf32> to vector<64x512xbf16>
    %cst_10 = arith.constant dense<0.000000e+00> : vector<128x512xf32>
    %15 = tpu.matmul %13, %14, %cst_10 {dimension_numbers = #tpu.dot_dimension_numbers<[1], [0], [0], [1], [0, 0, 1, 1], [], []>} : vector<128x64xbf16>, vector<64x512xbf16>, vector<128x512xf32> -> vector<128x512xf32>
    %c0_11 = arith.constant 0 : index
    %c0_12 = arith.constant 0 : index
    %16 = vector.load %arg6[%c0_11, %c0_12] : memref<128x1xf32, #tpu.memory_space<vmem>>, vector<128x1xf32>
    %17 = vector.broadcast %16 : vector<128x1xf32> to vector<128x512xf32>
    %18 = arith.addf %15, %17 : vector<128x512xf32>
    %cst_13 = arith.constant 0.000000e+00 : f32
    %19 = vector.broadcast %cst_13 : f32 to vector<128x512xf32>
    %20 = arith.maximumf %18, %19 : vector<128x512xf32>
    %21 = tpu.transpose %20, [1, 0] : vector<128x512xf32> -> vector<512x128xf32>
    %22 = arith.truncf %21 : vector<512x128xf32> to vector<512x128xbf16>
    %c0_14 = arith.constant 0 : index
    %c0_15 = arith.constant 0 : index
    %23 = vector.load %arg7[%c0_14, %c0_15] : memref<128x1024xbf16, #tpu.memory_space<vmem>>, vector<128x256xbf16>
    %cst_16 = arith.constant dense<0.000000e+00> : vector<512x256xf32>
    %24 = tpu.matmul %22, %23, %cst_16 {dimension_numbers = #tpu.dot_dimension_numbers<[1], [0], [0], [1], [0, 0, 1, 1], [], []>} : vector<512x128xbf16>, vector<128x256xbf16>, vector<512x256xf32> -> vector<512x256xf32>
    %25 = vector.shape_cast %24 : vector<512x256xf32> to vector<64x8x256xf32>
    %cst_17 = arith.constant dense<0xFF800000> : vector<8x256xf32>
    %26 = vector.multi_reduction <maximumf>, %25, %cst_17 [0] : vector<64x8x256xf32> to vector<8x256xf32>
    %c0_18 = arith.constant 0 : index
    %c0_19 = arith.constant 0 : index
    %27 = vector.load %arg16[%c0_18, %c0_19] : memref<8x1024xf32, #tpu.memory_space<vmem>>, vector<8x256xf32>
    %28 = arith.maximumf %27, %26 : vector<8x256xf32>
    %c0_20 = arith.constant 0 : index
    %c0_21 = arith.constant 0 : index
    %29 = vector.load %arg16[%c0_20, %c0_21] : memref<8x1024xf32, #tpu.memory_space<vmem>>, vector<8x256xf32>
    tpu.vector_store %arg16[%c0_20, %c0_21], %28 {strides = array<i32>} : memref<8x1024xf32, #tpu.memory_space<vmem>>, vector<8x256xf32>,
    %c0_22 = arith.constant 0 : index
    %c256 = arith.constant 256 : index
    %30 = vector.load %arg7[%c0_22, %c256] : memref<128x1024xbf16, #tpu.memory_space<vmem>>, vector<128x256xbf16>
    %cst_23 = arith.constant dense<0.000000e+00> : vector<512x256xf32>
    %31 = tpu.matmul %22, %30, %cst_23 {dimension_numbers = #tpu.dot_dimension_numbers<[1], [0], [0], [1], [0, 0, 1, 1], [], []>} : vector<512x128xbf16>, vector<128x256xbf16>, vector<512x256xf32> -> vector<512x256xf32>
    %32 = vector.shape_cast %31 : vector<512x256xf32> to vector<64x8x256xf32>
    %cst_24 = arith.constant dense<0xFF800000> : vector<8x256xf32>
    %33 = vector.multi_reduction <maximumf>, %32, %cst_24 [0] : vector<64x8x256xf32> to vector<8x256xf32>
    %c0_25 = arith.constant 0 : index
    %c256_26 = arith.constant 256 : index
    %34 = vector.load %arg16[%c0_25, %c256_26] : memref<8x1024xf32, #tpu.memory_space<vmem>>, vector<8x256xf32>
    %35 = arith.maximumf %34, %33 : vector<8x256xf32>
    %c0_27 = arith.constant 0 : index
    %c256_28 = arith.constant 256 : index
    %36 = vector.load %arg16[%c0_27, %c256_28] : memref<8x1024xf32, #tpu.memory_space<vmem>>, vector<8x256xf32>
    tpu.vector_store %arg16[%c0_27, %c256_28], %35 {strides = array<i32>} : memref<8x1024xf32, #tpu.memory_space<vmem>>, vector<8x256xf32>,
    %c0_29 = arith.constant 0 : index
    %c512 = arith.constant 512 : index
    %37 = vector.load %arg7[%c0_29, %c512] : memref<128x1024xbf16, #tpu.memory_space<vmem>>, vector<128x256xbf16>
    %cst_30 = arith.constant dense<0.000000e+00> : vector<512x256xf32>
    %38 = tpu.matmul %22, %37, %cst_30 {dimension_numbers = #tpu.dot_dimension_numbers<[1], [0], [0], [1], [0, 0, 1, 1], [], []>} : vector<512x128xbf16>, vector<128x256xbf16>, vector<512x256xf32> -> vector<512x256xf32>
    %39 = vector.shape_cast %38 : vector<512x256xf32> to vector<64x8x256xf32>
    %cst_31 = arith.constant dense<0xFF800000> : vector<8x256xf32>
    %40 = vector.multi_reduction <maximumf>, %39, %cst_31 [0] : vector<64x8x256xf32> to vector<8x256xf32>
    %c0_32 = arith.constant 0 : index
    %c512_33 = arith.constant 512 : index
    %41 = vector.load %arg16[%c0_32, %c512_33] : memref<8x1024xf32, #tpu.memory_space<vmem>>, vector<8x256xf32>
    %42 = arith.maximumf %41, %40 : vector<8x256xf32>
    %c0_34 = arith.constant 0 : index
    %c512_35 = arith.constant 512 : index
    %43 = vector.load %arg16[%c0_34, %c512_35] : memref<8x1024xf32, #tpu.memory_space<vmem>>, vector<8x256xf32>
    tpu.vector_store %arg16[%c0_34, %c512_35], %42 {strides = array<i32>} : memref<8x1024xf32, #tpu.memory_space<vmem>>, vector<8x256xf32>,
    %c0_36 = arith.constant 0 : index
    %c768 = arith.constant 768 : index
    %44 = vector.load %arg7[%c0_36, %c768] : memref<128x1024xbf16, #tpu.memory_space<vmem>>, vector<128x256xbf16>
    %cst_37 = arith.constant dense<0.000000e+00> : vector<512x256xf32>
    %45 = tpu.matmul %22, %44, %cst_37 {dimension_numbers = #tpu.dot_dimension_numbers<[1], [0], [0], [1], [0, 0, 1, 1], [], []>} : vector<512x128xbf16>, vector<128x256xbf16>, vector<512x256xf32> -> vector<512x256xf32>
    %46 = vector.shape_cast %45 : vector<512x256xf32> to vector<64x8x256xf32>
    %cst_38 = arith.constant dense<0xFF800000> : vector<8x256xf32>
    %47 = vector.multi_reduction <maximumf>, %46, %cst_38 [0] : vector<64x8x256xf32> to vector<8x256xf32>
    %c0_39 = arith.constant 0 : index
    %c768_40 = arith.constant 768 : index
    %48 = vector.load %arg16[%c0_39, %c768_40] : memref<8x1024xf32, #tpu.memory_space<vmem>>, vector<8x256xf32>
    %49 = arith.maximumf %48, %47 : vector<8x256xf32>
    %c0_41 = arith.constant 0 : index
    %c768_42 = arith.constant 768 : index
    %50 = vector.load %arg16[%c0_41, %c768_42] : memref<8x1024xf32, #tpu.memory_space<vmem>>, vector<8x256xf32>
    tpu.vector_store %arg16[%c0_41, %c768_42], %49 {strides = array<i32>} : memref<8x1024xf32, #tpu.memory_space<vmem>>, vector<8x256xf32>,
    %c1_i32 = arith.constant 1 : i32
    %51 = arith.cmpi eq, %arg1, %c1_i32 : i32
    %52 = arith.extui %51 : i1 to i32
    %c0_i32_43 = arith.constant 0 : i32
    %53 = arith.cmpi ne, %52, %c0_i32_43 : i32
    scf.if %53 {
      %c0_44 = arith.constant 0 : index
      %c0_45 = arith.constant 0 : index
      %54 = vector.load %arg16[%c0_44, %c0_45] : memref<8x1024xf32, #tpu.memory_space<vmem>>, vector<8x1024xf32>
      %cst_46 = arith.constant dense<0xFF800000> : vector<1024xf32>
      %55 = vector.multi_reduction <maximumf>, %54, %cst_46 [0] : vector<8x1024xf32> to vector<1024xf32>
      %56 = vector.shape_cast %55 : vector<1024xf32> to vector<1x1024xf32>
      %c0_47 = arith.constant 0 : index
      %c0_48 = arith.constant 0 : index
      %57 = vector.load %arg8[%c0_47, %c0_48] : memref<1x1024xf32, #tpu.memory_space<vmem>>, vector<1x1024xf32>
      %58 = arith.addf %56, %57 : vector<1x1024xf32>
      %cst_49 = arith.constant 0.000000e+00 : f32
      %59 = vector.broadcast %cst_49 : f32 to vector<1x1024xf32>
      %60 = arith.maximumf %58, %59 : vector<1x1024xf32>
      %61 = vector.shape_cast %60 : vector<1x1024xf32> to vector<1x1024xf32>
      %62 = vector.broadcast %61 : vector<1x1024xf32> to vector<8x1024xf32>
      %63 = arith.truncf %62 : vector<8x1024xf32> to vector<8x1024xbf16>
      %c0_50 = arith.constant 0 : index
      %c0_51 = arith.constant 0 : index
      %64 = vector.load %arg9[%c0_50, %c0_51] : memref<1024x512xbf16, #tpu.memory_space<vmem>>, vector<1024x512xbf16>
      %cst_52 = arith.constant dense<0.000000e+00> : vector<8x512xf32>
      %65 = tpu.matmul %63, %64, %cst_52 {dimension_numbers = #tpu.dot_dimension_numbers<[1], [0], [0], [1], [0, 0, 1, 1], [], []>} : vector<8x1024xbf16>, vector<1024x512xbf16>, vector<8x512xf32> -> vector<8x512xf32>
      %c0_53 = arith.constant 0 : index
      %c0_54 = arith.constant 0 : index
      %66 = vector.load %arg10[%c0_53, %c0_54] : memref<1x512xf32, #tpu.memory_space<vmem>>, vector<1x512xf32>
      %67 = vector.broadcast %66 : vector<1x512xf32> to vector<8x512xf32>
      %68 = arith.addf %65, %67 : vector<8x512xf32>
      %cst_55 = arith.constant 0.000000e+00 : f32
      %69 = vector.broadcast %cst_55 : f32 to vector<8x512xf32>
      %70 = arith.maximumf %68, %69 : vector<8x512xf32>
      %71 = arith.truncf %70 : vector<8x512xf32> to vector<8x512xbf16>
      %c0_56 = arith.constant 0 : index
      %c0_57 = arith.constant 0 : index
      %72 = vector.load %arg11[%c0_56, %c0_57] : memref<512x256xbf16, #tpu.memory_space<vmem>>, vector<512x256xbf16>
      %cst_58 = arith.constant dense<0.000000e+00> : vector<8x256xf32>
      %73 = tpu.matmul %71, %72, %cst_58 {dimension_numbers = #tpu.dot_dimension_numbers<[1], [0], [0], [1], [0, 0, 1, 1], [], []>} : vector<8x512xbf16>, vector<512x256xbf16>, vector<8x256xf32> -> vector<8x256xf32>
      %c0_59 = arith.constant 0 : index
      %c0_60 = arith.constant 0 : index
      %74 = vector.load %arg12[%c0_59, %c0_60] : memref<1x256xf32, #tpu.memory_space<vmem>>, vector<1x256xf32>
      %75 = vector.broadcast %74 : vector<1x256xf32> to vector<8x256xf32>
      %76 = arith.addf %73, %75 : vector<8x256xf32>
      %cst_61 = arith.constant 0.000000e+00 : f32
      %77 = vector.broadcast %cst_61 : f32 to vector<8x256xf32>
      %78 = arith.maximumf %76, %77 : vector<8x256xf32>
      %79 = arith.truncf %78 : vector<8x256xf32> to vector<8x256xbf16>
      %c0_62 = arith.constant 0 : index
      %c0_63 = arith.constant 0 : index
      %80 = vector.load %arg13[%c0_62, %c0_63] : memref<256x256xbf16, #tpu.memory_space<vmem>>, vector<256x256xbf16>
      %cst_64 = arith.constant dense<0.000000e+00> : vector<8x256xf32>
      %81 = tpu.matmul %79, %80, %cst_64 {dimension_numbers = #tpu.dot_dimension_numbers<[1], [0], [0], [1], [0, 0, 1, 1], [], []>} : vector<8x256xbf16>, vector<256x256xbf16>, vector<8x256xf32> -> vector<8x256xf32>
      %c0_65 = arith.constant 0 : index
      %c0_66 = arith.constant 0 : index
      %82 = vector.load %arg14[%c0_65, %c0_66] : memref<1x256xf32, #tpu.memory_space<vmem>>, vector<1x256xf32>
      %83 = vector.broadcast %82 : vector<1x256xf32> to vector<8x256xf32>
      %84 = arith.addf %81, %83 : vector<8x256xf32>
      %85 = vector.extract_strided_slice %84 {offsets = [0, 0], sizes = [1, 256], strides = [1, 1]} : vector<8x256xf32> to vector<1x256xf32>
      %c0_67 = arith.constant 0 : index
      %c0_68 = arith.constant 0 : index
      %c0_69 = arith.constant 0 : index
      %86 = vector.load %arg15[%c0_67, %c0_68, %c0_69] : memref<1x1x256xf32, #tpu.memory_space<vmem>>, vector<1x1x256xf32>
      %87 = vector.shape_cast %86 : vector<1x1x256xf32> to vector<1x256xf32>
      %88 = vector.shape_cast %85 : vector<1x256xf32> to vector<1x1x256xf32>
      tpu.vector_store %arg15[%c0_67, %c0_68, %c0_69], %88 {strides = array<i32>} : memref<1x1x256xf32, #tpu.memory_space<vmem>>, vector<1x1x256xf32>,
    } else {
    }
    return
  }
  func.func @transform_0(%arg0: i32, %arg1: i32) -> (i32, i32, i32) {
    %c0_i32 = arith.constant 0 : i32
    %c0_i32_0 = arith.constant 0 : i32
    return %arg0, %c0_i32, %arg1 : i32, i32, i32
  }
  func.func @transform_1(%arg0: i32, %arg1: i32) -> (i32, i32) {
    %c0_i32 = arith.constant 0 : i32
    %c0_i32_0 = arith.constant 0 : i32
    %c0_i32_1 = arith.constant 0 : i32
    return %c0_i32, %c0_i32_0 : i32, i32
  }
  func.func @transform_2(%arg0: i32, %arg1: i32) -> (i32, i32) {
    %c0_i32 = arith.constant 0 : i32
    %c0_i32_0 = arith.constant 0 : i32
    %c0_i32_1 = arith.constant 0 : i32
    return %c0_i32, %c0_i32_0 : i32, i32
  }
  func.func @transform_3(%arg0: i32, %arg1: i32) -> (i32, i32) {
    %c0_i32 = arith.constant 0 : i32
    %c0_i32_0 = arith.constant 0 : i32
    %c0_i32_1 = arith.constant 0 : i32
    return %c0_i32, %c0_i32_0 : i32, i32
  }
  func.func @transform_4(%arg0: i32, %arg1: i32) -> (i32, i32) {
    %c0_i32 = arith.constant 0 : i32
    %c0_i32_0 = arith.constant 0 : i32
    %c0_i32_1 = arith.constant 0 : i32
    return %c0_i32, %c0_i32_0 : i32, i32
  }
  func.func @transform_5(%arg0: i32, %arg1: i32) -> (i32, i32) {
    %c0_i32 = arith.constant 0 : i32
    %c0_i32_0 = arith.constant 0 : i32
    %c0_i32_1 = arith.constant 0 : i32
    return %c0_i32, %c0_i32_0 : i32, i32
  }
  func.func @transform_6(%arg0: i32, %arg1: i32) -> (i32, i32) {
    %c0_i32 = arith.constant 0 : i32
    %c0_i32_0 = arith.constant 0 : i32
    %c0_i32_1 = arith.constant 0 : i32
    return %c0_i32, %c0_i32_0 : i32, i32
  }
  func.func @transform_7(%arg0: i32, %arg1: i32) -> (i32, i32) {
    %c0_i32 = arith.constant 0 : i32
    %c0_i32_0 = arith.constant 0 : i32
    %c0_i32_1 = arith.constant 0 : i32
    return %c0_i32, %c0_i32_0 : i32, i32
  }
  func.func @transform_8(%arg0: i32, %arg1: i32) -> (i32, i32) {
    %c0_i32 = arith.constant 0 : i32
    %c0_i32_0 = arith.constant 0 : i32
    %c0_i32_1 = arith.constant 0 : i32
    return %c0_i32, %c0_i32_0 : i32, i32
  }
  func.func @transform_9(%arg0: i32, %arg1: i32) -> (i32, i32) {
    %c0_i32 = arith.constant 0 : i32
    %c0_i32_0 = arith.constant 0 : i32
    %c0_i32_1 = arith.constant 0 : i32
    return %c0_i32, %c0_i32_0 : i32, i32
  }
  func.func @transform_10(%arg0: i32, %arg1: i32) -> (i32, i32) {
    %c0_i32 = arith.constant 0 : i32
    %c0_i32_0 = arith.constant 0 : i32
    %c0_i32_1 = arith.constant 0 : i32
    return %c0_i32, %c0_i32_0 : i32, i32
  }
  func.func @transform_11(%arg0: i32, %arg1: i32) -> (i32, i32) {
    %c0_i32 = arith.constant 0 : i32
    %c0_i32_0 = arith.constant 0 : i32
    %c0_i32_1 = arith.constant 0 : i32
    return %c0_i32, %c0_i32_0 : i32, i32
  }
  func.func @transform_12(%arg0: i32, %arg1: i32) -> (i32, i32) {
    %c0_i32 = arith.constant 0 : i32
    %c0_i32_0 = arith.constant 0 : i32
    %c0_i32_1 = arith.constant 0 : i32
    return %c0_i32, %c0_i32_0 : i32, i32
  }
  func.func @transform_13(%arg0: i32, %arg1: i32) -> (i32, i32, i32) {
    %c0_i32 = arith.constant 0 : i32
    %c0_i32_0 = arith.constant 0 : i32
    %c0_i32_1 = arith.constant 0 : i32
    return %arg0, %c0_i32, %c0_i32_0 : i32, i32, i32
  }
}

</mosaic_0001>

<llo_original>
// kernel: squeeze.1
$region0: #{squeeze.1}
  %s0 = inlined_call_operand.vmem [shape: f32[2,256], index: 0, kind: input, shape index: {}]
  %s1 = inlined_call_operand.hbm [shape: f32[2,16,16], index: 1, kind: output, shape index: {}]
  $region1: #{squeeze.1} parent=0
    #allocation0 [shape = 'u8[16384]{0}', space=vmem, size = 0x4000, scoped, tag = 'operand span for operand 1']
    #allocation1 [shape = 's32[1]{0}', space=sflag, size = 0x4, scoped, tag = 'scoped memory for squeeze.1']
    #allocation2 [shape = 'u8[8192]{0}', space=vmem, size = 0x2000, scoped, tag = 'scoped mem for input reshape']
    %2 = vsyncpa [#allocation1], 0
    %s4 = ssub.s32 4, 1
    %s5 = scalar_lea.vmem %s0, 2
    %v6 = vld [vmem:[%s5] sm:%s4]
    %s7 = scalar_lea.vmem [#allocation2], 8
    %8 = vst [vmem:[%s7] sm:%s4] %v6
    %v9 = vld [vmem:[%s0] sm:%s4]
    %10 = vst [vmem:[#allocation2] sm:%s4] %v9
    %v11 = vld [vmem:[#allocation2] sm:$0x3]
    %vm12 = vcmask 130048
    %13 = vst.msk [vmem:[#allocation0] ss:$16 sm:$0x3] %vm12, %v11
    %s14 = scalar_lea.vmem [#allocation2], 8
    %v15 = vld [vmem:[%s14] sm:$0x3]
    %vm16 = vcmask 130048
    %s17 = scalar_lea.vmem [#allocation0], 8
    %18 = vst.msk [vmem:[%s17] ss:$16 sm:$0x3] %vm16, %v15
    %v19 = vld.sshfl [vmem:[#allocation2] sm:$0xff pattern:$0x99999180]
    %20 = vrot.lane.b32.xlu0 %v19, 112
    %v21 = vpop.permute.xlu0 %20
    %vm22 = vcmask 130048
    %s23 = scalar_lea.vmem [#allocation0], 1
    %24 = vst.msk [vmem:[%s23] ss:$8 sm:$0xf] %vm22, %v21
    %v25 = vld.sshfl [vmem:[#allocation2] sm:$0xff pattern:$0x99999180]
    %26 = vrot.lane.b32.xlu0 %v25, 96
    %v27 = vpop.permute.xlu0 %26
    %vm28 = vcmask 130048
    %s29 = scalar_lea.vmem [#allocation0], 2
    %30 = vst.msk [vmem:[%s29] ss:$8 sm:$0xf] %vm28, %v27
    %v31 = vld.sshfl [vmem:[#allocation2] sm:$0xff pattern:$0x99999180]
    %32 = vrot.lane.b32.xlu0 %v31, 80
    %v33 = vpop.permute.xlu0 %32
    %vm34 = vcmask 130048
    %s35 = scalar_lea.vmem [#allocation0], 3
    %36 = vst.msk [vmem:[%s35] ss:$8 sm:$0xf] %vm34, %v33
    %v37 = vld.sshfl [vmem:[#allocation2] sm:$0xff pattern:$0x99999180]
    %38 = vrot.lane.b32.xlu0 %v37, 64
    %v39 = vpop.permute.xlu0 %38
    %vm40 = vcmask 130048
    %s41 = scalar_lea.vmem [#allocation0], 4
    %42 = vst.msk [vmem:[%s41] ss:$8 sm:$0xf] %vm40, %v39
    %v43 = vld.sshfl [vmem:[#allocation2] sm:$0xff pattern:$0x99999180]
    %44 = vrot.lane.b32.xlu0 %v43, 48
    %v45 = vpop.permute.xlu0 %44
    %vm46 = vcmask 130048
    %s47 = scalar_lea.vmem [#allocation0], 5
    %48 = vst.msk [vmem:[%s47] ss:$8 sm:$0xf] %vm46, %v45
    %v49 = vld.sshfl [vmem:[#allocation2] sm:$0xff pattern:$0x99999180]
    %50 = vrot.lane.b32.xlu0 %v49, 32
    %v51 = vpop.permute.xlu0 %50
    %vm52 = vcmask 130048
    %s53 = scalar_lea.vmem [#allocation0], 6
    %54 = vst.msk [vmem:[%s53] ss:$8 sm:$0xf] %vm52, %v51
    %v55 = vld.sshfl [vmem:[#allocation2] sm:$0xff pattern:$0x99999180]
    %56 = vrot.lane.b32.xlu0 %v55, 16
    %v57 = vpop.permute.xlu0 %56
    %vm58 = vcmask 130048
    %s59 = scalar_lea.vmem [#allocation0], 7
    %60 = vst.msk [vmem:[%s59] ss:$8 sm:$0xf] %vm58, %v57
    %62 = vsyncadd [#allocation1], 0
    %s64 = sshll.u32 [#allocation0], 4
    %s65 = int_to_ptr.vmem [resolvable:$true] %s64
    %s66 = sshll.u32 %s1, 4
    %s67 = int_to_ptr.hbm [resolvable:$true] %s66
    %69 = dma.vmem_to_hbm [thread:$0]  %s65, 512, %s67, [#allocation1]
    %71 = dma.done [#allocation1], 512
    %72 = vsyncpa [#allocation1], 1

// kernel: stnkd_forward.1
$region0: #{stnkd_forward.1}
  #allocation0 [shape = 'u32[]', space=smem, size = 0x4, offset = 0x4, fixed_abs, tag = 'smem constant byte address 0x4 - core index']
  #allocation1 [shape = 'u32[72,128]{1,0:T(1,128)}', space=vmem, size = 0x9000, scoped, tag = 'internal scratch']
  #allocation2 [shape = 'f32[8,1024]{1,0:T(8,128)}', space=vmem, size = 0x8000, scoped, tag = 'scratch operand']
  %s0 = inlined_call_operand.hbm [shape: f32[2,16,1024], index: 0, kind: input, shape index: {}]
  %s1 = inlined_call_operand.vmem [shape: bf16[64,16], index: 1, kind: input, shape index: {}]
  %s2 = inlined_call_operand.vmem [shape: f32[64,1], index: 2, kind: input, shape index: {}]
  %s3 = inlined_call_operand.vmem [shape: bf16[128,64], index: 3, kind: input, shape index: {}]
  %s4 = inlined_call_operand.vmem [shape: f32[128,1], index: 4, kind: input, shape index: {}]
  %s5 = inlined_call_operand.hbm [shape: bf16[128,1024], index: 5, kind: input, shape index: {}]
  %s6 = inlined_call_operand.vmem [shape: f32[1,1024], index: 6, kind: input, shape index: {}]
  %s7 = inlined_call_operand.hbm [shape: bf16[1024,512], index: 7, kind: input, shape index: {}]
  %s8 = inlined_call_operand.vmem [shape: f32[1,512], index: 8, kind: input, shape index: {}]
  %s9 = inlined_call_operand.hbm [shape: bf16[512,256], index: 9, kind: input, shape index: {}]
  %s10 = inlined_call_operand.vmem [shape: f32[1,256], index: 10, kind: input, shape index: {}]
  %s11 = inlined_call_operand.hbm [shape: bf16[256,256], index: 11, kind: input, shape index: {}]
  %s12 = inlined_call_operand.vmem [shape: f32[1,256], index: 12, kind: input, shape index: {}]
  %s13 = inlined_call_operand.vmem [shape: f32[2,1,256], index: 13, kind: output, shape index: {}]
  %s14 = sld [smem:[#allocation0]]
  $region113: #{stnkd_forward.1} parent=0
    _
  %s16 = ssub.s32 1, %s14
  %s17 = scalar_select 0, %s16, %s14
  $region1: #{stnkd_forward.1} parent=0
    #allocation3 [shape = 'u8[65536]{0}', space=vmem, size = 0x10000, scoped, tag = 'input window, operand 0']
    #allocation4 [shape = 's32[2]{0}', space=sflag, size = 0x8, scoped, tag = 'scoped memory for stnkd_forward.1']
    #allocation5 [shape = 'u8[262144]{0}', space=vmem, size = 0x40000, scoped, tag = 'input window, operand 5, single buffered']
    #allocation6 [shape = 's32[1]{0}', space=sflag, size = 0x4, scoped, tag = 'scoped memory for stnkd_forward.1']
    #allocation7 [shape = 'u8[1048576]{0}', space=vmem, size = 0x100000, scoped, tag = 'input window, operand 7, single buffered']
    #allocation8 [shape = 'u8[262144]{0}', space=vmem, size = 0x40000, scoped, tag = 'input window, operand 9, single buffered']
    #allocation9 [shape = 's32[1]{0}', space=sflag, size = 0x4, scoped, tag = 'scoped memory for stnkd_forward.1']
    #allocation10 [shape = 'u8[131072]{0}', space=vmem, size = 0x20000, scoped, tag = 'input window, operand 11, single buffered']
    %18 = vsyncpa [#allocation4], 0
    %s19 = scalar_lea.sflag [#allocation4], 1
    %20 = vsyncpa %s19, 0
    %21 = vsyncpa [#allocation6], 0
    %22 = vsyncpa [#allocation9], 0
    loop: start=0, step=1, limit=6
    $region2: #{stnkd_forward.1} parent=1 // loop_pre_header
      _
    $region3: #{stnkd_forward.1} parent=1 // loop_header
      %s24 = sphi 0, %s28
      %p25 = scmp.ge.s32.totalorder %s24, 6
      %s31 = sphi 0, %s43
      %s32 = sphi 0, %s39
      %s33 = sphi 0, %s31
      %s34 = sphi 0, %s32
      %s35 = sphi 0, %s33
      %s36 = sphi 0, %s34
      %s48 = sphi 0, %s50
      %s51 = sphi 0, %s48
      %s52 = sphi 0, %s51
      %s68 = sphi 0, %s52
      %s72 = sphi 0, %s72
      %s74 = sphi 0, %s72
      %s75 = sphi 0, %s74
      %s89 = sphi 0, %s75
      %s93 = sphi 0, %s93
      %s95 = sphi 0, %s93
      %s96 = sphi 0, %s95
      %s110 = sphi 0, %s96
      %s114 = sphi 0, %s114
      %s116 = sphi 0, %s114
      %s117 = sphi 0, %s116
      %s131 = sphi 0, %s117
      %s135 = sphi 0, %s135
      %s137 = sphi 0, %s135
      %s138 = sphi 0, %s137
      %s152 = sphi 0, %s138
      %s156 = sphi 0, %s156
      %s158 = sphi 0, %s156
      %s159 = sphi 0, %s158
      %s173 = sphi 0, %s159
      %s177 = sphi 0, %s177
      %s179 = sphi 0, %s177
      %s180 = sphi 0, %s179
      %s194 = sphi 0, %s180
      %s198 = sphi 0, %s198
      %s200 = sphi 0, %s198
      %s201 = sphi 0, %s200
      %s215 = sphi 0, %s201
      %s219 = sphi 0, %s219
      %s221 = sphi 0, %s219
      %s222 = sphi 0, %s221
      %s236 = sphi 0, %s222
      %s240 = sphi 0, %s240
      %s242 = sphi 0, %s240
      %s243 = sphi 0, %s242
      %s257 = sphi 0, %s243
      %s261 = sphi 0, %s261
      %s263 = sphi 0, %s261
      %s264 = sphi 0, %s263
      %s278 = sphi 0, %s264
      %s282 = sphi 0, %s282
      %s284 = sphi 0, %s282
      %s285 = sphi 0, %s284
      %s299 = sphi 0, %s285
      %s303 = sphi 0, %s303
      %s305 = sphi 0, %s303
      %s306 = sphi 0, %s305
      %s320 = sphi 0, %s306
      %s326 = sphi 0, %s328
      %s329 = sphi 0, %s326
      %s330 = sphi 0, %s329
      %s346 = sphi 0, %s330
    $region4: #{stnkd_forward.1} parent=1 // loop_header_branch
      %27 = sbr.rel (%p25) target = $region8
    $region5: #{stnkd_forward.1} parent=1 // loop_body
      %s29 = ssub.s32 %s24, 1
      %s30 = ssub.s32 %s24, 2
      %s37 = sadd.s32 1, %s32
      %p38 = scmp.ge.s32.totalorder %s37, 2
      %s39 = scalar_select %p38, 0, %s37
      %s40 = sadd.s32 1, %s31
      %s41 = scalar_select %p38, %s40, %s31
      %p42 = scmp.ge.s32.totalorder %s41, 2
      %s43 = scalar_select %p42, 0, %s41
      %s44 = ssub.s32 %s31, %s43
      %s45 = ssub.s32 %s32, %s39
      %s46 = sor.u32 %s44, %s45
      %p47 = scmp.eq.s32.totalorder %s46, 0
      %s49 = sadd.s32 %s48, 1
      %s50 = scalar_select %p47, %s48, %s49
      %p53 = pneg %p47
      %p54 = scmp.eq.s32.totalorder %s24, 3
      %p55 = por %p53, %p54
      %p56 = scmp.ne.s32.totalorder %s48, %s51
      %p57 = scmp.eq.s32.totalorder %s24, 0
      %p58 = por %p56, %p57
      %p59 = scmp.ne.s32.totalorder %s48, %s51
      %p60 = scmp.eq.s32.totalorder %s29, 3
      %p61 = por %p59, %p60
      %p62 = scmp.ne.s32.totalorder %s51, %s52
      %p63 = scmp.eq.s32.totalorder %s29, 0
      %p64 = por %p62, %p63
      %p65 = scmp.ne.s32.totalorder %s51, %s52
      %p66 = scmp.eq.s32.totalorder %s30, 3
      %p67 = por %p65, %p66
      %p69 = scmp.ne.s32.totalorder %s52, %s68
      %p70 = scmp.eq.s32.totalorder %s30, 0
      %p71 = por %p69, %p70
      %s73 = sadd.s32 %s72, 1
      %p76 = scmp.eq.s32.totalorder %s24, 3
      %p77 = scmp.ne.s32.totalorder %s72, %s74
      %p78 = scmp.eq.s32.totalorder %s24, 0
      %p79 = por %p77, %p78
      %p80 = scmp.ne.s32.totalorder %s72, %s74
      %p81 = scmp.eq.s32.totalorder %s29, 3
      %p82 = por %p80, %p81
      %p83 = scmp.ne.s32.totalorder %s74, %s75
      %p84 = scmp.eq.s32.totalorder %s29, 0
      %p85 = por %p83, %p84
      %p86 = scmp.ne.s32.totalorder %s74, %s75
      %p87 = scmp.eq.s32.totalorder %s30, 3
      %p88 = por %p86, %p87
      %p90 = scmp.ne.s32.totalorder %s75, %s89
      %p91 = scmp.eq.s32.totalorder %s30, 0
      %p92 = por %p90, %p91
      %s94 = sadd.s32 %s93, 1
      %p97 = scmp.eq.s32.totalorder %s24, 3
      %p98 = scmp.ne.s32.totalorder %s93, %s95
      %p99 = scmp.eq.s32.totalorder %s24, 0
      %p100 = por %p98, %p99
      %p101 = scmp.ne.s32.totalorder %s93, %s95
      %p102 = scmp.eq.s32.totalorder %s29, 3
      %p103 = por %p101, %p102
      %p104 = scmp.ne.s32.totalorder %s95, %s96
      %p105 = scmp.eq.s32.totalorder %s29, 0
      %p106 = por %p104, %p105
      %p107 = scmp.ne.s32.totalorder %s95, %s96
      %p108 = scmp.eq.s32.totalorder %s30, 3
      %p109 = por %p107, %p108
      %p111 = scmp.ne.s32.totalorder %s96, %s110
      %p112 = scmp.eq.s32.totalorder %s30, 0
      %p113 = por %p111, %p112
      %s115 = sadd.s32 %s114, 1
      %p118 = scmp.eq.s32.totalorder %s24, 3
      %p119 = scmp.ne.s32.totalorder %s114, %s116
      %p120 = scmp.eq.s32.totalorder %s24, 0
      %p121 = por %p119, %p120
      %p122 = scmp.ne.s32.totalorder %s114, %s116
      %p123 = scmp.eq.s32.totalorder %s29, 3
      %p124 = por %p122, %p123
      %p125 = scmp.ne.s32.totalorder %s116, %s117
      %p126 = scmp.eq.s32.totalorder %s29, 0
      %p127 = por %p125, %p126
      %p128 = scmp.ne.s32.totalorder %s116, %s117
      %p129 = scmp.eq.s32.totalorder %s30, 3
      %p130 = por %p128, %p129
      %p132 = scmp.ne.s32.totalorder %s117, %s131
      %p133 = scmp.eq.s32.totalorder %s30, 0
      %p134 = por %p132, %p133
      %s136 = sadd.s32 %s135, 1
      %p139 = scmp.eq.s32.totalorder %s24, 3
      %p140 = scmp.ne.s32.totalorder %s135, %s137
      %p141 = scmp.eq.s32.totalorder %s24, 0
      %p142 = por %p140, %p141
      %p143 = scmp.ne.s32.totalorder %s135, %s137
      %p144 = scmp.eq.s32.totalorder %s29, 3
      %p145 = por %p143, %p144
      %p146 = scmp.ne.s32.totalorder %s137, %s138
      %p147 = scmp.eq.s32.totalorder %s29, 0
      %p148 = por %p146, %p147
      %p149 = scmp.ne.s32.totalorder %s137, %s138
      %p150 = scmp.eq.s32.totalorder %s30, 3
      %p151 = por %p149, %p150
      %p153 = scmp.ne.s32.totalorder %s138, %s152
      %p154 = scmp.eq.s32.totalorder %s30, 0
      %p155 = por %p153, %p154
      %s157 = sadd.s32 %s156, 1
      %p160 = scmp.eq.s32.totalorder %s24, 3
      %p161 = scmp.ne.s32.totalorder %s156, %s158
      %p162 = scmp.eq.s32.totalorder %s24, 0
      %p163 = por %p161, %p162
      %p164 = scmp.ne.s32.totalorder %s156, %s158
      %p165 = scmp.eq.s32.totalorder %s29, 3
      %p166 = por %p164, %p165
      %p167 = scmp.ne.s32.totalorder %s158, %s159
      %p168 = scmp.eq.s32.totalorder %s29, 0
      %p169 = por %p167, %p168
      %p170 = scmp.ne.s32.totalorder %s158, %s159
      %p171 = scmp.eq.s32.totalorder %s30, 3
      %p172 = por %p170, %p171
      %p174 = scmp.ne.s32.totalorder %s159, %s173
      %p175 = scmp.eq.s32.totalorder %s30, 0
      %p176 = por %p174, %p175
      %s178 = sadd.s32 %s177, 1
      %p181 = scmp.eq.s32.totalorder %s24, 3
      %p182 = scmp.ne.s32.totalorder %s177, %s179
      %p183 = scmp.eq.s32.totalorder %s24, 0
      %p184 = por %p182, %p183
      %p185 = scmp.ne.s32.totalorder %s177, %s179
      %p186 = scmp.eq.s32.totalorder %s29, 3
      %p187 = por %p185, %p186
      %p188 = scmp.ne.s32.totalorder %s179, %s180
      %p189 = scmp.eq.s32.totalorder %s29, 0
      %p190 = por %p188, %p189
      %p191 = scmp.ne.s32.totalorder %s179, %s180
      %p192 = scmp.eq.s32.totalorder %s30, 3
      %p193 = por %p191, %p192
      %p195 = scmp.ne.s32.totalorder %s180, %s194
      %p196 = scmp.eq.s32.totalorder %s30, 0
      %p197 = por %p195, %p196
      %s199 = sadd.s32 %s198, 1
      %p202 = scmp.eq.s32.totalorder %s24, 3
      %p203 = scmp.ne.s32.totalorder %s198, %s200
      %p204 = scmp.eq.s32.totalorder %s24, 0
      %p205 = por %p203, %p204
      %p206 = scmp.ne.s32.totalorder %s198, %s200
      %p207 = scmp.eq.s32.totalorder %s29, 3
      %p208 = por %p206, %p207
      %p209 = scmp.ne.s32.totalorder %s200, %s201
      %p210 = scmp.eq.s32.totalorder %s29, 0
      %p211 = por %p209, %p210
      %p212 = scmp.ne.s32.totalorder %s200, %s201
      %p213 = scmp.eq.s32.totalorder %s30, 3
      %p214 = por %p212, %p213
      %p216 = scmp.ne.s32.totalorder %s201, %s215
      %p217 = scmp.eq.s32.totalorder %s30, 0
      %p218 = por %p216, %p217
      %s220 = sadd.s32 %s219, 1
      %p223 = scmp.eq.s32.totalorder %s24, 3
      %p224 = scmp.ne.s32.totalorder %s219, %s221
      %p225 = scmp.eq.s32.totalorder %s24, 0
      %p226 = por %p224, %p225
      %p227 = scmp.ne.s32.totalorder %s219, %s221
      %p228 = scmp.eq.s32.totalorder %s29, 3
      %p229 = por %p227, %p228
      %p230 = scmp.ne.s32.totalorder %s221, %s222
      %p231 = scmp.eq.s32.totalorder %s29, 0
      %p232 = por %p230, %p231
      %p233 = scmp.ne.s32.totalorder %s221, %s222
      %p234 = scmp.eq.s32.totalorder %s30, 3
      %p235 = por %p233, %p234
      %p237 = scmp.ne.s32.totalorder %s222, %s236
      %p238 = scmp.eq.s32.totalorder %s30, 0
      %p239 = por %p237, %p238
      %s241 = sadd.s32 %s240, 1
      %p244 = scmp.eq.s32.totalorder %s24, 3
      %p245 = scmp.ne.s32.totalorder %s240, %s242
      %p246 = scmp.eq.s32.totalorder %s24, 0
      %p247 = por %p245, %p246
      %p248 = scmp.ne.s32.totalorder %s240, %s242
      %p249 = scmp.eq.s32.totalorder %s29, 3
      %p250 = por %p248, %p249
      %p251 = scmp.ne.s32.totalorder %s242, %s243
      %p252 = scmp.eq.s32.totalorder %s29, 0
      %p253 = por %p251, %p252
      %p254 = scmp.ne.s32.totalorder %s242, %s243
      %p255 = scmp.eq.s32.totalorder %s30, 3
      %p256 = por %p254, %p255
      %p258 = scmp.ne.s32.totalorder %s243, %s257
      %p259 = scmp.eq.s32.totalorder %s30, 0
      %p260 = por %p258, %p259
      %s262 = sadd.s32 %s261, 1
      %p265 = scmp.eq.s32.totalorder %s24, 3
      %p266 = scmp.ne.s32.totalorder %s261, %s263
      %p267 = scmp.eq.s32.totalorder %s24, 0
      %p268 = por %p266, %p267
      %p269 = scmp.ne.s32.totalorder %s261, %s263
      %p270 = scmp.eq.s32.totalorder %s29, 3
      %p271 = por %p269, %p270
      %p272 = scmp.ne.s32.totalorder %s263, %s264
      %p273 = scmp.eq.s32.totalorder %s29, 0
      %p274 = por %p272, %p273
      %p275 = scmp.ne.s32.totalorder %s263, %s264
      %p276 = scmp.eq.s32.totalorder %s30, 3
      %p277 = por %p275, %p276
      %p279 = scmp.ne.s32.totalorder %s264, %s278
      %p280 = scmp.eq.s32.totalorder %s30, 0
      %p281 = por %p279, %p280
      %s283 = sadd.s32 %s282, 1
      %p286 = scmp.eq.s32.totalorder %s24, 3
      %p287 = scmp.ne.s32.totalorder %s282, %s284
      %p288 = scmp.eq.s32.totalorder %s24, 0
      %p289 = por %p287, %p288
      %p290 = scmp.ne.s32.totalorder %s282, %s284
      %p291 = scmp.eq.s32.totalorder %s29, 3
      %p292 = por %p290, %p291
      %p293 = scmp.ne.s32.totalorder %s284, %s285
      %p294 = scmp.eq.s32.totalorder %s29, 0
      %p295 = por %p293, %p294
      %p296 = scmp.ne.s32.totalorder %s284, %s285
      %p297 = scmp.eq.s32.totalorder %s30, 3
      %p298 = por %p296, %p297
      %p300 = scmp.ne.s32.totalorder %s285, %s299
      %p301 = scmp.eq.s32.totalorder %s30, 0
      %p302 = por %p300, %p301
      %s304 = sadd.s32 %s303, 1
      %p307 = scmp.eq.s32.totalorder %s24, 3
      %p308 = scmp.ne.s32.totalorder %s303, %s305
      %p309 = scmp.eq.s32.totalorder %s24, 0
      %p310 = por %p308, %p309
      %p311 = scmp.ne.s32.totalorder %s303, %s305
      %p312 = scmp.eq.s32.totalorder %s29, 3
      %p313 = por %p311, %p312
      %p314 = scmp.ne.s32.totalorder %s305, %s306
      %p315 = scmp.eq.s32.totalorder %s29, 0
      %p316 = por %p314, %p315
      %p317 = scmp.ne.s32.totalorder %s305, %s306
      %p318 = scmp.eq.s32.totalorder %s30, 3
      %p319 = por %p317, %p318
      %p321 = scmp.ne.s32.totalorder %s306, %s320
      %p322 = scmp.eq.s32.totalorder %s30, 0
      %p323 = por %p321, %p322
      %s324 = ssub.s32 %s31, %s43
      %p325 = scmp.eq.s32.totalorder %s324, 0
      %s327 = sadd.s32 %s326, 1
      %s328 = scalar_select %p325, %s326, %s327
      %p331 = pneg %p325
      %p332 = scmp.eq.s32.totalorder %s24, 3
      %p333 = por %p331, %p332
      %p334 = scmp.ne.s32.totalorder %s326, %s329
      %p335 = scmp.eq.s32.totalorder %s24, 0
      %p336 = por %p334, %p335
      %p337 = scmp.ne.s32.totalorder %s326, %s329
      %p338 = scmp.eq.s32.totalorder %s29, 3
      %p339 = por %p337, %p338
      %p340 = scmp.ne.s32.totalorder %s329, %s330
      %p341 = scmp.eq.s32.totalorder %s29, 0
      %p342 = por %p340, %p341
      %p343 = scmp.ne.s32.totalorder %s329, %s330
      %p344 = scmp.eq.s32.totalorder %s30, 3
      %p345 = por %p343, %p344
      %p347 = scmp.ne.s32.totalorder %s330, %s346
      %p348 = scmp.eq.s32.totalorder %s30, 0
      %p349 = por %p347, %p348
      %p350 = scmp.le.s32.totalorder 1, %s24
      %p351 = scmp.lt.s32.totalorder %s24, 5
      %p352 = pnand %p350, %p351
      %p353 = pneg %p352
      // Predicated region
      $region9: #{stnkd_forward.1} parent=5 // pred_check
        _
      $region10: #{stnkd_forward.1} parent=5 // pred_check_branch
        %355 = sbr.rel (%p352) target = $region12
      $region11: #{stnkd_forward.1} parent=5 // pred_region
        %s356 = ssub.s32 %s24, 1
        // Predicated region
        $region13: #{stnkd_forward.1} parent=11 // pred_check
          %p357 = pneg %p85
        $region14: #{stnkd_forward.1} parent=11 // pred_check_branch
          %359 = sbr.rel (%p357) target = $region16
        $region15: #{stnkd_forward.1} parent=11 // pred_region
          _
        $region16: #{stnkd_forward.1} parent=11 // pred_fallthru
          _
        // Predicated region
        $region17: #{stnkd_forward.1} parent=11 // pred_check
          %p360 = pneg %p106
        $region18: #{stnkd_forward.1} parent=11 // pred_check_branch
          %362 = sbr.rel (%p360) target = $region20
        $region19: #{stnkd_forward.1} parent=11 // pred_region
          _
        $region20: #{stnkd_forward.1} parent=11 // pred_fallthru
          _
        // Predicated region
        $region21: #{stnkd_forward.1} parent=11 // pred_check
          %p363 = pneg %p127
        $region22: #{stnkd_forward.1} parent=11 // pred_check_branch
          %365 = sbr.rel (%p363) target = $region24
        $region23: #{stnkd_forward.1} parent=11 // pred_region
          _
        $region24: #{stnkd_forward.1} parent=11 // pred_fallthru
          _
        // Predicated region
        $region25: #{stnkd_forward.1} parent=11 // pred_check
          %p366 = pneg %p148
        $region26: #{stnkd_forward.1} parent=11 // pred_check_branch
          %368 = sbr.rel (%p366) target = $region28
        $region27: #{stnkd_forward.1} parent=11 // pred_region
          _
        $region28: #{stnkd_forward.1} parent=11 // pred_fallthru
          _
        // Predicated region
        $region29: #{stnkd_forward.1} parent=11 // pred_check
          %p369 = pneg %p169
        $region30: #{stnkd_forward.1} parent=11 // pred_check_branch
          %371 = sbr.rel (%p369) target = $region32
        $region31: #{stnkd_forward.1} parent=11 // pred_region
          %373 = vsyncadd [#allocation6], 0
          %s374 = sshll.u32 %s5, 4
          %s375 = int_to_ptr.hbm [resolvable:$true] %s374
          %s376 = sshll.u32 [#allocation5], 4
          %s377 = int_to_ptr.vmem [resolvable:$true] %s376
          %382 = dma.hbm_to_vmem [thread:$0]  %s375, 8192, %s377, [#allocation6], 512, 512, 32
        $region32: #{stnkd_forward.1} parent=11 // pred_fallthru
          _
        // Predicated region
        $region33: #{stnkd_forward.1} parent=11 // pred_check
          %p383 = pneg %p190
        $region34: #{stnkd_forward.1} parent=11 // pred_check_branch
          %385 = sbr.rel (%p383) target = $region36
        $region35: #{stnkd_forward.1} parent=11 // pred_region
          _
        $region36: #{stnkd_forward.1} parent=11 // pred_fallthru
          _
        // Predicated region
        $region37: #{stnkd_forward.1} parent=11 // pred_check
          %p386 = pneg %p211
        $region38: #{stnkd_forward.1} parent=11 // pred_check_branch
          %388 = sbr.rel (%p386) target = $region40
        $region39: #{stnkd_forward.1} parent=11 // pred_region
          %390 = vsyncadd [#allocation6], 0
          %s391 = sshll.u32 %s7, 4
          %s392 = int_to_ptr.hbm [resolvable:$true] %s391
          %s393 = sshll.u32 [#allocation7], 4
          %s394 = int_to_ptr.vmem [resolvable:$true] %s393
          %399 = dma.hbm_to_vmem [thread:$0]  %s392, 32768, %s394, [#allocation6], 256, 256, 16
        $region40: #{stnkd_forward.1} parent=11 // pred_fallthru
          _
        // Predicated region
        $region41: #{stnkd_forward.1} parent=11 // pred_check
          %p400 = pneg %p232
        $region42: #{stnkd_forward.1} parent=11 // pred_check_branch
          %402 = sbr.rel (%p400) target = $region44
        $region43: #{stnkd_forward.1} parent=11 // pred_region
          _
        $region44: #{stnkd_forward.1} parent=11 // pred_fallthru
          _
        // Predicated region
        $region45: #{stnkd_forward.1} parent=11 // pred_check
          %p403 = pneg %p253
        $region46: #{stnkd_forward.1} parent=11 // pred_check_branch
          %405 = sbr.rel (%p403) target = $region48
        $region47: #{stnkd_forward.1} parent=11 // pred_region
          %407 = vsyncadd [#allocation9], 0
          %s408 = sshll.u32 %s9, 4
          %s409 = int_to_ptr.hbm [resolvable:$true] %s408
          %s410 = sshll.u32 [#allocation8], 4
          %s411 = int_to_ptr.vmem [resolvable:$true] %s410
          %416 = dma.hbm_to_vmem [thread:$0]  %s409, 8192, %s411, [#allocation9], 128, 128, 8
        $region48: #{stnkd_forward.1} parent=11 // pred_fallthru
          _
        // Predicated region
        $region49: #{stnkd_forward.1} parent=11 // pred_check
          %p417 = pneg %p274
        $region50: #{stnkd_forward.1} parent=11 // pred_check_branch
          %419 = sbr.rel (%p417) target = $region52
        $region51: #{stnkd_forward.1} parent=11 // pred_region
          _
        $region52: #{stnkd_forward.1} parent=11 // pred_fallthru
          _
        // Predicated region
        $region53: #{stnkd_forward.1} parent=11 // pred_check
          %p420 = pneg %p295
        $region54: #{stnkd_forward.1} parent=11 // pred_check_branch
          %422 = sbr.rel (%p420) target = $region56
        $region55: #{stnkd_forward.1} parent=11 // pred_region
          %424 = vsyncadd [#allocation9], 0
          %s425 = sshll.u32 %s11, 4
          %s426 = int_to_ptr.hbm [resolvable:$true] %s425
          %s427 = sshll.u32 [#allocation10], 4
          %s428 = int_to_ptr.vmem [resolvable:$true] %s427
          %433 = dma.hbm_to_vmem [thread:$0]  %s426, 4096, %s428, [#allocation9], 128, 128, 8
        $region56: #{stnkd_forward.1} parent=11 // pred_fallthru
          _
        // Predicated region
        $region57: #{stnkd_forward.1} parent=11 // pred_check
          %p434 = pneg %p316
        $region58: #{stnkd_forward.1} parent=11 // pred_check_branch
          %436 = sbr.rel (%p434) target = $region60
        $region59: #{stnkd_forward.1} parent=11 // pred_region
          _
        $region60: #{stnkd_forward.1} parent=11 // pred_fallthru
          _
      $region12: #{stnkd_forward.1} parent=5 // pred_fallthru
        _
      %p437 = scmp.lt.s32.totalorder %s24, 4
      // Predicated region
      $region61: #{stnkd_forward.1} parent=5 // pred_check
        %p438 = pneg %p437
      $region62: #{stnkd_forward.1} parent=5 // pred_check_branch
        %440 = sbr.rel (%p438) target = $region64
      $region63: #{stnkd_forward.1} parent=5 // pred_region
        // Predicated region
        $region65: #{stnkd_forward.1} parent=63 // pred_check
          %p441 = pneg %p58
        $region66: #{stnkd_forward.1} parent=63 // pred_check_branch
          %443 = sbr.rel (%p441) target = $region68
        $region67: #{stnkd_forward.1} parent=63 // pred_region
          %s444 = sand.u32 %s48, 1
          %s445 = scalar_lea.sflag [#allocation4], %s444
          %s446 = sand.u32 %s48, 1
          %s447 = smul.addr %s446, 64
          %s448 = scalar_lea.vmem [#allocation3], %s447
          %s449 = smul.u32 4, %s32
          %451 = vsyncadd %s445, 0
          %s452 = smul.addr %s31, 16
          %s453 = sadd.s32 %s449, %s452
          %s454 = smul.addr %s453, 8
          %s455 = scalar_lea.hbm %s0, %s454
          %s456 = sshll.u32 %s455, 4
          %s457 = int_to_ptr.hbm [resolvable:$true] %s456
          %s458 = sshll.u32 %s448, 4
          %s459 = int_to_ptr.vmem [resolvable:$true] %s458
          %464 = dma.hbm_to_vmem [thread:$0]  %s457, 1024, %s459, %s445, 1024, 512, 32
        $region68: #{stnkd_forward.1} parent=63 // pred_fallthru
          _
      $region64: #{stnkd_forward.1} parent=5 // pred_fallthru
        _
      %p465 = scmp.le.s32.totalorder 1, %s24
      %p466 = scmp.lt.s32.totalorder %s24, 5
      %p467 = pnand %p465, %p466
      %p468 = pneg %p467
      // Predicated region
      $region69: #{stnkd_forward.1} parent=5 // pred_check
        _
      $region70: #{stnkd_forward.1} parent=5 // pred_check_branch
        %470 = sbr.rel (%p467) target = $region72
      $region71: #{stnkd_forward.1} parent=5 // pred_region
        %s471 = ssub.s32 %s24, 1
        %s472 = sand.u32 %s51, 1
        %s473 = scalar_lea.sflag [#allocation4], %s472
        %s474 = sand.u32 %s51, 1
        %s475 = smul.addr %s474, 64
        %s476 = scalar_lea.vmem [#allocation3], %s475
        // Predicated region
        $region73: #{stnkd_forward.1} parent=71 // pred_check
          %p477 = pneg %p64
        $region74: #{stnkd_forward.1} parent=71 // pred_check_branch
          %479 = sbr.rel (%p477) target = $region76
        $region75: #{stnkd_forward.1} parent=71 // pred_region
          %481 = dma.done %s473, 1024
        $region76: #{stnkd_forward.1} parent=71 // pred_fallthru
          _
        // Predicated region
        $region77: #{stnkd_forward.1} parent=71 // pred_check
          %p482 = pneg %p169
        $region78: #{stnkd_forward.1} parent=71 // pred_check_branch
          %484 = sbr.rel (%p482) target = $region80
        $region79: #{stnkd_forward.1} parent=71 // pred_region
          %486 = dma.done [#allocation6], 8192
        $region80: #{stnkd_forward.1} parent=71 // pred_fallthru
          _
        // Predicated region
        $region81: #{stnkd_forward.1} parent=71 // pred_check
          %p487 = pneg %p211
        $region82: #{stnkd_forward.1} parent=71 // pred_check_branch
          %489 = sbr.rel (%p487) target = $region84
        $region83: #{stnkd_forward.1} parent=71 // pred_region
          %491 = dma.done [#allocation6], 32768
        $region84: #{stnkd_forward.1} parent=71 // pred_fallthru
          _
        // Predicated region
        $region85: #{stnkd_forward.1} parent=71 // pred_check
          %p492 = pneg %p253
        $region86: #{stnkd_forward.1} parent=71 // pred_check_branch
          %494 = sbr.rel (%p492) target = $region88
        $region87: #{stnkd_forward.1} parent=71 // pred_region
          %496 = dma.done [#allocation9], 8192
        $region88: #{stnkd_forward.1} parent=71 // pred_fallthru
          _
        // Predicated region
        $region89: #{stnkd_forward.1} parent=71 // pred_check
          %p497 = pneg %p295
        $region90: #{stnkd_forward.1} parent=71 // pred_check_branch
          %499 = sbr.rel (%p497) target = $region92
        $region91: #{stnkd_forward.1} parent=71 // pred_region
          %501 = dma.done [#allocation9], 4096
        $region92: #{stnkd_forward.1} parent=71 // pred_fallthru
          _
        %s502 = sand.u32 %s51, 1
        %s503 = scalar_lea.sflag [#allocation4], %s502
        %s504 = sand.u32 %s51, 1
        %s505 = smul.addr %s504, 64
        %s506 = scalar_lea.vmem [#allocation3], %s505
        %p507 = pneg %p64
        %p508 = pneg %p61
        %p509 = pneg %p85
        %p510 = pneg %p82
        %p511 = pneg %p106
        %p512 = pneg %p103
        %p513 = pneg %p127
        %p514 = pneg %p124
        %p515 = pneg %p148
        %p516 = pneg %p145
        %p517 = pneg %p169
        %p518 = pneg %p166
        %p519 = pneg %p190
        %p520 = pneg %p187
        %p521 = pneg %p211
        %p522 = pneg %p208
        %p523 = pneg %p232
        %p524 = pneg %p229
        %p525 = pneg %p253
        %p526 = pneg %p250
        %p527 = pneg %p274
        %p528 = pneg %p271
        %p529 = pneg %p295
        %p530 = pneg %p292
        %p531 = pneg %p316
        %p532 = pneg %p313
        %p533 = pneg %p342
        %p534 = pneg %p339
        %p535 = scmp.lt.s32.totalorder %s33, 1
        %s536 = scalar_select %p535, %s33, 1
        %s537 = smul.addr %s536, 2
        %s538 = scalar_lea.vmem %s13, %s537
        %s539 = smul.u32 4, %s34
        %p540 = scmp.lt.s32.totalorder %s33, 1
        %s541 = scalar_select %p540, %s33, 1
        %s542 = smul.addr %s541, 2
        %s543 = scalar_lea.vmem %s13, %s542
        %p545 = scmp.eq.s32.totalorder %s34, 0
        // Predicated region
        $region93: #{stnkd_forward.1} parent=71 // pred_check
          %p546 = pneg %p545
        $region94: #{stnkd_forward.1} parent=71 // pred_check_branch
          %548 = sbr.rel (%p546) target = $region96
        $region95: #{stnkd_forward.1} parent=71 // pred_region
          %549 = vst [vmem:[#allocation2] sm:$0xff] -inf
          %550 = vst [vmem:[#allocation2 + $0x8] sm:$0xff] -inf
          %551 = vst [vmem:[#allocation2 + $0x10] sm:$0xff] -inf
          %552 = vst [vmem:[#allocation2 + $0x18] sm:$0xff] -inf
          %553 = vst [vmem:[#allocation2 + $0x20] sm:$0xff] -inf
          %554 = vst [vmem:[#allocation2 + $0x28] sm:$0xff] -inf
          %555 = vst [vmem:[#allocation2 + $0x30] sm:$0xff] -inf
          %556 = vst [vmem:[#allocation2 + $0x38] sm:$0xff] -inf
        $region96: #{stnkd_forward.1} parent=71 // pred_fallthru
          _
        %v557 = vld [vmem:[%s476] sm:$0xff]
        %v558 = vld [vmem:[%s476 + $0x8] sm:$0xff]
        %v559 = vld [vmem:[%s476 + $0x10] sm:$0xff]
        %v560 = vld [vmem:[%s476 + $0x18] sm:$0xff]
        %v561 = vld [vmem:[%s476 + $0x20] sm:$0xff]
        %v562 = vld [vmem:[%s476 + $0x28] sm:$0xff]
        %v563 = vld [vmem:[%s476 + $0x30] sm:$0xff]
        %v564 = vld [vmem:[%s476 + $0x38] sm:$0xff]
        %v565 = vpack.c.bf16 %v561, %v557
        %v566 = vpack.c.bf16 %v562, %v558
        %v567 = vpack.c.bf16 %v563, %v559
        %v568 = vpack.c.bf16 %v564, %v560
        %v569 = vld [vmem:[%s1] sm:$0xf]
        %v570 = vld [vmem:[%s1 + $0x4] sm:$0xf]
        %v571 = vld [vmem:[%s1 + $0x8] sm:$0xf]
        %v572 = vld [vmem:[%s1 + $0xc] sm:$0xf]
        %v573 = vld [vmem:[%s1 + $0x10] sm:$0xf]
        %v574 = vld [vmem:[%s1 + $0x14] sm:$0xf]
        %v575 = vld [vmem:[%s1 + $0x18] sm:$0xf]
        %v576 = vld [vmem:[%s1 + $0x1c] sm:$0xf]
        %v577 = vld [vmem:[%s2] sm:$0xff]
        %v578 = vld [vmem:[%s2 + $0x8] sm:$0xff]
        %v579 = vld [vmem:[%s2 + $0x10] sm:$0xff]
        %v580 = vld [vmem:[%s2 + $0x18] sm:$0xff]
        %v581 = vld [vmem:[%s2 + $0x20] sm:$0xff]
        %v582 = vld [vmem:[%s2 + $0x28] sm:$0xff]
        %v583 = vld [vmem:[%s2 + $0x30] sm:$0xff]
        %v584 = vld [vmem:[%s2 + $0x38] sm:$0xff]
        %586 = vset.pattern.permute.xlu0 0
        %587 = vperm.xlu0 %586, %v577
        %v588 = vpop.permute.xlu0 %587
        %591 = vset.pattern.permute.xlu0 0
        %592 = vperm.xlu0 %591, %v578
        %v593 = vpop.permute.xlu0 %592
        %596 = vset.pattern.permute.xlu0 0
        %597 = vperm.xlu0 %596, %v579
        %v598 = vpop.permute.xlu0 %597
        %601 = vset.pattern.permute.xlu0 0
        %602 = vperm.xlu0 %601, %v580
        %v603 = vpop.permute.xlu0 %602
        %606 = vset.pattern.permute.xlu0 0
        %607 = vperm.xlu0 %606, %v581
        %v608 = vpop.permute.xlu0 %607
        %611 = vset.pattern.permute.xlu0 0
        %612 = vperm.xlu0 %611, %v582
        %v613 = vpop.permute.xlu0 %612
        %616 = vset.pattern.permute.xlu0 0
        %617 = vperm.xlu0 %616, %v583
        %v618 = vpop.permute.xlu0 %617
        %621 = vset.pattern.permute.xlu0 0
        %622 = vperm.xlu0 %621, %v584
        %v623 = vpop.permute.xlu0 %622
        %v633 = vunpack.c.l.b16 %v569
        %v634 = vunpack.c.l.b16 %v570
        %v635 = vunpack.c.l.b16 %v571
        %v636 = vunpack.c.l.b16 %v572
        %v637 = vunpack.c.l.b16 %v573
        %v638 = vunpack.c.l.b16 %v574
        %v639 = vunpack.c.l.b16 %v575
        %v640 = vunpack.c.l.b16 %v576
        %v641 = vpack.c.b16 %v634, %v633
        %v642 = vpack.c.b16 %v636, %v635
        %v643 = vpack.c.b16 %v638, %v637
        %v644 = vpack.c.b16 %v640, %v639
        %vm645 = vcmask 130048
        %v647 = vsel %vm645, %v641, 0
        %v650 = vsel %vm645, %v642, 0
        %v653 = vsel %vm645, %v643, 0
        %v656 = vsel %vm645, %v644, 0
        %658 = vmatpush.bf16.msra.mxu0 0
        %659 = vmatpush.bf16.msra.mxu0 0
        %660 = vmatpush.bf16.msra.mxu0 0
        %661 = vmatpush.bf16.msra.mxu0 0
        %662 = vmatpush.bf16.msra.mxu0 0
        %663 = vmatpush.bf16.msra.mxu0 0
        %664 = vmatpush.bf16.msra.mxu0 0
        %665 = vmatpush.bf16.msra.mxu0 %v565
        %666 = vmatmul.bf16.gmra.mxu0 %v647
        %v667 = vpop.f32.mrf.mxu0
        %v668 = vadd.f32 %v588, %v667
        %v669 = vpop.f32.mrf.mxu0
        %v670 = vadd.f32 %v593, %v669
        %671 = vmatmul.bf16.gmra.mxu0 %v650
        %v672 = vpop.f32.mrf.mxu0
        %v673 = vadd.f32 %v598, %v672
        %v674 = vpop.f32.mrf.mxu0
        %v675 = vadd.f32 %v603, %v674
        %676 = vmatmul.bf16.gmra.mxu0 %v653
        %v677 = vpop.f32.mrf.mxu0
        %v678 = vadd.f32 %v608, %v677
        %v679 = vpop.f32.mrf.mxu0
        %v680 = vadd.f32 %v613, %v679
        %681 = vmatmul.bf16.gmra.mxu0 %v656
        %v682 = vpop.f32.mrf.mxu0
        %v683 = vadd.f32 %v618, %v682
        %v684 = vpop.f32.mrf.mxu0
        %v685 = vadd.f32 %v623, %v684
        %686 = vdwg.mxu0
        %687 = vmatpush.bf16.msra.mxu0 0
        %688 = vmatpush.bf16.msra.mxu0 0
        %689 = vmatpush.bf16.msra.mxu0 0
        %690 = vmatpush.bf16.msra.mxu0 0
        %691 = vmatpush.bf16.msra.mxu0 0
        %692 = vmatpush.bf16.msra.mxu0 0
        %693 = vmatpush.bf16.msra.mxu0 0
        %694 = vmatpush.bf16.msra.mxu0 %v566
        %695 = vmatmul.bf16.gmra.mxu0 %v647
        %v696 = vpop.f32.mrf.mxu0
        %v697 = vadd.f32 %v588, %v696
        %v698 = vpop.f32.mrf.mxu0
        %v699 = vadd.f32 %v593, %v698
        %700 = vmatmul.bf16.gmra.mxu0 %v650
        %v701 = vpop.f32.mrf.mxu0
        %v702 = vadd.f32 %v598, %v701
        %v703 = vpop.f32.mrf.mxu0
        %v704 = vadd.f32 %v603, %v703
        %705 = vmatmul.bf16.gmra.mxu0 %v653
        %v706 = vpop.f32.mrf.mxu0
        %v707 = vadd.f32 %v608, %v706
        %v708 = vpop.f32.mrf.mxu0
        %v709 = vadd.f32 %v613, %v708
        %710 = vmatmul.bf16.gmra.mxu0 %v656
        %v711 = vpop.f32.mrf.mxu0
        %v712 = vadd.f32 %v618, %v711
        %v713 = vpop.f32.mrf.mxu0
        %v714 = vadd.f32 %v623, %v713
        %715 = vdwg.mxu0
        %716 = vmatpush.bf16.msra.mxu0 0
        %717 = vmatpush.bf16.msra.mxu0 0
        %718 = vmatpush.bf16.msra.mxu0 0
        %719 = vmatpush.bf16.msra.mxu0 0
        %720 = vmatpush.bf16.msra.mxu0 0
        %721 = vmatpush.bf16.msra.mxu0 0
        %722 = vmatpush.bf16.msra.mxu0 0
        %723 = vmatpush.bf16.msra.mxu0 %v567
        %724 = vmatmul.bf16.gmra.mxu0 %v647
        %v725 = vpop.f32.mrf.mxu0
        %v726 = vadd.f32 %v588, %v725
        %v727 = vpop.f32.mrf.mxu0
        %v728 = vadd.f32 %v593, %v727
        %729 = vmatmul.bf16.gmra.mxu0 %v650
        %v730 = vpop.f32.mrf.mxu0
        %v731 = vadd.f32 %v598, %v730
        %v732 = vpop.f32.mrf.mxu0
        %v733 = vadd.f32 %v603, %v732
        %734 = vmatmul.bf16.gmra.mxu0 %v653
        %v735 = vpop.f32.mrf.mxu0
        %v736 = vadd.f32 %v608, %v735
        %v737 = vpop.f32.mrf.mxu0
        %v738 = vadd.f32 %v613, %v737
        %739 = vmatmul.bf16.gmra.mxu0 %v656
        %v740 = vpop.f32.mrf.mxu0
        %v741 = vadd.f32 %v618, %v740
        %v742 = vpop.f32.mrf.mxu0
        %v743 = vadd.f32 %v623, %v742
        %744 = vdwg.mxu0
        %745 = vmatpush.bf16.msra.mxu0 0
        %746 = vmatpush.bf16.msra.mxu0 0
        %747 = vmatpush.bf16.msra.mxu0 0
        %748 = vmatpush.bf16.msra.mxu0 0
        %749 = vmatpush.bf16.msra.mxu0 0
        %750 = vmatpush.bf16.msra.mxu0 0
        %751 = vmatpush.bf16.msra.mxu0 0
        %752 = vmatpush.bf16.msra.mxu0 %v568
        %753 = vmatmul.bf16.gmra.mxu0 %v647
        %v754 = vpop.f32.mrf.mxu0
        %v755 = vadd.f32 %v588, %v754
        %v756 = vpop.f32.mrf.mxu0
        %v757 = vadd.f32 %v593, %v756
        %758 = vmatmul.bf16.gmra.mxu0 %v650
        %v759 = vpop.f32.mrf.mxu0
        %v760 = vadd.f32 %v598, %v759
        %v761 = vpop.f32.mrf.mxu0
        %v762 = vadd.f32 %v603, %v761
        %763 = vmatmul.bf16.gmra.mxu0 %v653
        %v764 = vpop.f32.mrf.mxu0
        %v765 = vadd.f32 %v608, %v764
        %v766 = vpop.f32.mrf.mxu0
        %v767 = vadd.f32 %v613, %v766
        %768 = vmatmul.bf16.gmra.mxu0 %v656
        %v769 = vpop.f32.mrf.mxu0
        %v770 = vadd.f32 %v618, %v769
        %v771 = vpop.f32.mrf.mxu0
        %v772 = vadd.f32 %v623, %v771
        %773 = vdwg.mxu0
        %v774 = vmax.f32 %v668, 0.0
        %v775 = vmax.f32 %v697, 0.0
        %v776 = vmax.f32 %v726, 0.0
        %v777 = vmax.f32 %v755, 0.0
        %v778 = vmax.f32 %v670, 0.0
        %v779 = vmax.f32 %v699, 0.0
        %v780 = vmax.f32 %v728, 0.0
        %v781 = vmax.f32 %v757, 0.0
        %v782 = vmax.f32 %v673, 0.0
        %v783 = vmax.f32 %v702, 0.0
        %v784 = vmax.f32 %v731, 0.0
        %v785 = vmax.f32 %v760, 0.0
        %v786 = vmax.f32 %v675, 0.0
        %v787 = vmax.f32 %v704, 0.0
        %v788 = vmax.f32 %v733, 0.0
        %v789 = vmax.f32 %v762, 0.0
        %v790 = vmax.f32 %v678, 0.0
        %v791 = vmax.f32 %v707, 0.0
        %v792 = vmax.f32 %v736, 0.0
        %v793 = vmax.f32 %v765, 0.0
        %v794 = vmax.f32 %v680, 0.0
        %v795 = vmax.f32 %v709, 0.0
        %v796 = vmax.f32 %v738, 0.0
        %v797 = vmax.f32 %v767, 0.0
        %v798 = vmax.f32 %v683, 0.0
        %v799 = vmax.f32 %v712, 0.0
        %v800 = vmax.f32 %v741, 0.0
        %v801 = vmax.f32 %v770, 0.0
        %v802 = vmax.f32 %v685, 0.0
        %v803 = vmax.f32 %v714, 0.0
        %v804 = vmax.f32 %v743, 0.0
        %v805 = vmax.f32 %v772, 0.0
        %v806 = vld [vmem:[%s3] sm:$0xf]
        %v807 = vld [vmem:[%s3 + $0x4] sm:$0xf]
        %v808 = vld [vmem:[%s3 + $0x8] sm:$0xf]
        %v809 = vld [vmem:[%s3 + $0xc] sm:$0xf]
        %v810 = vld [vmem:[%s3 + $0x10] sm:$0xf]
        %v811 = vld [vmem:[%s3 + $0x14] sm:$0xf]
        %v812 = vld [vmem:[%s3 + $0x18] sm:$0xf]
        %v813 = vld [vmem:[%s3 + $0x1c] sm:$0xf]
        %v814 = vld [vmem:[%s3 + $0x20] sm:$0xf]
        %v815 = vld [vmem:[%s3 + $0x24] sm:$0xf]
        %v816 = vld [vmem:[%s3 + $0x28] sm:$0xf]
        %v817 = vld [vmem:[%s3 + $0x2c] sm:$0xf]
        %v818 = vld [vmem:[%s3 + $0x30] sm:$0xf]
        %v819 = vld [vmem:[%s3 + $0x34] sm:$0xf]
        %v820 = vld [vmem:[%s3 + $0x38] sm:$0xf]
        %v821 = vld [vmem:[%s3 + $0x3c] sm:$0xf]
        %v822 = vpack.c.bf16 %v778, %v774
        %v823 = vpack.c.bf16 %v779, %v775
        %v824 = vpack.c.bf16 %v780, %v776
        %v825 = vpack.c.bf16 %v781, %v777
        %v826 = vpack.c.bf16 %v786, %v782
        %v827 = vpack.c.bf16 %v787, %v783
        %v828 = vpack.c.bf16 %v788, %v784
        %v829 = vpack.c.bf16 %v789, %v785
        %v830 = vpack.c.bf16 %v794, %v790
        %v831 = vpack.c.bf16 %v795, %v791
        %v832 = vpack.c.bf16 %v796, %v792
        %v833 = vpack.c.bf16 %v797, %v793
        %v834 = vpack.c.bf16 %v802, %v798
        %v835 = vpack.c.bf16 %v803, %v799
        %v836 = vpack.c.bf16 %v804, %v800
        %v837 = vpack.c.bf16 %v805, %v801
        %v838 = vld [vmem:[%s4] sm:$0xff]
        %v839 = vld [vmem:[%s4 + $0x8] sm:$0xff]
        %v840 = vld [vmem:[%s4 + $0x10] sm:$0xff]
        %v841 = vld [vmem:[%s4 + $0x18] sm:$0xff]
        %v842 = vld [vmem:[%s4 + $0x20] sm:$0xff]
        %v843 = vld [vmem:[%s4 + $0x28] sm:$0xff]
        %v844 = vld [vmem:[%s4 + $0x30] sm:$0xff]
        %v845 = vld [vmem:[%s4 + $0x38] sm:$0xff]
        %v846 = vld [vmem:[%s4 + $0x40] sm:$0xff]
        %v847 = vld [vmem:[%s4 + $0x48] sm:$0xff]
        %v848 = vld [vmem:[%s4 + $0x50] sm:$0xff]
        %v849 = vld [vmem:[%s4 + $0x58] sm:$0xff]
        %v850 = vld [vmem:[%s4 + $0x60] sm:$0xff]
        %v851 = vld [vmem:[%s4 + $0x68] sm:$0xff]
        %v852 = vld [vmem:[%s4 + $0x70] sm:$0xff]
        %v853 = vld [vmem:[%s4 + $0x78] sm:$0xff]
        %855 = vset.pattern.permute.xlu0 0
        %856 = vperm.xlu0 %855, %v838
        %v857 = vpop.permute.xlu0 %856
        %860 = vset.pattern.permute.xlu0 0
        %861 = vperm.xlu0 %860, %v839
        %v862 = vpop.permute.xlu0 %861
        %865 = vset.pattern.permute.xlu0 0
        %866 = vperm.xlu0 %865, %v840
        %v867 = vpop.permute.xlu0 %866
        %870 = vset.pattern.permute.xlu0 0
        %871 = vperm.xlu0 %870, %v841
        %v872 = vpop.permute.xlu0 %871
        %875 = vset.pattern.permute.xlu0 0
        %876 = vperm.xlu0 %875, %v842
        %v877 = vpop.permute.xlu0 %876
        %880 = vset.pattern.permute.xlu0 0
        %881 = vperm.xlu0 %880, %v843
        %v882 = vpop.permute.xlu0 %881
        %885 = vset.pattern.permute.xlu0 0
        %886 = vperm.xlu0 %885, %v844
        %v887 = vpop.permute.xlu0 %886
        %890 = vset.pattern.permute.xlu0 0
        %891 = vperm.xlu0 %890, %v845
        %v892 = vpop.permute.xlu0 %891
        %895 = vset.pattern.permute.xlu0 0
        %896 = vperm.xlu0 %895, %v846
        %v897 = vpop.permute.xlu0 %896
        %900 = vset.pattern.permute.xlu0 0
        %901 = vperm.xlu0 %900, %v847
        %v902 = vpop.permute.xlu0 %901
        %905 = vset.pattern.permute.xlu0 0
        %906 = vperm.xlu0 %905, %v848
        %v907 = vpop.permute.xlu0 %906
        %910 = vset.pattern.permute.xlu0 0
        %911 = vperm.xlu0 %910, %v849
        %v912 = vpop.permute.xlu0 %911
        %915 = vset.pattern.permute.xlu0 0
        %916 = vperm.xlu0 %915, %v850
        %v917 = vpop.permute.xlu0 %916
        %920 = vset.pattern.permute.xlu0 0
        %921 = vperm.xlu0 %920, %v851
        %v922 = vpop.permute.xlu0 %921
        %925 = vset.pattern.permute.xlu0 0
        %926 = vperm.xlu0 %925, %v852
        %v927 = vpop.permute.xlu0 %926
        %930 = vset.pattern.permute.xlu0 0
        %931 = vperm.xlu0 %930, %v853
        %v932 = vpop.permute.xlu0 %931
        %v950 = vunpack.c.l.b16 %v806
        %v951 = vunpack.c.l.b16 %v807
        %v952 = vunpack.c.l.b16 %v808
        %v953 = vunpack.c.l.b16 %v809
        %v954 = vunpack.c.l.b16 %v810
        %v955 = vunpack.c.l.b16 %v811
        %v956 = vunpack.c.l.b16 %v812
        %v957 = vunpack.c.l.b16 %v813
        %v958 = vunpack.c.l.b16 %v814
        %v959 = vunpack.c.l.b16 %v815
        %v960 = vunpack.c.l.b16 %v816
        %v961 = vunpack.c.l.b16 %v817
        %v962 = vunpack.c.l.b16 %v818
        %v963 = vunpack.c.l.b16 %v819
        %v964 = vunpack.c.l.b16 %v820
        %v965 = vunpack.c.l.b16 %v821
        %v966 = vpack.c.b16 %v951, %v950
        %v967 = vpack.c.b16 %v953, %v952
        %v968 = vpack.c.b16 %v955, %v954
        %v969 = vpack.c.b16 %v957, %v956
        %v970 = vpack.c.b16 %v959, %v958
        %v971 = vpack.c.b16 %v961, %v960
        %v972 = vpack.c.b16 %v963, %v962
        %v973 = vpack.c.b16 %v965, %v964
        %vm974 = vcmask 523264
        %v976 = vsel %vm974, %v966, 0
        %v979 = vsel %vm974, %v967, 0
        %v982 = vsel %vm974, %v968, 0
        %v985 = vsel %vm974, %v969, 0
        %v988 = vsel %vm974, %v970, 0
        %v991 = vsel %vm974, %v971, 0
        %v994 = vsel %vm974, %v972, 0
        %v997 = vsel %vm974, %v973, 0
        %999 = vmatpush.bf16.msra.mxu0 0
        %1000 = vmatpush.bf16.msra.mxu0 0
        %1001 = vmatpush.bf16.msra.mxu0 0
        %1002 = vmatpush.bf16.msra.mxu0 0
        %1003 = vmatpush.bf16.msra.mxu0 %v834
        %1004 = vmatpush.bf16.msra.mxu0 %v830
        %1005 = vmatpush.bf16.msra.mxu0 %v826
        %1006 = vmatpush.bf16.msra.mxu0 %v822
        %1007 = vmatmul.bf16.gmra.mxu0 %v976
        %v1008 = vpop.f32.mrf.mxu0
        %v1009 = vadd.f32 %v857, %v1008
        %v1010 = vpop.f32.mrf.mxu0
        %v1011 = vadd.f32 %v862, %v1010
        %1012 = vmatmul.bf16.gmra.mxu0 %v979
        %v1013 = vpop.f32.mrf.mxu0
        %v1014 = vadd.f32 %v867, %v1013
        %v1015 = vpop.f32.mrf.mxu0
        %v1016 = vadd.f32 %v872, %v1015
        %1017 = vmatmul.bf16.gmra.mxu0 %v982
        %v1018 = vpop.f32.mrf.mxu0
        %v1019 = vadd.f32 %v877, %v1018
        %v1020 = vpop.f32.mrf.mxu0
        %v1021 = vadd.f32 %v882, %v1020
        %1022 = vmatmul.bf16.gmra.mxu0 %v985
        %v1023 = vpop.f32.mrf.mxu0
        %v1024 = vadd.f32 %v887, %v1023
        %v1025 = vpop.f32.mrf.mxu0
        %v1026 = vadd.f32 %v892, %v1025
        %1027 = vmatmul.bf16.gmra.mxu0 %v988
        %v1028 = vpop.f32.mrf.mxu0
        %v1029 = vadd.f32 %v897, %v1028
        %v1030 = vpop.f32.mrf.mxu0
        %v1031 = vadd.f32 %v902, %v1030
        %1032 = vmatmul.bf16.gmra.mxu0 %v991
        %v1033 = vpop.f32.mrf.mxu0
        %v1034 = vadd.f32 %v907, %v1033
        %v1035 = vpop.f32.mrf.mxu0
        %v1036 = vadd.f32 %v912, %v1035
        %1037 = vmatmul.bf16.gmra.mxu0 %v994
        %v1038 = vpop.f32.mrf.mxu0
        %v1039 = vadd.f32 %v917, %v1038
        %v1040 = vpop.f32.mrf.mxu0
        %v1041 = vadd.f32 %v922, %v1040
        %1042 = vmatmul.bf16.gmra.mxu0 %v997
        %v1043 = vpop.f32.mrf.mxu0
        %v1044 = vadd.f32 %v927, %v1043
        %v1045 = vpop.f32.mrf.mxu0
        %v1046 = vadd.f32 %v932, %v1045
        %1047 = vdwg.mxu0
        %1048 = vmatpush.bf16.msra.mxu0 0
        %1049 = vmatpush.bf16.msra.mxu0 0
        %1050 = vmatpush.bf16.msra.mxu0 0
        %1051 = vmatpush.bf16.msra.mxu0 0
        %1052 = vmatpush.bf16.msra.mxu0 %v835
        %1053 = vmatpush.bf16.msra.mxu0 %v831
        %1054 = vmatpush.bf16.msra.mxu0 %v827
        %1055 = vmatpush.bf16.msra.mxu0 %v823
        %1056 = vmatmul.bf16.gmra.mxu0 %v976
        %v1057 = vpop.f32.mrf.mxu0
        %v1058 = vadd.f32 %v857, %v1057
        %v1059 = vpop.f32.mrf.mxu0
        %v1060 = vadd.f32 %v862, %v1059
        %1061 = vmatmul.bf16.gmra.mxu0 %v979
        %v1062 = vpop.f32.mrf.mxu0
        %v1063 = vadd.f32 %v867, %v1062
        %v1064 = vpop.f32.mrf.mxu0
        %v1065 = vadd.f32 %v872, %v1064
        %1066 = vmatmul.bf16.gmra.mxu0 %v982
        %v1067 = vpop.f32.mrf.mxu0
        %v1068 = vadd.f32 %v877, %v1067
        %v1069 = vpop.f32.mrf.mxu0
        %v1070 = vadd.f32 %v882, %v1069
        %1071 = vmatmul.bf16.gmra.mxu0 %v985
        %v1072 = vpop.f32.mrf.mxu0
        %v1073 = vadd.f32 %v887, %v1072
        %v1074 = vpop.f32.mrf.mxu0
        %v1075 = vadd.f32 %v892, %v1074
        %1076 = vmatmul.bf16.gmra.mxu0 %v988
        %v1077 = vpop.f32.mrf.mxu0
        %v1078 = vadd.f32 %v897, %v1077
        %v1079 = vpop.f32.mrf.mxu0
        %v1080 = vadd.f32 %v902, %v1079
        %1081 = vmatmul.bf16.gmra.mxu0 %v991
        %v1082 = vpop.f32.mrf.mxu0
        %v1083 = vadd.f32 %v907, %v1082
        %v1084 = vpop.f32.mrf.mxu0
        %v1085 = vadd.f32 %v912, %v1084
        %1086 = vmatmul.bf16.gmra.mxu0 %v994
        %v1087 = vpop.f32.mrf.mxu0
        %v1088 = vadd.f32 %v917, %v1087
        %v1089 = vpop.f32.mrf.mxu0
        %v1090 = vadd.f32 %v922, %v1089
        %1091 = vmatmul.bf16.gmra.mxu0 %v997
        %v1092 = vpop.f32.mrf.mxu0
        %v1093 = vadd.f32 %v927, %v1092
        %v1094 = vpop.f32.mrf.mxu0
        %v1095 = vadd.f32 %v932, %v1094
        %1096 = vdwg.mxu0
        %1097 = vmatpush.bf16.msra.mxu0 0
        %1098 = vmatpush.bf16.msra.mxu0 0
        %1099 = vmatpush.bf16.msra.mxu0 0
        %1100 = vmatpush.bf16.msra.mxu0 0
        %1101 = vmatpush.bf16.msra.mxu0 %v836
        %1102 = vmatpush.bf16.msra.mxu0 %v832
        %1103 = vmatpush.bf16.msra.mxu0 %v828
        %1104 = vmatpush.bf16.msra.mxu0 %v824
        %1105 = vmatmul.bf16.gmra.mxu0 %v976
        %v1106 = vpop.f32.mrf.mxu0
        %v1107 = vadd.f32 %v857, %v1106
        %v1108 = vpop.f32.mrf.mxu0
        %v1109 = vadd.f32 %v862, %v1108
        %1110 = vmatmul.bf16.gmra.mxu0 %v979
        %v1111 = vpop.f32.mrf.mxu0
        %v1112 = vadd.f32 %v867, %v1111
        %v1113 = vpop.f32.mrf.mxu0
        %v1114 = vadd.f32 %v872, %v1113
        %1115 = vmatmul.bf16.gmra.mxu0 %v982
        %v1116 = vpop.f32.mrf.mxu0
        %v1117 = vadd.f32 %v877, %v1116
        %v1118 = vpop.f32.mrf.mxu0
        %v1119 = vadd.f32 %v882, %v1118
        %1120 = vmatmul.bf16.gmra.mxu0 %v985
        %v1121 = vpop.f32.mrf.mxu0
        %v1122 = vadd.f32 %v887, %v1121
        %v1123 = vpop.f32.mrf.mxu0
        %v1124 = vadd.f32 %v892, %v1123
        %1125 = vmatmul.bf16.gmra.mxu0 %v988
        %v1126 = vpop.f32.mrf.mxu0
        %v1127 = vadd.f32 %v897, %v1126
        %v1128 = vpop.f32.mrf.mxu0
        %v1129 = vadd.f32 %v902, %v1128
        %1130 = vmatmul.bf16.gmra.mxu0 %v991
        %v1131 = vpop.f32.mrf.mxu0
        %v1132 = vadd.f32 %v907, %v1131
        %v1133 = vpop.f32.mrf.mxu0
        %v1134 = vadd.f32 %v912, %v1133
        %1135 = vmatmul.bf16.gmra.mxu0 %v994
        %v1136 = vpop.f32.mrf.mxu0
        %v1137 = vadd.f32 %v917, %v1136
        %v1138 = vpop.f32.mrf.mxu0
        %v1139 = vadd.f32 %v922, %v1138
        %1140 = vmatmul.bf16.gmra.mxu0 %v997
        %v1141 = vpop.f32.mrf.mxu0
        %v1142 = vadd.f32 %v927, %v1141
        %v1143 = vpop.f32.mrf.mxu0
        %v1144 = vadd.f32 %v932, %v1143
        %1145 = vdwg.mxu0
        %1146 = vmatpush.bf16.msra.mxu0 0
        %1147 = vmatpush.bf16.msra.mxu0 0
        %1148 = vmatpush.bf16.msra.mxu0 0
        %1149 = vmatpush.bf16.msra.mxu0 0
        %1150 = vmatpush.bf16.msra.mxu0 %v837
        %1151 = vmatpush.bf16.msra.mxu0 %v833
        %1152 = vmatpush.bf16.msra.mxu0 %v829
        %1153 = vmatpush.bf16.msra.mxu0 %v825
        %1154 = vmatmul.bf16.gmra.mxu0 %v976
        %v1155 = vpop.f32.mrf.mxu0
        %v1156 = vadd.f32 %v857, %v1155
        %v1157 = vpop.f32.mrf.mxu0
        %v1158 = vadd.f32 %v862, %v1157
        %1159 = vmatmul.bf16.gmra.mxu0 %v979
        %v1160 = vpop.f32.mrf.mxu0
        %v1161 = vadd.f32 %v867, %v1160
        %v1162 = vpop.f32.mrf.mxu0
        %v1163 = vadd.f32 %v872, %v1162
        %1164 = vmatmul.bf16.gmra.mxu0 %v982
        %v1165 = vpop.f32.mrf.mxu0
        %v1166 = vadd.f32 %v877, %v1165
        %v1167 = vpop.f32.mrf.mxu0
        %v1168 = vadd.f32 %v882, %v1167
        %1169 = vmatmul.bf16.gmra.mxu0 %v985
        %v1170 = vpop.f32.mrf.mxu0
        %v1171 = vadd.f32 %v887, %v1170
        %v1172 = vpop.f32.mrf.mxu0
        %v1173 = vadd.f32 %v892, %v1172
        %1174 = vmatmul.bf16.gmra.mxu0 %v988
        %v1175 = vpop.f32.mrf.mxu0
        %v1176 = vadd.f32 %v897, %v1175
        %v1177 = vpop.f32.mrf.mxu0
        %v1178 = vadd.f32 %v902, %v1177
        %1179 = vmatmul.bf16.gmra.mxu0 %v991
        %v1180 = vpop.f32.mrf.mxu0
        %v1181 = vadd.f32 %v907, %v1180
        %v1182 = vpop.f32.mrf.mxu0
        %v1183 = vadd.f32 %v912, %v1182
        %1184 = vmatmul.bf16.gmra.mxu0 %v994
        %v1185 = vpop.f32.mrf.mxu0
        %v1186 = vadd.f32 %v917, %v1185
        %v1187 = vpop.f32.mrf.mxu0
        %v1188 = vadd.f32 %v922, %v1187
        %1189 = vmatmul.bf16.gmra.mxu0 %v997
        %v1190 = vpop.f32.mrf.mxu0
        %v1191 = vadd.f32 %v927, %v1190
        %v1192 = vpop.f32.mrf.mxu0
        %v1193 = vadd.f32 %v932, %v1192
        %1194 = vdwg.mxu0
        %v1195 = vmax.f32 %v1009, 0.0
        %v1196 = vmax.f32 %v1058, 0.0
        %v1197 = vmax.f32 %v1107, 0.0
        %v1198 = vmax.f32 %v1156, 0.0
        %v1199 = vmax.f32 %v1011, 0.0
        %v1200 = vmax.f32 %v1060, 0.0
        %v1201 = vmax.f32 %v1109, 0.0
        %v1202 = vmax.f32 %v1158, 0.0
        %v1203 = vmax.f32 %v1014, 0.0
        %v1204 = vmax.f32 %v1063, 0.0
        %v1205 = vmax.f32 %v1112, 0.0
        %v1206 = vmax.f32 %v1161, 0.0
        %v1207 = vmax.f32 %v1016, 0.0
        %v1208 = vmax.f32 %v1065, 0.0
        %v1209 = vmax.f32 %v1114, 0.0
        %v1210 = vmax.f32 %v1163, 0.0
        %v1211 = vmax.f32 %v1019, 0.0
        %v1212 = vmax.f32 %v1068, 0.0
        %v1213 = vmax.f32 %v1117, 0.0
        %v1214 = vmax.f32 %v1166, 0.0
        %v1215 = vmax.f32 %v1021, 0.0
        %v1216 = vmax.f32 %v1070, 0.0
        %v1217 = vmax.f32 %v1119, 0.0
        %v1218 = vmax.f32 %v1168, 0.0
        %v1219 = vmax.f32 %v1024, 0.0
        %v1220 = vmax.f32 %v1073, 0.0
        %v1221 = vmax.f32 %v1122, 0.0
        %v1222 = vmax.f32 %v1171, 0.0
        %v1223 = vmax.f32 %v1026, 0.0
        %v1224 = vmax.f32 %v1075, 0.0
        %v1225 = vmax.f32 %v1124, 0.0
        %v1226 = vmax.f32 %v1173, 0.0
        %v1227 = vmax.f32 %v1029, 0.0
        %v1228 = vmax.f32 %v1078, 0.0
        %v1229 = vmax.f32 %v1127, 0.0
        %v1230 = vmax.f32 %v1176, 0.0
        %v1231 = vmax.f32 %v1031, 0.0
        %v1232 = vmax.f32 %v1080, 0.0
        %v1233 = vmax.f32 %v1129, 0.0
        %v1234 = vmax.f32 %v1178, 0.0
        %v1235 = vmax.f32 %v1034, 0.0
        %v1236 = vmax.f32 %v1083, 0.0
        %v1237 = vmax.f32 %v1132, 0.0
        %v1238 = vmax.f32 %v1181, 0.0
        %v1239 = vmax.f32 %v1036, 0.0
        %v1240 = vmax.f32 %v1085, 0.0
        %v1241 = vmax.f32 %v1134, 0.0
        %v1242 = vmax.f32 %v1183, 0.0
        %v1243 = vmax.f32 %v1039, 0.0
        %v1244 = vmax.f32 %v1088, 0.0
        %v1245 = vmax.f32 %v1137, 0.0
        %v1246 = vmax.f32 %v1186, 0.0
        %v1247 = vmax.f32 %v1041, 0.0
        %v1248 = vmax.f32 %v1090, 0.0
        %v1249 = vmax.f32 %v1139, 0.0
        %v1250 = vmax.f32 %v1188, 0.0
        %v1251 = vmax.f32 %v1044, 0.0
        %v1252 = vmax.f32 %v1093, 0.0
        %v1253 = vmax.f32 %v1142, 0.0
        %v1254 = vmax.f32 %v1191, 0.0
        %v1255 = vmax.f32 %v1046, 0.0
        %v1256 = vmax.f32 %v1095, 0.0
        %v1257 = vmax.f32 %v1144, 0.0
        %v1258 = vmax.f32 %v1193, 0.0
        %1259 = vxpose.xlu0.b32.start [1/16] %v1195, 128
        %1260 = vxpose.xlu0.b32.cont [2/16] %v1199, 128
        %1261 = vxpose.xlu0.b32.cont [3/16] %v1203, 128
        %1262 = vxpose.xlu0.b32.cont [4/16] %v1207, 128
        %1263 = vxpose.xlu0.b32.cont [5/16] %v1211, 128
        %1264 = vxpose.xlu0.b32.cont [6/16] %v1215, 128
        %1265 = vxpose.xlu0.b32.cont [7/16] %v1219, 128
        %1266 = vxpose.xlu0.b32.cont [8/16] %v1223, 128
        %1267 = vxpose.xlu0.b32.cont [9/16] %v1227, 128
        %1268 = vxpose.xlu0.b32.cont [10/16] %v1231, 128
        %1269 = vxpose.xlu0.b32.cont [11/16] %v1235, 128
        %1270 = vxpose.xlu0.b32.cont [12/16] %v1239, 128
        %1271 = vxpose.xlu0.b32.cont [13/16] %v1243, 128
        %1272 = vxpose.xlu0.b32.cont [14/16] %v1247, 128
        %1273 = vxpose.xlu0.b32.cont [15/16] %v1251, 128
        %1274 = vxpose.xlu0.b32.end [16/16] %v1255, 128
        %v1275 = vpop.trf.xlu0
        %v1276 = vpop.trf.xlu0
        %v1277 = vpop.trf.xlu0
        %v1278 = vpop.trf.xlu0
        %v1279 = vpop.trf.xlu0
        %v1280 = vpop.trf.xlu0
        %v1281 = vpop.trf.xlu0
        %v1282 = vpop.trf.xlu0
        %v1283 = vpop.trf.xlu0
        %v1284 = vpop.trf.xlu0
        %v1285 = vpop.trf.xlu0
        %v1286 = vpop.trf.xlu0
        %v1287 = vpop.trf.xlu0
        %v1288 = vpop.trf.xlu0
        %v1289 = vpop.trf.xlu0
        %v1290 = vpop.trf.xlu0
        %1291 = vxpose.xlu0.b32.start [1/16] %v1196, 128
        %1292 = vxpose.xlu0.b32.cont [2/16] %v1200, 128
        %1293 = vxpose.xlu0.b32.cont [3/16] %v1204, 128
        %1294 = vxpose.xlu0.b32.cont [4/16] %v1208, 128
        %1295 = vxpose.xlu0.b32.cont [5/16] %v1212, 128
        %1296 = vxpose.xlu0.b32.cont [6/16] %v1216, 128
        %1297 = vxpose.xlu0.b32.cont [7/16] %v1220, 128
        %1298 = vxpose.xlu0.b32.cont [8/16] %v1224, 128
        %1299 = vxpose.xlu0.b32.cont [9/16] %v1228, 128
        %1300 = vxpose.xlu0.b32.cont [10/16] %v1232, 128
        %1301 = vxpose.xlu0.b32.cont [11/16] %v1236, 128
        %1302 = vxpose.xlu0.b32.cont [12/16] %v1240, 128
        %1303 = vxpose.xlu0.b32.cont [13/16] %v1244, 128
        %1304 = vxpose.xlu0.b32.cont [14/16] %v1248, 128
        %1305 = vxpose.xlu0.b32.cont [15/16] %v1252, 128
        %1306 = vxpose.xlu0.b32.end [16/16] %v1256, 128
        %v1307 = vpop.trf.xlu0
        %v1308 = vpop.trf.xlu0
        %v1309 = vpop.trf.xlu0
        %v1310 = vpop.trf.xlu0
        %v1311 = vpop.trf.xlu0
        %v1312 = vpop.trf.xlu0
        %v1313 = vpop.trf.xlu0
        %v1314 = vpop.trf.xlu0
        %v1315 = vpop.trf.xlu0
        %v1316 = vpop.trf.xlu0
        %v1317 = vpop.trf.xlu0
        %v1318 = vpop.trf.xlu0
        %v1319 = vpop.trf.xlu0
        %v1320 = vpop.trf.xlu0
        %v1321 = vpop.trf.xlu0
        %v1322 = vpop.trf.xlu0
        %1323 = vxpose.xlu0.b32.start [1/16] %v1197, 128
        %1324 = vxpose.xlu0.b32.cont [2/16] %v1201, 128
        %1325 = vxpose.xlu0.b32.cont [3/16] %v1205, 128
        %1326 = vxpose.xlu0.b32.cont [4/16] %v1209, 128
        %1327 = vxpose.xlu0.b32.cont [5/16] %v1213, 128
        %1328 = vxpose.xlu0.b32.cont [6/16] %v1217, 128
        %1329 = vxpose.xlu0.b32.cont [7/16] %v1221, 128
        %1330 = vxpose.xlu0.b32.cont [8/16] %v1225, 128
        %1331 = vxpose.xlu0.b32.cont [9/16] %v1229, 128
        %1332 = vxpose.xlu0.b32.cont [10/16] %v1233, 128
        %1333 = vxpose.xlu0.b32.cont [11/16] %v1237, 128
        %1334 = vxpose.xlu0.b32.cont [12/16] %v1241, 128
        %1335 = vxpose.xlu0.b32.cont [13/16] %v1245, 128
        %1336 = vxpose.xlu0.b32.cont [14/16] %v1249, 128
        %1337 = vxpose.xlu0.b32.cont [15/16] %v1253, 128
        %1338 = vxpose.xlu0.b32.end [16/16] %v1257, 128
        %v1339 = vpop.trf.xlu0
        %v1340 = vpop.trf.xlu0
        %v1341 = vpop.trf.xlu0
        %v1342 = vpop.trf.xlu0
        %v1343 = vpop.trf.xlu0
        %v1344 = vpop.trf.xlu0
        %v1345 = vpop.trf.xlu0
        %v1346 = vpop.trf.xlu0
        %v1347 = vpop.trf.xlu0
        %v1348 = vpop.trf.xlu0
        %v1349 = vpop.trf.xlu0
        %v1350 = vpop.trf.xlu0
        %v1351 = vpop.trf.xlu0
        %v1352 = vpop.trf.xlu0
        %v1353 = vpop.trf.xlu0
        %v1354 = vpop.trf.xlu0
        %1355 = vxpose.xlu0.b32.start [1/16] %v1198, 128
        %1356 = vxpose.xlu0.b32.cont [2/16] %v1202, 128
        %1357 = vxpose.xlu0.b32.cont [3/16] %v1206, 128
        %1358 = vxpose.xlu0.b32.cont [4/16] %v1210, 128
        %1359 = vxpose.xlu0.b32.cont [5/16] %v1214, 128
        %1360 = vxpose.xlu0.b32.cont [6/16] %v1218, 128
        %1361 = vxpose.xlu0.b32.cont [7/16] %v1222, 128
        %1362 = vxpose.xlu0.b32.cont [8/16] %v1226, 128
        %1363 = vxpose.xlu0.b32.cont [9/16] %v1230, 128
        %1364 = vxpose.xlu0.b32.cont [10/16] %v1234, 128
        %1365 = vxpose.xlu0.b32.cont [11/16] %v1238, 128
        %1366 = vxpose.xlu0.b32.cont [12/16] %v1242, 128
        %1367 = vxpose.xlu0.b32.cont [13/16] %v1246, 128
        %1368 = vxpose.xlu0.b32.cont [14/16] %v1250, 128
        %1369 = vxpose.xlu0.b32.cont [15/16] %v1254, 128
        %1370 = vxpose.xlu0.b32.end [16/16] %v1258, 128
        %v1371 = vpop.trf.xlu0
        %v1372 = vpop.trf.xlu0
        %v1373 = vpop.trf.xlu0
        %v1374 = vpop.trf.xlu0
        %v1375 = vpop.trf.xlu0
        %v1376 = vpop.trf.xlu0
        %v1377 = vpop.trf.xlu0
        %v1378 = vpop.trf.xlu0
        %v1379 = vpop.trf.xlu0
        %v1380 = vpop.trf.xlu0
        %v1381 = vpop.trf.xlu0
        %v1382 = vpop.trf.xlu0
        %v1383 = vpop.trf.xlu0
        %v1384 = vpop.trf.xlu0
        %v1385 = vpop.trf.xlu0
        %v1386 = vpop.trf.xlu0
        %v1387 = vpack.c.bf16 %v1276, %v1275
        %v1388 = vpack.c.bf16 %v1278, %v1277
        %v1389 = vpack.c.bf16 %v1280, %v1279
        %v1390 = vpack.c.bf16 %v1282, %v1281
        %v1391 = vpack.c.bf16 %v1284, %v1283
        %v1392 = vpack.c.bf16 %v1286, %v1285
        %v1393 = vpack.c.bf16 %v1288, %v1287
        %v1394 = vpack.c.bf16 %v1290, %v1289
        %v1395 = vpack.c.bf16 %v1308, %v1307
        %v1396 = vpack.c.bf16 %v1310, %v1309
        %v1397 = vpack.c.bf16 %v1312, %v1311
        %v1398 = vpack.c.bf16 %v1314, %v1313
        %v1399 = vpack.c.bf16 %v1316, %v1315
        %v1400 = vpack.c.bf16 %v1318, %v1317
        %v1401 = vpack.c.bf16 %v1320, %v1319
        %v1402 = vpack.c.bf16 %v1322, %v1321
        %v1403 = vpack.c.bf16 %v1340, %v1339
        %v1404 = vpack.c.bf16 %v1342, %v1341
        %v1405 = vpack.c.bf16 %v1344, %v1343
        %v1406 = vpack.c.bf16 %v1346, %v1345
        %v1407 = vpack.c.bf16 %v1348, %v1347
        %v1408 = vpack.c.bf16 %v1350, %v1349
        %v1409 = vpack.c.bf16 %v1352, %v1351
        %v1410 = vpack.c.bf16 %v1354, %v1353
        %v1411 = vpack.c.bf16 %v1372, %v1371
        %v1412 = vpack.c.bf16 %v1374, %v1373
        %v1413 = vpack.c.bf16 %v1376, %v1375
        %v1414 = vpack.c.bf16 %v1378, %v1377
        %v1415 = vpack.c.bf16 %v1380, %v1379
        %v1416 = vpack.c.bf16 %v1382, %v1381
        %v1417 = vpack.c.bf16 %v1384, %v1383
        %v1418 = vpack.c.bf16 %v1386, %v1385
        %v1419 = vld [vmem:[#allocation5] sm:$0xff]
        %v1420 = vld [vmem:[#allocation5 + $0x20] sm:$0xff]
        %v1421 = vld [vmem:[#allocation5 + $0x40] sm:$0xff]
        %v1422 = vld [vmem:[#allocation5 + $0x60] sm:$0xff]
        %v1423 = vld [vmem:[#allocation5 + $0x80] sm:$0xff]
        %v1424 = vld [vmem:[#allocation5 + $0xa0] sm:$0xff]
        %v1425 = vld [vmem:[#allocation5 + $0xc0] sm:$0xff]
        %v1426 = vld [vmem:[#allocation5 + $0xe0] sm:$0xff]
        %v1427 = vld [vmem:[#allocation5 + $0x100] sm:$0xff]
        %v1428 = vld [vmem:[#allocation5 + $0x120] sm:$0xff]
        %v1429 = vld [vmem:[#allocation5 + $0x140] sm:$0xff]
        %v1430 = vld [vmem:[#allocation5 + $0x160] sm:$0xff]
        %v1431 = vld [vmem:[#allocation5 + $0x180] sm:$0xff]
        %v1432 = vld [vmem:[#allocation5 + $0x1a0] sm:$0xff]
        %v1433 = vld [vmem:[#allocation5 + $0x1c0] sm:$0xff]
        %v1434 = vld [vmem:[#allocation5 + $0x1e0] sm:$0xff]
        %v1451 = vunpack.c.l.b16 %v1419
        %v1452 = vunpack.c.h.b16 %v1419
        %v1453 = vunpack.c.l.b16 %v1420
        %v1454 = vunpack.c.h.b16 %v1420
        %v1455 = vunpack.c.l.b16 %v1421
        %v1456 = vunpack.c.h.b16 %v1421
        %v1457 = vunpack.c.l.b16 %v1422
        %v1458 = vunpack.c.h.b16 %v1422
        %v1459 = vunpack.c.l.b16 %v1423
        %v1460 = vunpack.c.h.b16 %v1423
        %v1461 = vunpack.c.l.b16 %v1424
        %v1462 = vunpack.c.h.b16 %v1424
        %v1463 = vunpack.c.l.b16 %v1425
        %v1464 = vunpack.c.h.b16 %v1425
        %v1465 = vunpack.c.l.b16 %v1426
        %v1466 = vunpack.c.h.b16 %v1426
        %v1467 = vunpack.c.l.b16 %v1427
        %v1468 = vunpack.c.h.b16 %v1427
        %v1469 = vunpack.c.l.b16 %v1428
        %v1470 = vunpack.c.h.b16 %v1428
        %v1471 = vunpack.c.l.b16 %v1429
        %v1472 = vunpack.c.h.b16 %v1429
        %v1473 = vunpack.c.l.b16 %v1430
        %v1474 = vunpack.c.h.b16 %v1430
        %v1475 = vunpack.c.l.b16 %v1431
        %v1476 = vunpack.c.h.b16 %v1431
        %v1477 = vunpack.c.l.b16 %v1432
        %v1478 = vunpack.c.h.b16 %v1432
        %v1479 = vunpack.c.l.b16 %v1433
        %v1480 = vunpack.c.h.b16 %v1433
        %v1481 = vunpack.c.l.b16 %v1434
        %v1482 = vunpack.c.h.b16 %v1434
        %v1483 = vpack.c.b16 %v1453, %v1451
        %v1484 = vpack.c.b16 %v1454, %v1452
        %v1485 = vpack.c.b16 %v1457, %v1455
        %v1486 = vpack.c.b16 %v1458, %v1456
        %v1487 = vpack.c.b16 %v1461, %v1459
        %v1488 = vpack.c.b16 %v1462, %v1460
        %v1489 = vpack.c.b16 %v1465, %v1463
        %v1490 = vpack.c.b16 %v1466, %v1464
        %v1491 = vpack.c.b16 %v1469, %v1467
        %v1492 = vpack.c.b16 %v1470, %v1468
        %v1493 = vpack.c.b16 %v1473, %v1471
        %v1494 = vpack.c.b16 %v1474, %v1472
        %v1495 = vpack.c.b16 %v1477, %v1475
        %v1496 = vpack.c.b16 %v1478, %v1476
        %v1497 = vpack.c.b16 %v1481, %v1479
        %v1498 = vpack.c.b16 %v1482, %v1480
        %1515 = vmatpush.bf16.msra.mxu0 %v1497
        %1516 = vmatpush.bf16.msra.mxu0 %v1495
        %1517 = vmatpush.bf16.msra.mxu0 %v1493
        %1518 = vmatpush.bf16.msra.mxu0 %v1491
        %1519 = vmatpush.bf16.msra.mxu0 %v1489
        %1520 = vmatpush.bf16.msra.mxu0 %v1487
        %1521 = vmatpush.bf16.msra.mxu0 %v1485
        %1522 = vmatpush.bf16.msra.mxu0 %v1483
        %1523 = vmatmul.bf16.gmra.mxu0 %v1387
        %v1524 = vpop.f32.mrf.mxu0
        %v1525 = vadd.f32 0.0, %v1524
        %v1526 = vpop.f32.mrf.mxu0
        %v1527 = vadd.f32 0.0, %v1526
        %1528 = vmatmul.bf16.gmra.mxu0 %v1388
        %v1529 = vpop.f32.mrf.mxu0
        %v1530 = vadd.f32 0.0, %v1529
        %v1531 = vpop.f32.mrf.mxu0
        %v1532 = vadd.f32 0.0, %v1531
        %1533 = vmatmul.bf16.gmra.mxu0 %v1389
        %v1534 = vpop.f32.mrf.mxu0
        %v1535 = vadd.f32 0.0, %v1534
        %v1536 = vpop.f32.mrf.mxu0
        %v1537 = vadd.f32 0.0, %v1536
        %1538 = vmatmul.bf16.gmra.mxu0 %v1390
        %v1539 = vpop.f32.mrf.mxu0
        %v1540 = vadd.f32 0.0, %v1539
        %v1541 = vpop.f32.mrf.mxu0
        %v1542 = vadd.f32 0.0, %v1541
        %1543 = vmatmul.bf16.gmra.mxu0 %v1391
        %v1544 = vpop.f32.mrf.mxu0
        %v1545 = vadd.f32 0.0, %v1544
        %v1546 = vpop.f32.mrf.mxu0
        %v1547 = vadd.f32 0.0, %v1546
        %1548 = vmatmul.bf16.gmra.mxu0 %v1392
        %v1549 = vpop.f32.mrf.mxu0
        %v1550 = vadd.f32 0.0, %v1549
        %v1551 = vpop.f32.mrf.mxu0
        %v1552 = vadd.f32 0.0, %v1551
        %1553 = vmatmul.bf16.gmra.mxu0 %v1393
        %v1554 = vpop.f32.mrf.mxu0
        %v1555 = vadd.f32 0.0, %v1554
        %v1556 = vpop.f32.mrf.mxu0
        %v1557 = vadd.f32 0.0, %v1556
        %1558 = vmatmul.bf16.gmra.mxu0 %v1394
        %v1559 = vpop.f32.mrf.mxu0
        %v1560 = vadd.f32 0.0, %v1559
        %v1561 = vpop.f32.mrf.mxu0
        %v1562 = vadd.f32 0.0, %v1561
        %1563 = vmatmul.bf16.gmra.mxu0 %v1395
        %v1564 = vpop.f32.mrf.mxu0
        %v1565 = vadd.f32 0.0, %v1564
        %v1566 = vpop.f32.mrf.mxu0
        %v1567 = vadd.f32 0.0, %v1566
        %1568 = vmatmul.bf16.gmra.mxu0 %v1396
        %v1569 = vpop.f32.mrf.mxu0
        %v1570 = vadd.f32 0.0, %v1569
        %v1571 = vpop.f32.mrf.mxu0
        %v1572 = vadd.f32 0.0, %v1571
        %1573 = vmatmul.bf16.gmra.mxu0 %v1397
        %v1574 = vpop.f32.mrf.mxu0
        %v1575 = vadd.f32 0.0, %v1574
        %v1576 = vpop.f32.mrf.mxu0
        %v1577 = vadd.f32 0.0, %v1576
        %1578 = vmatmul.bf16.gmra.mxu0 %v1398
        %v1579 = vpop.f32.mrf.mxu0
        %v1580 = vadd.f32 0.0, %v1579
        %v1581 = vpop.f32.mrf.mxu0
        %v1582 = vadd.f32 0.0, %v1581
        %1583 = vmatmul.bf16.gmra.mxu0 %v1399
        %v1584 = vpop.f32.mrf.mxu0
        %v1585 = vadd.f32 0.0, %v1584
        %v1586 = vpop.f32.mrf.mxu0
        %v1587 = vadd.f32 0.0, %v1586
        %1588 = vmatmul.bf16.gmra.mxu0 %v1400
        %v1589 = vpop.f32.mrf.mxu0
        %v1590 = vadd.f32 0.0, %v1589
        %v1591 = vpop.f32.mrf.mxu0
        %v1592 = vadd.f32 0.0, %v1591
        %1593 = vmatmul.bf16.gmra.mxu0 %v1401
        %v1594 = vpop.f32.mrf.mxu0
        %v1595 = vadd.f32 0.0, %v1594
        %v1596 = vpop.f32.mrf.mxu0
        %v1597 = vadd.f32 0.0, %v1596
        %1598 = vmatmul.bf16.gmra.mxu0 %v1402
        %v1599 = vpop.f32.mrf.mxu0
        %v1600 = vadd.f32 0.0, %v1599
        %v1601 = vpop.f32.mrf.mxu0
        %v1602 = vadd.f32 0.0, %v1601
        %1603 = vmatmul.bf16.gmra.mxu0 %v1403
        %v1604 = vpop.f32.mrf.mxu0
        %v1605 = vadd.f32 0.0, %v1604
        %v1606 = vpop.f32.mrf.mxu0
        %v1607 = vadd.f32 0.0, %v1606
        %1608 = vmatmul.bf16.gmra.mxu0 %v1404
        %v1609 = vpop.f32.mrf.mxu0
        %v1610 = vadd.f32 0.0, %v1609
        %v1611 = vpop.f32.mrf.mxu0
        %v1612 = vadd.f32 0.0, %v1611
        %1613 = vmatmul.bf16.gmra.mxu0 %v1405
        %v1614 = vpop.f32.mrf.mxu0
        %v1615 = vadd.f32 0.0, %v1614
        %v1616 = vpop.f32.mrf.mxu0
        %v1617 = vadd.f32 0.0, %v1616
        %1618 = vmatmul.bf16.gmra.mxu0 %v1406
        %v1619 = vpop.f32.mrf.mxu0
        %v1620 = vadd.f32 0.0, %v1619
        %v1621 = vpop.f32.mrf.mxu0
        %v1622 = vadd.f32 0.0, %v1621
        %1623 = vmatmul.bf16.gmra.mxu0 %v1407
        %v1624 = vpop.f32.mrf.mxu0
        %v1625 = vadd.f32 0.0, %v1624
        %v1626 = vpop.f32.mrf.mxu0
        %v1627 = vadd.f32 0.0, %v1626
        %1628 = vmatmul.bf16.gmra.mxu0 %v1408
        %v1629 = vpop.f32.mrf.mxu0
        %v1630 = vadd.f32 0.0, %v1629
        %v1631 = vpop.f32.mrf.mxu0
        %v1632 = vadd.f32 0.0, %v1631
        %1633 = vmatmul.bf16.gmra.mxu0 %v1409
        %v1634 = vpop.f32.mrf.mxu0
        %v1635 = vadd.f32 0.0, %v1634
        %v1636 = vpop.f32.mrf.mxu0
        %v1637 = vadd.f32 0.0, %v1636
        %1638 = vmatmul.bf16.gmra.mxu0 %v1410
        %v1639 = vpop.f32.mrf.mxu0
        %v1640 = vadd.f32 0.0, %v1639
        %v1641 = vpop.f32.mrf.mxu0
        %v1642 = vadd.f32 0.0, %v1641
        %1643 = vmatmul.bf16.gmra.mxu0 %v1411
        %v1644 = vpop.f32.mrf.mxu0
        %v1645 = vadd.f32 0.0, %v1644
        %v1646 = vpop.f32.mrf.mxu0
        %v1647 = vadd.f32 0.0, %v1646
        %1648 = vmatmul.bf16.gmra.mxu0 %v1412
        %v1649 = vpop.f32.mrf.mxu0
        %v1650 = vadd.f32 0.0, %v1649
        %v1651 = vpop.f32.mrf.mxu0
        %v1652 = vadd.f32 0.0, %v1651
        %1653 = vmatmul.bf16.gmra.mxu0 %v1413
        %v1654 = vpop.f32.mrf.mxu0
        %v1655 = vadd.f32 0.0, %v1654
        %v1656 = vpop.f32.mrf.mxu0
        %v1657 = vadd.f32 0.0, %v1656
        %1658 = vmatmul.bf16.gmra.mxu0 %v1414
        %v1659 = vpop.f32.mrf.mxu0
        %v1660 = vadd.f32 0.0, %v1659
        %v1661 = vpop.f32.mrf.mxu0
        %v1662 = vadd.f32 0.0, %v1661
        %1663 = vmatmul.bf16.gmra.mxu0 %v1415
        %v1664 = vpop.f32.mrf.mxu0
        %v1665 = vadd.f32 0.0, %v1664
        %v1666 = vpop.f32.mrf.mxu0
        %v1667 = vadd.f32 0.0, %v1666
        %1668 = vmatmul.bf16.gmra.mxu0 %v1416
        %v1669 = vpop.f32.mrf.mxu0
        %v1670 = vadd.f32 0.0, %v1669
        %v1671 = vpop.f32.mrf.mxu0
        %v1672 = vadd.f32 0.0, %v1671
        %1673 = vmatmul.bf16.gmra.mxu0 %v1417
        %v1674 = vpop.f32.mrf.mxu0
        %v1675 = vadd.f32 0.0, %v1674
        %v1676 = vpop.f32.mrf.mxu0
        %v1677 = vadd.f32 0.0, %v1676
        %1678 = vmatmul.bf16.gmra.mxu0 %v1418
        %v1679 = vpop.f32.mrf.mxu0
        %v1680 = vadd.f32 0.0, %v1679
        %v1681 = vpop.f32.mrf.mxu0
        %v1682 = vadd.f32 0.0, %v1681
        %1683 = vdwg.mxu0
        %1684 = vmatpush.bf16.msra.mxu0 %v1498
        %1685 = vmatpush.bf16.msra.mxu0 %v1496
        %1686 = vmatpush.bf16.msra.mxu0 %v1494
        %1687 = vmatpush.bf16.msra.mxu0 %v1492
        %1688 = vmatpush.bf16.msra.mxu0 %v1490
        %1689 = vmatpush.bf16.msra.mxu0 %v1488
        %1690 = vmatpush.bf16.msra.mxu0 %v1486
        %1691 = vmatpush.bf16.msra.mxu0 %v1484
        %1692 = vmatmul.bf16.gmra.mxu0 %v1387
        %v1693 = vpop.f32.mrf.mxu0
        %v1694 = vadd.f32 0.0, %v1693
        %v1695 = vpop.f32.mrf.mxu0
        %v1696 = vadd.f32 0.0, %v1695
        %1697 = vmatmul.bf16.gmra.mxu0 %v1388
        %v1698 = vpop.f32.mrf.mxu0
        %v1699 = vadd.f32 0.0, %v1698
        %v1700 = vpop.f32.mrf.mxu0
        %v1701 = vadd.f32 0.0, %v1700
        %1702 = vmatmul.bf16.gmra.mxu0 %v1389
        %v1703 = vpop.f32.mrf.mxu0
        %v1704 = vadd.f32 0.0, %v1703
        %v1705 = vpop.f32.mrf.mxu0
        %v1706 = vadd.f32 0.0, %v1705
        %1707 = vmatmul.bf16.gmra.mxu0 %v1390
        %v1708 = vpop.f32.mrf.mxu0
        %v1709 = vadd.f32 0.0, %v1708
        %v1710 = vpop.f32.mrf.mxu0
        %v1711 = vadd.f32 0.0, %v1710
        %1712 = vmatmul.bf16.gmra.mxu0 %v1391
        %v1713 = vpop.f32.mrf.mxu0
        %v1714 = vadd.f32 0.0, %v1713
        %v1715 = vpop.f32.mrf.mxu0
        %v1716 = vadd.f32 0.0, %v1715
        %1717 = vmatmul.bf16.gmra.mxu0 %v1392
        %v1718 = vpop.f32.mrf.mxu0
        %v1719 = vadd.f32 0.0, %v1718
        %v1720 = vpop.f32.mrf.mxu0
        %v1721 = vadd.f32 0.0, %v1720
        %1722 = vmatmul.bf16.gmra.mxu0 %v1393
        %v1723 = vpop.f32.mrf.mxu0
        %v1724 = vadd.f32 0.0, %v1723
        %v1725 = vpop.f32.mrf.mxu0
        %v1726 = vadd.f32 0.0, %v1725
        %1727 = vmatmul.bf16.gmra.mxu0 %v1394
        %v1728 = vpop.f32.mrf.mxu0
        %v1729 = vadd.f32 0.0, %v1728
        %v1730 = vpop.f32.mrf.mxu0
        %v1731 = vadd.f32 0.0, %v1730
        %1732 = vmatmul.bf16.gmra.mxu0 %v1395
        %v1733 = vpop.f32.mrf.mxu0
        %v1734 = vadd.f32 0.0, %v1733
        %v1735 = vpop.f32.mrf.mxu0
        %v1736 = vadd.f32 0.0, %v1735
        %1737 = vmatmul.bf16.gmra.mxu0 %v1396
        %v1738 = vpop.f32.mrf.mxu0
        %v1739 = vadd.f32 0.0, %v1738
        %v1740 = vpop.f32.mrf.mxu0
        %v1741 = vadd.f32 0.0, %v1740
        %1742 = vmatmul.bf16.gmra.mxu0 %v1397
        %v1743 = vpop.f32.mrf.mxu0
        %v1744 = vadd.f32 0.0, %v1743
        %v1745 = vpop.f32.mrf.mxu0
        %v1746 = vadd.f32 0.0, %v1745
        %1747 = vmatmul.bf16.gmra.mxu0 %v1398
        %v1748 = vpop.f32.mrf.mxu0
        %v1749 = vadd.f32 0.0, %v1748
        %v1750 = vpop.f32.mrf.mxu0
        %v1751 = vadd.f32 0.0, %v1750
        %1752 = vmatmul.bf16.gmra.mxu0 %v1399
        %v1753 = vpop.f32.mrf.mxu0
        %v1754 = vadd.f32 0.0, %v1753
        %v1755 = vpop.f32.mrf.mxu0
        %v1756 = vadd.f32 0.0, %v1755
        %1757 = vmatmul.bf16.gmra.mxu0 %v1400
        %v1758 = vpop.f32.mrf.mxu0
        %v1759 = vadd.f32 0.0, %v1758
        %v1760 = vpop.f32.mrf.mxu0
        %v1761 = vadd.f32 0.0, %v1760
        %1762 = vmatmul.bf16.gmra.mxu0 %v1401
        %v1763 = vpop.f32.mrf.mxu0
        %v1764 = vadd.f32 0.0, %v1763
        %v1765 = vpop.f32.mrf.mxu0
        %v1766 = vadd.f32 0.0, %v1765
        %1767 = vmatmul.bf16.gmra.mxu0 %v1402
        %v1768 = vpop.f32.mrf.mxu0
        %v1769 = vadd.f32 0.0, %v1768
        %v1770 = vpop.f32.mrf.mxu0
        %v1771 = vadd.f32 0.0, %v1770
        %1772 = vmatmul.bf16.gmra.mxu0 %v1403
        %v1773 = vpop.f32.mrf.mxu0
        %v1774 = vadd.f32 0.0, %v1773
        %v1775 = vpop.f32.mrf.mxu0
        %v1776 = vadd.f32 0.0, %v1775
        %1777 = vmatmul.bf16.gmra.mxu0 %v1404
        %v1778 = vpop.f32.mrf.mxu0
        %v1779 = vadd.f32 0.0, %v1778
        %v1780 = vpop.f32.mrf.mxu0
        %v1781 = vadd.f32 0.0, %v1780
        %1782 = vmatmul.bf16.gmra.mxu0 %v1405
        %v1783 = vpop.f32.mrf.mxu0
        %v1784 = vadd.f32 0.0, %v1783
        %v1785 = vpop.f32.mrf.mxu0
        %v1786 = vadd.f32 0.0, %v1785
        %1787 = vmatmul.bf16.gmra.mxu0 %v1406
        %v1788 = vpop.f32.mrf.mxu0
        %v1789 = vadd.f32 0.0, %v1788
        %v1790 = vpop.f32.mrf.mxu0
        %v1791 = vadd.f32 0.0, %v1790
        %1792 = vmatmul.bf16.gmra.mxu0 %v1407
        %v1793 = vpop.f32.mrf.mxu0
        %v1794 = vadd.f32 0.0, %v1793
        %v1795 = vpop.f32.mrf.mxu0
        %v1796 = vadd.f32 0.0, %v1795
        %1797 = vmatmul.bf16.gmra.mxu0 %v1408
        %v1798 = vpop.f32.mrf.mxu0
        %v1799 = vadd.f32 0.0, %v1798
        %v1800 = vpop.f32.mrf.mxu0
        %v1801 = vadd.f32 0.0, %v1800
        %1802 = vmatmul.bf16.gmra.mxu0 %v1409
        %v1803 = vpop.f32.mrf.mxu0
        %v1804 = vadd.f32 0.0, %v1803
        %v1805 = vpop.f32.mrf.mxu0
        %v1806 = vadd.f32 0.0, %v1805
        %1807 = vmatmul.bf16.gmra.mxu0 %v1410
        %v1808 = vpop.f32.mrf.mxu0
        %v1809 = vadd.f32 0.0, %v1808
        %v1810 = vpop.f32.mrf.mxu0
        %v1811 = vadd.f32 0.0, %v1810
        %1812 = vmatmul.bf16.gmra.mxu0 %v1411
        %v1813 = vpop.f32.mrf.mxu0
        %v1814 = vadd.f32 0.0, %v1813
        %v1815 = vpop.f32.mrf.mxu0
        %v1816 = vadd.f32 0.0, %v1815
        %1817 = vmatmul.bf16.gmra.mxu0 %v1412
        %v1818 = vpop.f32.mrf.mxu0
        %v1819 = vadd.f32 0.0, %v1818
        %v1820 = vpop.f32.mrf.mxu0
        %v1821 = vadd.f32 0.0, %v1820
        %1822 = vmatmul.bf16.gmra.mxu0 %v1413
        %v1823 = vpop.f32.mrf.mxu0
        %v1824 = vadd.f32 0.0, %v1823
        %v1825 = vpop.f32.mrf.mxu0
        %v1826 = vadd.f32 0.0, %v1825
        %1827 = vmatmul.bf16.gmra.mxu0 %v1414
        %v1828 = vpop.f32.mrf.mxu0
        %v1829 = vadd.f32 0.0, %v1828
        %v1830 = vpop.f32.mrf.mxu0
        %v1831 = vadd.f32 0.0, %v1830
        %1832 = vmatmul.bf16.gmra.mxu0 %v1415
        %v1833 = vpop.f32.mrf.mxu0
        %v1834 = vadd.f32 0.0, %v1833
        %v1835 = vpop.f32.mrf.mxu0
        %v1836 = vadd.f32 0.0, %v1835
        %1837 = vmatmul.bf16.gmra.mxu0 %v1416
        %v1838 = vpop.f32.mrf.mxu0
        %v1839 = vadd.f32 0.0, %v1838
        %v1840 = vpop.f32.mrf.mxu0
        %v1841 = vadd.f32 0.0, %v1840
        %1842 = vmatmul.bf16.gmra.mxu0 %v1417
        %v1843 = vpop.f32.mrf.mxu0
        %v1844 = vadd.f32 0.0, %v1843
        %v1845 = vpop.f32.mrf.mxu0
        %v1846 = vadd.f32 0.0, %v1845
        %1847 = vmatmul.bf16.gmra.mxu0 %v1418
        %v1848 = vpop.f32.mrf.mxu0
        %v1849 = vadd.f32 0.0, %v1848
        %v1850 = vpop.f32.mrf.mxu0
        %v1851 = vadd.f32 0.0, %v1850
        %1852 = vdwg.mxu0
        %v1853 = vmax.f32 %v1525, %v1530
        %v1854 = vmax.f32 %v1527, %v1532
        %v1855 = vmax.f32 %v1853, %v1535
        %v1856 = vmax.f32 %v1854, %v1537
        %v1857 = vmax.f32 %v1855, %v1540
        %v1858 = vmax.f32 %v1856, %v1542
        %v1859 = vmax.f32 %v1857, %v1545
        %v1860 = vmax.f32 %v1858, %v1547
        %v1861 = vmax.f32 %v1859, %v1550
        %v1862 = vmax.f32 %v1860, %v1552
        %v1863 = vmax.f32 %v1861, %v1555
        %v1864 = vmax.f32 %v1862, %v1557
        %v1865 = vmax.f32 %v1863, %v1560
        %v1866 = vmax.f32 %v1864, %v1562
        %v1867 = vmax.f32 %v1865, %v1565
        %v1868 = vmax.f32 %v1866, %v1567
        %v1869 = vmax.f32 %v1867, %v1570
        %v1870 = vmax.f32 %v1868, %v1572
        %v1871 = vmax.f32 %v1869, %v1575
        %v1872 = vmax.f32 %v1870, %v1577
        %v1873 = vmax.f32 %v1871, %v1580
        %v1874 = vmax.f32 %v1872, %v1582
        %v1875 = vmax.f32 %v1873, %v1585
        %v1876 = vmax.f32 %v1874, %v1587
        %v1877 = vmax.f32 %v1875, %v1590
        %v1878 = vmax.f32 %v1876, %v1592
        %v1879 = vmax.f32 %v1877, %v1595
        %v1880 = vmax.f32 %v1878, %v1597
        %v1881 = vmax.f32 %v1879, %v1600
        %v1882 = vmax.f32 %v1880, %v1602
        %v1883 = vmax.f32 %v1881, %v1605
        %v1884 = vmax.f32 %v1882, %v1607
        %v1885 = vmax.f32 %v1883, %v1610
        %v1886 = vmax.f32 %v1884, %v1612
        %v1887 = vmax.f32 %v1885, %v1615
        %v1888 = vmax.f32 %v1886, %v1617
        %v1889 = vmax.f32 %v1887, %v1620
        %v1890 = vmax.f32 %v1888, %v1622
        %v1891 = vmax.f32 %v1889, %v1625
        %v1892 = vmax.f32 %v1890, %v1627
        %v1893 = vmax.f32 %v1891, %v1630
        %v1894 = vmax.f32 %v1892, %v1632
        %v1895 = vmax.f32 %v1893, %v1635
        %v1896 = vmax.f32 %v1894, %v1637
        %v1897 = vmax.f32 %v1895, %v1640
        %v1898 = vmax.f32 %v1896, %v1642
        %v1899 = vmax.f32 %v1897, %v1645
        %v1900 = vmax.f32 %v1898, %v1647
        %v1901 = vmax.f32 %v1899, %v1650
        %v1902 = vmax.f32 %v1900, %v1652
        %v1903 = vmax.f32 %v1901, %v1655
        %v1904 = vmax.f32 %v1902, %v1657
        %v1905 = vmax.f32 %v1903, %v1660
        %v1906 = vmax.f32 %v1904, %v1662
        %v1907 = vmax.f32 %v1905, %v1665
        %v1908 = vmax.f32 %v1906, %v1667
        %v1909 = vmax.f32 %v1907, %v1670
        %v1910 = vmax.f32 %v1908, %v1672
        %v1911 = vmax.f32 %v1909, %v1675
        %v1912 = vmax.f32 %v1910, %v1677
        %v1913 = vmax.f32 %v1911, %v1680
        %v1914 = vmax.f32 %v1912, %v1682
        %v1915 = vmax.f32 %v1913, %v1914
        %v1916 = vmax.f32 %v1694, %v1699
        %v1917 = vmax.f32 %v1696, %v1701
        %v1918 = vmax.f32 %v1916, %v1704
        %v1919 = vmax.f32 %v1917, %v1706
        %v1920 = vmax.f32 %v1918, %v1709
        %v1921 = vmax.f32 %v1919, %v1711
        %v1922 = vmax.f32 %v1920, %v1714
        %v1923 = vmax.f32 %v1921, %v1716
        %v1924 = vmax.f32 %v1922, %v1719
        %v1925 = vmax.f32 %v1923, %v1721
        %v1926 = vmax.f32 %v1924, %v1724
        %v1927 = vmax.f32 %v1925, %v1726
        %v1928 = vmax.f32 %v1926, %v1729
        %v1929 = vmax.f32 %v1927, %v1731
        %v1930 = vmax.f32 %v1928, %v1734
        %v1931 = vmax.f32 %v1929, %v1736
        %v1932 = vmax.f32 %v1930, %v1739
        %v1933 = vmax.f32 %v1931, %v1741
        %v1934 = vmax.f32 %v1932, %v1744
        %v1935 = vmax.f32 %v1933, %v1746
        %v1936 = vmax.f32 %v1934, %v1749
        %v1937 = vmax.f32 %v1935, %v1751
        %v1938 = vmax.f32 %v1936, %v1754
        %v1939 = vmax.f32 %v1937, %v1756
        %v1940 = vmax.f32 %v1938, %v1759
        %v1941 = vmax.f32 %v1939, %v1761
        %v1942 = vmax.f32 %v1940, %v1764
        %v1943 = vmax.f32 %v1941, %v1766
        %v1944 = vmax.f32 %v1942, %v1769
        %v1945 = vmax.f32 %v1943, %v1771
        %v1946 = vmax.f32 %v1944, %v1774
        %v1947 = vmax.f32 %v1945, %v1776
        %v1948 = vmax.f32 %v1946, %v1779
        %v1949 = vmax.f32 %v1947, %v1781
        %v1950 = vmax.f32 %v1948, %v1784
        %v1951 = vmax.f32 %v1949, %v1786
        %v1952 = vmax.f32 %v1950, %v1789
        %v1953 = vmax.f32 %v1951, %v1791
        %v1954 = vmax.f32 %v1952, %v1794
        %v1955 = vmax.f32 %v1953, %v1796
        %v1956 = vmax.f32 %v1954, %v1799
        %v1957 = vmax.f32 %v1955, %v1801
        %v1958 = vmax.f32 %v1956, %v1804
        %v1959 = vmax.f32 %v1957, %v1806
        %v1960 = vmax.f32 %v1958, %v1809
        %v1961 = vmax.f32 %v1959, %v1811
        %v1962 = vmax.f32 %v1960, %v1814
        %v1963 = vmax.f32 %v1961, %v1816
        %v1964 = vmax.f32 %v1962, %v1819
        %v1965 = vmax.f32 %v1963, %v1821
        %v1966 = vmax.f32 %v1964, %v1824
        %v1967 = vmax.f32 %v1965, %v1826
        %v1968 = vmax.f32 %v1966, %v1829
        %v1969 = vmax.f32 %v1967, %v1831
        %v1970 = vmax.f32 %v1968, %v1834
        %v1971 = vmax.f32 %v1969, %v1836
        %v1972 = vmax.f32 %v1970, %v1839
        %v1973 = vmax.f32 %v1971, %v1841
        %v1974 = vmax.f32 %v1972, %v1844
        %v1975 = vmax.f32 %v1973, %v1846
        %v1976 = vmax.f32 %v1974, %v1849
        %v1977 = vmax.f32 %v1975, %v1851
        %v1978 = vmax.f32 %v1976, %v1977
        %v1979 = vld [vmem:[#allocation2] sm:$0xff]
        %v1980 = vld [vmem:[#allocation2 + $0x8] sm:$0xff]
        %v1981 = vmax.f32 %v1979, %v1915
        %v1982 = vmax.f32 %v1980, %v1978
        %1983 = vst [vmem:[#allocation2] sm:$0xff] %v1981
        %1984 = vst [vmem:[#allocation2 + $0x8] sm:$0xff] %v1982
        %v1985 = vld [vmem:[#allocation5 + $0x8] sm:$0xff]
        %v1986 = vld [vmem:[#allocation5 + $0x28] sm:$0xff]
        %v1987 = vld [vmem:[#allocation5 + $0x48] sm:$0xff]
        %v1988 = vld [vmem:[#allocation5 + $0x68] sm:$0xff]
        %v1989 = vld [vmem:[#allocation5 + $0x88] sm:$0xff]
        %v1990 = vld [vmem:[#allocation5 + $0xa8] sm:$0xff]
        %v1991 = vld [vmem:[#allocation5 + $0xc8] sm:$0xff]
        %v1992 = vld [vmem:[#allocation5 + $0xe8] sm:$0xff]
        %v1993 = vld [vmem:[#allocation5 + $0x108] sm:$0xff]
        %v1994 = vld [vmem:[#allocation5 + $0x128] sm:$0xff]
        %v1995 = vld [vmem:[#allocation5 + $0x148] sm:$0xff]
        %v1996 = vld [vmem:[#allocation5 + $0x168] sm:$0xff]
        %v1997 = vld [vmem:[#allocation5 + $0x188] sm:$0xff]
        %v1998 = vld [vmem:[#allocation5 + $0x1a8] sm:$0xff]
        %v1999 = vld [vmem:[#allocation5 + $0x1c8] sm:$0xff]
        %v2000 = vld [vmem:[#allocation5 + $0x1e8] sm:$0xff]
        %v2017 = vunpack.c.l.b16 %v1985
        %v2018 = vunpack.c.h.b16 %v1985
        %v2019 = vunpack.c.l.b16 %v1986
        %v2020 = vunpack.c.h.b16 %v1986
        %v2021 = vunpack.c.l.b16 %v1987
        %v2022 = vunpack.c.h.b16 %v1987
        %v2023 = vunpack.c.l.b16 %v1988
        %v2024 = vunpack.c.h.b16 %v1988
        %v2025 = vunpack.c.l.b16 %v1989
        %v2026 = vunpack.c.h.b16 %v1989
        %v2027 = vunpack.c.l.b16 %v1990
        %v2028 = vunpack.c.h.b16 %v1990
        %v2029 = vunpack.c.l.b16 %v1991
        %v2030 = vunpack.c.h.b16 %v1991
        %v2031 = vunpack.c.l.b16 %v1992
        %v2032 = vunpack.c.h.b16 %v1992
        %v2033 = vunpack.c.l.b16 %v1993
        %v2034 = vunpack.c.h.b16 %v1993
        %v2035 = vunpack.c.l.b16 %v1994
        %v2036 = vunpack.c.h.b16 %v1994
        %v2037 = vunpack.c.l.b16 %v1995
        %v2038 = vunpack.c.h.b16 %v1995
        %v2039 = vunpack.c.l.b16 %v1996
        %v2040 = vunpack.c.h.b16 %v1996
        %v2041 = vunpack.c.l.b16 %v1997
        %v2042 = vunpack.c.h.b16 %v1997
        %v2043 = vunpack.c.l.b16 %v1998
        %v2044 = vunpack.c.h.b16 %v1998
        %v2045 = vunpack.c.l.b16 %v1999
        %v2046 = vunpack.c.h.b16 %v1999
        %v2047 = vunpack.c.l.b16 %v2000
        %v2048 = vunpack.c.h.b16 %v2000
        %v2049 = vpack.c.b16 %v2019, %v2017
        %v2050 = vpack.c.b16 %v2020, %v2018
        %v2051 = vpack.c.b16 %v2023, %v2021
        %v2052 = vpack.c.b16 %v2024, %v2022
        %v2053 = vpack.c.b16 %v2027, %v2025
        %v2054 = vpack.c.b16 %v2028, %v2026
        %v2055 = vpack.c.b16 %v2031, %v2029
        %v2056 = vpack.c.b16 %v2032, %v2030
        %v2057 = vpack.c.b16 %v2035, %v2033
        %v2058 = vpack.c.b16 %v2036, %v2034
        %v2059 = vpack.c.b16 %v2039, %v2037
        %v2060 = vpack.c.b16 %v2040, %v2038
        %v2061 = vpack.c.b16 %v2043, %v2041
        %v2062 = vpack.c.b16 %v2044, %v2042
        %v2063 = vpack.c.b16 %v2047, %v2045
        %v2064 = vpack.c.b16 %v2048, %v2046
        %2081 = vmatpush.bf16.msra.mxu0 %v2063
        %2082 = vmatpush.bf16.msra.mxu0 %v2061
        %2083 = vmatpush.bf16.msra.mxu0 %v2059
        %2084 = vmatpush.bf16.msra.mxu0 %v2057
        %2085 = vmatpush.bf16.msra.mxu0 %v2055
        %2086 = vmatpush.bf16.msra.mxu0 %v2053
        %2087 = vmatpush.bf16.msra.mxu0 %v2051
        %2088 = vmatpush.bf16.msra.mxu0 %v2049
        %2089 = vmatmul.bf16.gmra.mxu0 %v1387
        %v2090 = vpop.f32.mrf.mxu0
        %v2091 = vadd.f32 0.0, %v2090
        %v2092 = vpop.f32.mrf.mxu0
        %v2093 = vadd.f32 0.0, %v2092
        %2094 = vmatmul.bf16.gmra.mxu0 %v1388
        %v2095 = vpop.f32.mrf.mxu0
        %v2096 = vadd.f32 0.0, %v2095
        %v2097 = vpop.f32.mrf.mxu0
        %v2098 = vadd.f32 0.0, %v2097
        %2099 = vmatmul.bf16.gmra.mxu0 %v1389
        %v2100 = vpop.f32.mrf.mxu0
        %v2101 = vadd.f32 0.0, %v2100
        %v2102 = vpop.f32.mrf.mxu0
        %v2103 = vadd.f32 0.0, %v2102
        %2104 = vmatmul.bf16.gmra.mxu0 %v1390
        %v2105 = vpop.f32.mrf.mxu0
        %v2106 = vadd.f32 0.0, %v2105
        %v2107 = vpop.f32.mrf.mxu0
        %v2108 = vadd.f32 0.0, %v2107
        %2109 = vmatmul.bf16.gmra.mxu0 %v1391
        %v2110 = vpop.f32.mrf.mxu0
        %v2111 = vadd.f32 0.0, %v2110
        %v2112 = vpop.f32.mrf.mxu0
        %v2113 = vadd.f32 0.0, %v2112
        %2114 = vmatmul.bf16.gmra.mxu0 %v1392
        %v2115 = vpop.f32.mrf.mxu0
        %v2116 = vadd.f32 0.0, %v2115
        %v2117 = vpop.f32.mrf.mxu0
        %v2118 = vadd.f32 0.0, %v2117
        %2119 = vmatmul.bf16.gmra.mxu0 %v1393
        %v2120 = vpop.f32.mrf.mxu0
        %v2121 = vadd.f32 0.0, %v2120
        %v2122 = vpop.f32.mrf.mxu0
        %v2123 = vadd.f32 0.0, %v2122
        %2124 = vmatmul.bf16.gmra.mxu0 %v1394
        %v2125 = vpop.f32.mrf.mxu0
        %v2126 = vadd.f32 0.0, %v2125
        %v2127 = vpop.f32.mrf.mxu0
        %v2128 = vadd.f32 0.0, %v2127
        %2129 = vmatmul.bf16.gmra.mxu0 %v1395
        %v2130 = vpop.f32.mrf.mxu0
        %v2131 = vadd.f32 0.0, %v2130
        %v2132 = vpop.f32.mrf.mxu0
        %v2133 = vadd.f32 0.0, %v2132
        %2134 = vmatmul.bf16.gmra.mxu0 %v1396
        %v2135 = vpop.f32.mrf.mxu0
        %v2136 = vadd.f32 0.0, %v2135
        %v2137 = vpop.f32.mrf.mxu0
        %v2138 = vadd.f32 0.0, %v2137
        %2139 = vmatmul.bf16.gmra.mxu0 %v1397
        %v2140 = vpop.f32.mrf.mxu0
        %v2141 = vadd.f32 0.0, %v2140
        %v2142 = vpop.f32.mrf.mxu0
        %v2143 = vadd.f32 0.0, %v2142
        %2144 = vmatmul.bf16.gmra.mxu0 %v1398
        %v2145 = vpop.f32.mrf.mxu0
        %v2146 = vadd.f32 0.0, %v2145
        %v2147 = vpop.f32.mrf.mxu0
        %v2148 = vadd.f32 0.0, %v2147
        %2149 = vmatmul.bf16.gmra.mxu0 %v1399
        %v2150 = vpop.f32.mrf.mxu0
        %v2151 = vadd.f32 0.0, %v2150
        %v2152 = vpop.f32.mrf.mxu0
        %v2153 = vadd.f32 0.0, %v2152
        %2154 = vmatmul.bf16.gmra.mxu0 %v1400
        %v2155 = vpop.f32.mrf.mxu0
        %v2156 = vadd.f32 0.0, %v2155
        %v2157 = vpop.f32.mrf.mxu0
        %v2158 = vadd.f32 0.0, %v2157
        %2159 = vmatmul.bf16.gmra.mxu0 %v1401
        %v2160 = vpop.f32.mrf.mxu0
        %v2161 = vadd.f32 0.0, %v2160
        %v2162 = vpop.f32.mrf.mxu0
        %v2163 = vadd.f32 0.0, %v2162
        %2164 = vmatmul.bf16.gmra.mxu0 %v1402
        %v2165 = vpop.f32.mrf.mxu0
        %v2166 = vadd.f32 0.0, %v2165
        %v2167 = vpop.f32.mrf.mxu0
        %v2168 = vadd.f32 0.0, %v2167
        %2169 = vmatmul.bf16.gmra.mxu0 %v1403
        %v2170 = vpop.f32.mrf.mxu0
        %v2171 = vadd.f32 0.0, %v2170
        %v2172 = vpop.f32.mrf.mxu0
        %v2173 = vadd.f32 0.0, %v2172
        %2174 = vmatmul.bf16.gmra.mxu0 %v1404
        %v2175 = vpop.f32.mrf.mxu0
        %v2176 = vadd.f32 0.0, %v2175
        %v2177 = vpop.f32.mrf.mxu0
        %v2178 = vadd.f32 0.0, %v2177
        %2179 = vmatmul.bf16.gmra.mxu0 %v1405
        %v2180 = vpop.f32.mrf.mxu0
        %v2181 = vadd.f32 0.0, %v2180
        %v2182 = vpop.f32.mrf.mxu0
        %v2183 = vadd.f32 0.0, %v2182
        %2184 = vmatmul.bf16.gmra.mxu0 %v1406
        %v2185 = vpop.f32.mrf.mxu0
        %v2186 = vadd.f32 0.0, %v2185
        %v2187 = vpop.f32.mrf.mxu0
        %v2188 = vadd.f32 0.0, %v2187
        %2189 = vmatmul.bf16.gmra.mxu0 %v1407
        %v2190 = vpop.f32.mrf.mxu0
        %v2191 = vadd.f32 0.0, %v2190
        %v2192 = vpop.f32.mrf.mxu0
        %v2193 = vadd.f32 0.0, %v2192
        %2194 = vmatmul.bf16.gmra.mxu0 %v1408
        %v2195 = vpop.f32.mrf.mxu0
        %v2196 = vadd.f32 0.0, %v2195
        %v2197 = vpop.f32.mrf.mxu0
        %v2198 = vadd.f32 0.0, %v2197
        %2199 = vmatmul.bf16.gmra.mxu0 %v1409
        %v2200 = vpop.f32.mrf.mxu0
        %v2201 = vadd.f32 0.0, %v2200
        %v2202 = vpop.f32.mrf.mxu0
        %v2203 = vadd.f32 0.0, %v2202
        %2204 = vmatmul.bf16.gmra.mxu0 %v1410
        %v2205 = vpop.f32.mrf.mxu0
        %v2206 = vadd.f32 0.0, %v2205
        %v2207 = vpop.f32.mrf.mxu0
        %v2208 = vadd.f32 0.0, %v2207
        %2209 = vmatmul.bf16.gmra.mxu0 %v1411
        %v2210 = vpop.f32.mrf.mxu0
        %v2211 = vadd.f32 0.0, %v2210
        %v2212 = vpop.f32.mrf.mxu0
        %v2213 = vadd.f32 0.0, %v2212
        %2214 = vmatmul.bf16.gmra.mxu0 %v1412
        %v2215 = vpop.f32.mrf.mxu0
        %v2216 = vadd.f32 0.0, %v2215
        %v2217 = vpop.f32.mrf.mxu0
        %v2218 = vadd.f32 0.0, %v2217
        %2219 = vmatmul.bf16.gmra.mxu0 %v1413
        %v2220 = vpop.f32.mrf.mxu0
        %v2221 = vadd.f32 0.0, %v2220
        %v2222 = vpop.f32.mrf.mxu0
        %v2223 = vadd.f32 0.0, %v2222
        %2224 = vmatmul.bf16.gmra.mxu0 %v1414
        %v2225 = vpop.f32.mrf.mxu0
        %v2226 = vadd.f32 0.0, %v2225
        %v2227 = vpop.f32.mrf.mxu0
        %v2228 = vadd.f32 0.0, %v2227
        %2229 = vmatmul.bf16.gmra.mxu0 %v1415
        %v2230 = vpop.f32.mrf.mxu0
        %v2231 = vadd.f32 0.0, %v2230
        %v2232 = vpop.f32.mrf.mxu0
        %v2233 = vadd.f32 0.0, %v2232
        %2234 = vmatmul.bf16.gmra.mxu0 %v1416
        %v2235 = vpop.f32.mrf.mxu0
        %v2236 = vadd.f32 0.0, %v2235
        %v2237 = vpop.f32.mrf.mxu0
        %v2238 = vadd.f32 0.0, %v2237
        %2239 = vmatmul.bf16.gmra.mxu0 %v1417
        %v2240 = vpop.f32.mrf.mxu0
        %v2241 = vadd.f32 0.0, %v2240
        %v2242 = vpop.f32.mrf.mxu0
        %v2243 = vadd.f32 0.0, %v2242
        %2244 = vmatmul.bf16.gmra.mxu0 %v1418
        %v2245 = vpop.f32.mrf.mxu0
        %v2246 = vadd.f32 0.0, %v2245
        %v2247 = vpop.f32.mrf.mxu0
        %v2248 = vadd.f32 0.0, %v2247
        %2249 = vdwg.mxu0
        %2250 = vmatpush.bf16.msra.mxu0 %v2064
        %2251 = vmatpush.bf16.msra.mxu0 %v2062
        %2252 = vmatpush.bf16.msra.mxu0 %v2060
        %2253 = vmatpush.bf16.msra.mxu0 %v2058
        %2254 = vmatpush.bf16.msra.mxu0 %v2056
        %2255 = vmatpush.bf16.msra.mxu0 %v2054
        %2256 = vmatpush.bf16.msra.mxu0 %v2052
        %2257 = vmatpush.bf16.msra.mxu0 %v2050
        %2258 = vmatmul.bf16.gmra.mxu0 %v1387
        %v2259 = vpop.f32.mrf.mxu0
        %v2260 = vadd.f32 0.0, %v2259
        %v2261 = vpop.f32.mrf.mxu0
        %v2262 = vadd.f32 0.0, %v2261
        %2263 = vmatmul.bf16.gmra.mxu0 %v1388
        %v2264 = vpop.f32.mrf.mxu0
        %v2265 = vadd.f32 0.0, %v2264
        %v2266 = vpop.f32.mrf.mxu0
        %v2267 = vadd.f32 0.0, %v2266
        %2268 = vmatmul.bf16.gmra.mxu0 %v1389
        %v2269 = vpop.f32.mrf.mxu0
        %v2270 = vadd.f32 0.0, %v2269
        %v2271 = vpop.f32.mrf.mxu0
        %v2272 = vadd.f32 0.0, %v2271
        %2273 = vmatmul.bf16.gmra.mxu0 %v1390
        %v2274 = vpop.f32.mrf.mxu0
        %v2275 = vadd.f32 0.0, %v2274
        %v2276 = vpop.f32.mrf.mxu0
        %v2277 = vadd.f32 0.0, %v2276
        %2278 = vmatmul.bf16.gmra.mxu0 %v1391
        %v2279 = vpop.f32.mrf.mxu0
        %v2280 = vadd.f32 0.0, %v2279
        %v2281 = vpop.f32.mrf.mxu0
        %v2282 = vadd.f32 0.0, %v2281
        %2283 = vmatmul.bf16.gmra.mxu0 %v1392
        %v2284 = vpop.f32.mrf.mxu0
        %v2285 = vadd.f32 0.0, %v2284
        %v2286 = vpop.f32.mrf.mxu0
        %v2287 = vadd.f32 0.0, %v2286
        %2288 = vmatmul.bf16.gmra.mxu0 %v1393
        %v2289 = vpop.f32.mrf.mxu0
        %v2290 = vadd.f32 0.0, %v2289
        %v2291 = vpop.f32.mrf.mxu0
        %v2292 = vadd.f32 0.0, %v2291
        %2293 = vmatmul.bf16.gmra.mxu0 %v1394
        %v2294 = vpop.f32.mrf.mxu0
        %v2295 = vadd.f32 0.0, %v2294
        %v2296 = vpop.f32.mrf.mxu0
        %v2297 = vadd.f32 0.0, %v2296
        %2298 = vmatmul.bf16.gmra.mxu0 %v1395
        %v2299 = vpop.f32.mrf.mxu0
        %v2300 = vadd.f32 0.0, %v2299
        %v2301 = vpop.f32.mrf.mxu0
        %v2302 = vadd.f32 0.0, %v2301
        %2303 = vmatmul.bf16.gmra.mxu0 %v1396
        %v2304 = vpop.f32.mrf.mxu0
        %v2305 = vadd.f32 0.0, %v2304
        %v2306 = vpop.f32.mrf.mxu0
        %v2307 = vadd.f32 0.0, %v2306
        %2308 = vmatmul.bf16.gmra.mxu0 %v1397
        %v2309 = vpop.f32.mrf.mxu0
        %v2310 = vadd.f32 0.0, %v2309
        %v2311 = vpop.f32.mrf.mxu0
        %v2312 = vadd.f32 0.0, %v2311
        %2313 = vmatmul.bf16.gmra.mxu0 %v1398
        %v2314 = vpop.f32.mrf.mxu0
        %v2315 = vadd.f32 0.0, %v2314
        %v2316 = vpop.f32.mrf.mxu0
        %v2317 = vadd.f32 0.0, %v2316
        %2318 = vmatmul.bf16.gmra.mxu0 %v1399
        %v2319 = vpop.f32.mrf.mxu0
        %v2320 = vadd.f32 0.0, %v2319
        %v2321 = vpop.f32.mrf.mxu0
        %v2322 = vadd.f32 0.0, %v2321
        %2323 = vmatmul.bf16.gmra.mxu0 %v1400
        %v2324 = vpop.f32.mrf.mxu0
        %v2325 = vadd.f32 0.0, %v2324
        %v2326 = vpop.f32.mrf.mxu0
        %v2327 = vadd.f32 0.0, %v2326
        %2328 = vmatmul.bf16.gmra.mxu0 %v1401
        %v2329 = vpop.f32.mrf.mxu0
        %v2330 = vadd.f32 0.0, %v2329
        %v2331 = vpop.f32.mrf.mxu0
        %v2332 = vadd.f32 0.0, %v2331
        %2333 = vmatmul.bf16.gmra.mxu0 %v1402
        %v2334 = vpop.f32.mrf.mxu0
        %v2335 = vadd.f32 0.0, %v2334
        %v2336 = vpop.f32.mrf.mxu0
        %v2337 = vadd.f32 0.0, %v2336
        %2338 = vmatmul.bf16.gmra.mxu0 %v1403
        %v2339 = vpop.f32.mrf.mxu0
        %v2340 = vadd.f32 0.0, %v2339
        %v2341 = vpop.f32.mrf.mxu0
        %v2342 = vadd.f32 0.0, %v2341
        %2343 = vmatmul.bf16.gmra.mxu0 %v1404
        %v2344 = vpop.f32.mrf.mxu0
        %v2345 = vadd.f32 0.0, %v2344
        %v2346 = vpop.f32.mrf.mxu0
        %v2347 = vadd.f32 0.0, %v2346
        %2348 = vmatmul.bf16.gmra.mxu0 %v1405
        %v2349 = vpop.f32.mrf.mxu0
        %v2350 = vadd.f32 0.0, %v2349
        %v2351 = vpop.f32.mrf.mxu0
        %v2352 = vadd.f32 0.0, %v2351
        %2353 = vmatmul.bf16.gmra.mxu0 %v1406
        %v2354 = vpop.f32.mrf.mxu0
        %v2355 = vadd.f32 0.0, %v2354
        %v2356 = vpop.f32.mrf.mxu0
        %v2357 = vadd.f32 0.0, %v2356
        %2358 = vmatmul.bf16.gmra.mxu0 %v1407
        %v2359 = vpop.f32.mrf.mxu0
        %v2360 = vadd.f32 0.0, %v2359
        %v2361 = vpop.f32.mrf.mxu0
        %v2362 = vadd.f32 0.0, %v2361
        %2363 = vmatmul.bf16.gmra.mxu0 %v1408
        %v2364 = vpop.f32.mrf.mxu0
        %v2365 = vadd.f32 0.0, %v2364
        %v2366 = vpop.f32.mrf.mxu0
        %v2367 = vadd.f32 0.0, %v2366
        %2368 = vmatmul.bf16.gmra.mxu0 %v1409
        %v2369 = vpop.f32.mrf.mxu0
        %v2370 = vadd.f32 0.0, %v2369
        %v2371 = vpop.f32.mrf.mxu0
        %v2372 = vadd.f32 0.0, %v2371
        %2373 = vmatmul.bf16.gmra.mxu0 %v1410
        %v2374 = vpop.f32.mrf.mxu0
        %v2375 = vadd.f32 0.0, %v2374
        %v2376 = vpop.f32.mrf.mxu0
        %v2377 = vadd.f32 0.0, %v2376
        %2378 = vmatmul.bf16.gmra.mxu0 %v1411
        %v2379 = vpop.f32.mrf.mxu0
        %v2380 = vadd.f32 0.0, %v2379
        %v2381 = vpop.f32.mrf.mxu0
        %v2382 = vadd.f32 0.0, %v2381
        %2383 = vmatmul.bf16.gmra.mxu0 %v1412
        %v2384 = vpop.f32.mrf.mxu0
        %v2385 = vadd.f32 0.0, %v2384
        %v2386 = vpop.f32.mrf.mxu0
        %v2387 = vadd.f32 0.0, %v2386
        %2388 = vmatmul.bf16.gmra.mxu0 %v1413
        %v2389 = vpop.f32.mrf.mxu0
        %v2390 = vadd.f32 0.0, %v2389
        %v2391 = vpop.f32.mrf.mxu0
        %v2392 = vadd.f32 0.0, %v2391
        %2393 = vmatmul.bf16.gmra.mxu0 %v1414
        %v2394 = vpop.f32.mrf.mxu0
        %v2395 = vadd.f32 0.0, %v2394
        %v2396 = vpop.f32.mrf.mxu0
        %v2397 = vadd.f32 0.0, %v2396
        %2398 = vmatmul.bf16.gmra.mxu0 %v1415
        %v2399 = vpop.f32.mrf.mxu0
        %v2400 = vadd.f32 0.0, %v2399
        %v2401 = vpop.f32.mrf.mxu0
        %v2402 = vadd.f32 0.0, %v2401
        %2403 = vmatmul.bf16.gmra.mxu0 %v1416
        %v2404 = vpop.f32.mrf.mxu0
        %v2405 = vadd.f32 0.0, %v2404
        %v2406 = vpop.f32.mrf.mxu0
        %v2407 = vadd.f32 0.0, %v2406
        %2408 = vmatmul.bf16.gmra.mxu0 %v1417
        %v2409 = vpop.f32.mrf.mxu0
        %v2410 = vadd.f32 0.0, %v2409
        %v2411 = vpop.f32.mrf.mxu0
        %v2412 = vadd.f32 0.0, %v2411
        %2413 = vmatmul.bf16.gmra.mxu0 %v1418
        %v2414 = vpop.f32.mrf.mxu0
        %v2415 = vadd.f32 0.0, %v2414
        %v2416 = vpop.f32.mrf.mxu0
        %v2417 = vadd.f32 0.0, %v2416
        %2418 = vdwg.mxu0
        %v2419 = vmax.f32 %v2091, %v2096
        %v2420 = vmax.f32 %v2093, %v2098
        %v2421 = vmax.f32 %v2419, %v2101
        %v2422 = vmax.f32 %v2420, %v2103
        %v2423 = vmax.f32 %v2421, %v2106
        %v2424 = vmax.f32 %v2422, %v2108
        %v2425 = vmax.f32 %v2423, %v2111
        %v2426 = vmax.f32 %v2424, %v2113
        %v2427 = vmax.f32 %v2425, %v2116
        %v2428 = vmax.f32 %v2426, %v2118
        %v2429 = vmax.f32 %v2427, %v2121
        %v2430 = vmax.f32 %v2428, %v2123
        %v2431 = vmax.f32 %v2429, %v2126
        %v2432 = vmax.f32 %v2430, %v2128
        %v2433 = vmax.f32 %v2431, %v2131
        %v2434 = vmax.f32 %v2432, %v2133
        %v2435 = vmax.f32 %v2433, %v2136
        %v2436 = vmax.f32 %v2434, %v2138
        %v2437 = vmax.f32 %v2435, %v2141
        %v2438 = vmax.f32 %v2436, %v2143
        %v2439 = vmax.f32 %v2437, %v2146
        %v2440 = vmax.f32 %v2438, %v2148
        %v2441 = vmax.f32 %v2439, %v2151
        %v2442 = vmax.f32 %v2440, %v2153
        %v2443 = vmax.f32 %v2441, %v2156
        %v2444 = vmax.f32 %v2442, %v2158
        %v2445 = vmax.f32 %v2443, %v2161
        %v2446 = vmax.f32 %v2444, %v2163
        %v2447 = vmax.f32 %v2445, %v2166
        %v2448 = vmax.f32 %v2446, %v2168
        %v2449 = vmax.f32 %v2447, %v2171
        %v2450 = vmax.f32 %v2448, %v2173
        %v2451 = vmax.f32 %v2449, %v2176
        %v2452 = vmax.f32 %v2450, %v2178
        %v2453 = vmax.f32 %v2451, %v2181
        %v2454 = vmax.f32 %v2452, %v2183
        %v2455 = vmax.f32 %v2453, %v2186
        %v2456 = vmax.f32 %v2454, %v2188
        %v2457 = vmax.f32 %v2455, %v2191
        %v2458 = vmax.f32 %v2456, %v2193
        %v2459 = vmax.f32 %v2457, %v2196
        %v2460 = vmax.f32 %v2458, %v2198
        %v2461 = vmax.f32 %v2459, %v2201
        %v2462 = vmax.f32 %v2460, %v2203
        %v2463 = vmax.f32 %v2461, %v2206
        %v2464 = vmax.f32 %v2462, %v2208
        %v2465 = vmax.f32 %v2463, %v2211
        %v2466 = vmax.f32 %v2464, %v2213
        %v2467 = vmax.f32 %v2465, %v2216
        %v2468 = vmax.f32 %v2466, %v2218
        %v2469 = vmax.f32 %v2467, %v2221
        %v2470 = vmax.f32 %v2468, %v2223
        %v2471 = vmax.f32 %v2469, %v2226
        %v2472 = vmax.f32 %v2470, %v2228
        %v2473 = vmax.f32 %v2471, %v2231
        %v2474 = vmax.f32 %v2472, %v2233
        %v2475 = vmax.f32 %v2473, %v2236
        %v2476 = vmax.f32 %v2474, %v2238
        %v2477 = vmax.f32 %v2475, %v2241
        %v2478 = vmax.f32 %v2476, %v2243
        %v2479 = vmax.f32 %v2477, %v2246
        %v2480 = vmax.f32 %v2478, %v2248
        %v2481 = vmax.f32 %v2479, %v2480
        %v2482 = vmax.f32 %v2260, %v2265
        %v2483 = vmax.f32 %v2262, %v2267
        %v2484 = vmax.f32 %v2482, %v2270
        %v2485 = vmax.f32 %v2483, %v2272
        %v2486 = vmax.f32 %v2484, %v2275
        %v2487 = vmax.f32 %v2485, %v2277
        %v2488 = vmax.f32 %v2486, %v2280
        %v2489 = vmax.f32 %v2487, %v2282
        %v2490 = vmax.f32 %v2488, %v2285
        %v2491 = vmax.f32 %v2489, %v2287
        %v2492 = vmax.f32 %v2490, %v2290
        %v2493 = vmax.f32 %v2491, %v2292
        %v2494 = vmax.f32 %v2492, %v2295
        %v2495 = vmax.f32 %v2493, %v2297
        %v2496 = vmax.f32 %v2494, %v2300
        %v2497 = vmax.f32 %v2495, %v2302
        %v2498 = vmax.f32 %v2496, %v2305
        %v2499 = vmax.f32 %v2497, %v2307
        %v2500 = vmax.f32 %v2498, %v2310
        %v2501 = vmax.f32 %v2499, %v2312
        %v2502 = vmax.f32 %v2500, %v2315
        %v2503 = vmax.f32 %v2501, %v2317
        %v2504 = vmax.f32 %v2502, %v2320
        %v2505 = vmax.f32 %v2503, %v2322
        %v2506 = vmax.f32 %v2504, %v2325
        %v2507 = vmax.f32 %v2505, %v2327
        %v2508 = vmax.f32 %v2506, %v2330
        %v2509 = vmax.f32 %v2507, %v2332
        %v2510 = vmax.f32 %v2508, %v2335
        %v2511 = vmax.f32 %v2509, %v2337
        %v2512 = vmax.f32 %v2510, %v2340
        %v2513 = vmax.f32 %v2511, %v2342
        %v2514 = vmax.f32 %v2512, %v2345
        %v2515 = vmax.f32 %v2513, %v2347
        %v2516 = vmax.f32 %v2514, %v2350
        %v2517 = vmax.f32 %v2515, %v2352
        %v2518 = vmax.f32 %v2516, %v2355
        %v2519 = vmax.f32 %v2517, %v2357
        %v2520 = vmax.f32 %v2518, %v2360
        %v2521 = vmax.f32 %v2519, %v2362
        %v2522 = vmax.f32 %v2520, %v2365
        %v2523 = vmax.f32 %v2521, %v2367
        %v2524 = vmax.f32 %v2522, %v2370
        %v2525 = vmax.f32 %v2523, %v2372
        %v2526 = vmax.f32 %v2524, %v2375
        %v2527 = vmax.f32 %v2525, %v2377
        %v2528 = vmax.f32 %v2526, %v2380
        %v2529 = vmax.f32 %v2527, %v2382
        %v2530 = vmax.f32 %v2528, %v2385
        %v2531 = vmax.f32 %v2529, %v2387
        %v2532 = vmax.f32 %v2530, %v2390
        %v2533 = vmax.f32 %v2531, %v2392
        %v2534 = vmax.f32 %v2532, %v2395
        %v2535 = vmax.f32 %v2533, %v2397
        %v2536 = vmax.f32 %v2534, %v2400
        %v2537 = vmax.f32 %v2535, %v2402
        %v2538 = vmax.f32 %v2536, %v2405
        %v2539 = vmax.f32 %v2537, %v2407
        %v2540 = vmax.f32 %v2538, %v2410
        %v2541 = vmax.f32 %v2539, %v2412
        %v2542 = vmax.f32 %v2540, %v2415
        %v2543 = vmax.f32 %v2541, %v2417
        %v2544 = vmax.f32 %v2542, %v2543
        %v2545 = vld [vmem:[#allocation2 + $0x10] sm:$0xff]
        %v2546 = vld [vmem:[#allocation2 + $0x18] sm:$0xff]
        %v2547 = vmax.f32 %v2545, %v2481
        %v2548 = vmax.f32 %v2546, %v2544
        %2549 = vst [vmem:[#allocation2 + $0x10] sm:$0xff] %v2547
        %2550 = vst [vmem:[#allocation2 + $0x18] sm:$0xff] %v2548
        %v2551 = vld [vmem:[#allocation5 + $0x10] sm:$0xff]
        %v2552 = vld [vmem:[#allocation5 + $0x30] sm:$0xff]
        %v2553 = vld [vmem:[#allocation5 + $0x50] sm:$0xff]
        %v2554 = vld [vmem:[#allocation5 + $0x70] sm:$0xff]
        %v2555 = vld [vmem:[#allocation5 + $0x90] sm:$0xff]
        %v2556 = vld [vmem:[#allocation5 + $0xb0] sm:$0xff]
        %v2557 = vld [vmem:[#allocation5 + $0xd0] sm:$0xff]
        %v2558 = vld [vmem:[#allocation5 + $0xf0] sm:$0xff]
        %v2559 = vld [vmem:[#allocation5 + $0x110] sm:$0xff]
        %v2560 = vld [vmem:[#allocation5 + $0x130] sm:$0xff]
        %v2561 = vld [vmem:[#allocation5 + $0x150] sm:$0xff]
        %v2562 = vld [vmem:[#allocation5 + $0x170] sm:$0xff]
        %v2563 = vld [vmem:[#allocation5 + $0x190] sm:$0xff]
        %v2564 = vld [vmem:[#allocation5 + $0x1b0] sm:$0xff]
        %v2565 = vld [vmem:[#allocation5 + $0x1d0] sm:$0xff]
        %v2566 = vld [vmem:[#allocation5 + $0x1f0] sm:$0xff]
        %v2583 = vunpack.c.l.b16 %v2551
        %v2584 = vunpack.c.h.b16 %v2551
        %v2585 = vunpack.c.l.b16 %v2552
        %v2586 = vunpack.c.h.b16 %v2552
        %v2587 = vunpack.c.l.b16 %v2553
        %v2588 = vunpack.c.h.b16 %v2553
        %v2589 = vunpack.c.l.b16 %v2554
        %v2590 = vunpack.c.h.b16 %v2554
        %v2591 = vunpack.c.l.b16 %v2555
        %v2592 = vunpack.c.h.b16 %v2555
        %v2593 = vunpack.c.l.b16 %v2556
        %v2594 = vunpack.c.h.b16 %v2556
        %v2595 = vunpack.c.l.b16 %v2557
        %v2596 = vunpack.c.h.b16 %v2557
        %v2597 = vunpack.c.l.b16 %v2558
        %v2598 = vunpack.c.h.b16 %v2558
        %v2599 = vunpack.c.l.b16 %v2559
        %v2600 = vunpack.c.h.b16 %v2559
        %v2601 = vunpack.c.l.b16 %v2560
        %v2602 = vunpack.c.h.b16 %v2560
        %v2603 = vunpack.c.l.b16 %v2561
        %v2604 = vunpack.c.h.b16 %v2561
        %v2605 = vunpack.c.l.b16 %v2562
        %v2606 = vunpack.c.h.b16 %v2562
        %v2607 = vunpack.c.l.b16 %v2563
        %v2608 = vunpack.c.h.b16 %v2563
        %v2609 = vunpack.c.l.b16 %v2564
        %v2610 = vunpack.c.h.b16 %v2564
        %v2611 = vunpack.c.l.b16 %v2565
        %v2612 = vunpack.c.h.b16 %v2565
        %v2613 = vunpack.c.l.b16 %v2566
        %v2614 = vunpack.c.h.b16 %v2566
        %v2615 = vpack.c.b16 %v2585, %v2583
        %v2616 = vpack.c.b16 %v2586, %v2584
        %v2617 = vpack.c.b16 %v2589, %v2587
        %v2618 = vpack.c.b16 %v2590, %v2588
        %v2619 = vpack.c.b16 %v2593, %v2591
        %v2620 = vpack.c.b16 %v2594, %v2592
        %v2621 = vpack.c.b16 %v2597, %v2595
        %v2622 = vpack.c.b16 %v2598, %v2596
        %v2623 = vpack.c.b16 %v2601, %v2599
        %v2624 = vpack.c.b16 %v2602, %v2600
        %v2625 = vpack.c.b16 %v2605, %v2603
        %v2626 = vpack.c.b16 %v2606, %v2604
        %v2627 = vpack.c.b16 %v2609, %v2607
        %v2628 = vpack.c.b16 %v2610, %v2608
        %v2629 = vpack.c.b16 %v2613, %v2611
        %v2630 = vpack.c.b16 %v2614, %v2612
        %2647 = vmatpush.bf16.msra.mxu0 %v2629
        %2648 = vmatpush.bf16.msra.mxu0 %v2627
        %2649 = vmatpush.bf16.msra.mxu0 %v2625
        %2650 = vmatpush.bf16.msra.mxu0 %v2623
        %2651 = vmatpush.bf16.msra.mxu0 %v2621
        %2652 = vmatpush.bf16.msra.mxu0 %v2619
        %2653 = vmatpush.bf16.msra.mxu0 %v2617
        %2654 = vmatpush.bf16.msra.mxu0 %v2615
        %2655 = vmatmul.bf16.gmra.mxu0 %v1387
        %v2656 = vpop.f32.mrf.mxu0
        %v2657 = vadd.f32 0.0, %v2656
        %v2658 = vpop.f32.mrf.mxu0
        %v2659 = vadd.f32 0.0, %v2658
        %2660 = vmatmul.bf16.gmra.mxu0 %v1388
        %v2661 = vpop.f32.mrf.mxu0
        %v2662 = vadd.f32 0.0, %v2661
        %v2663 = vpop.f32.mrf.mxu0
        %v2664 = vadd.f32 0.0, %v2663
        %2665 = vmatmul.bf16.gmra.mxu0 %v1389
        %v2666 = vpop.f32.mrf.mxu0
        %v2667 = vadd.f32 0.0, %v2666
        %v2668 = vpop.f32.mrf.mxu0
        %v2669 = vadd.f32 0.0, %v2668
        %2670 = vmatmul.bf16.gmra.mxu0 %v1390
        %v2671 = vpop.f32.mrf.mxu0
        %v2672 = vadd.f32 0.0, %v2671
        %v2673 = vpop.f32.mrf.mxu0
        %v2674 = vadd.f32 0.0, %v2673
        %2675 = vmatmul.bf16.gmra.mxu0 %v1391
        %v2676 = vpop.f32.mrf.mxu0
        %v2677 = vadd.f32 0.0, %v2676
        %v2678 = vpop.f32.mrf.mxu0
        %v2679 = vadd.f32 0.0, %v2678
        %2680 = vmatmul.bf16.gmra.mxu0 %v1392
        %v2681 = vpop.f32.mrf.mxu0
        %v2682 = vadd.f32 0.0, %v2681
        %v2683 = vpop.f32.mrf.mxu0
        %v2684 = vadd.f32 0.0, %v2683
        %2685 = vmatmul.bf16.gmra.mxu0 %v1393
        %v2686 = vpop.f32.mrf.mxu0
        %v2687 = vadd.f32 0.0, %v2686
        %v2688 = vpop.f32.mrf.mxu0
        %v2689 = vadd.f32 0.0, %v2688
        %2690 = vmatmul.bf16.gmra.mxu0 %v1394
        %v2691 = vpop.f32.mrf.mxu0
        %v2692 = vadd.f32 0.0, %v2691
        %v2693 = vpop.f32.mrf.mxu0
        %v2694 = vadd.f32 0.0, %v2693
        %2695 = vmatmul.bf16.gmra.mxu0 %v1395
        %v2696 = vpop.f32.mrf.mxu0
        %v2697 = vadd.f32 0.0, %v2696
        %v2698 = vpop.f32.mrf.mxu0
        %v2699 = vadd.f32 0.0, %v2698
        %2700 = vmatmul.bf16.gmra.mxu0 %v1396
        %v2701 = vpop.f32.mrf.mxu0
        %v2702 = vadd.f32 0.0, %v2701
        %v2703 = vpop.f32.mrf.mxu0
        %v2704 = vadd.f32 0.0, %v2703
        %2705 = vmatmul.bf16.gmra.mxu0 %v1397
        %v2706 = vpop.f32.mrf.mxu0
        %v2707 = vadd.f32 0.0, %v2706
        %v2708 = vpop.f32.mrf.mxu0
        %v2709 = vadd.f32 0.0, %v2708
        %2710 = vmatmul.bf16.gmra.mxu0 %v1398
        %v2711 = vpop.f32.mrf.mxu0
        %v2712 = vadd.f32 0.0, %v2711
        %v2713 = vpop.f32.mrf.mxu0
        %v2714 = vadd.f32 0.0, %v2713
        %2715 = vmatmul.bf16.gmra.mxu0 %v1399
        %v2716 = vpop.f32.mrf.mxu0
        %v2717 = vadd.f32 0.0, %v2716
        %v2718 = vpop.f32.mrf.mxu0
        %v2719 = vadd.f32 0.0, %v2718
        %2720 = vmatmul.bf16.gmra.mxu0 %v1400
        %v2721 = vpop.f32.mrf.mxu0
        %v2722 = vadd.f32 0.0, %v2721
        %v2723 = vpop.f32.mrf.mxu0
        %v2724 = vadd.f32 0.0, %v2723
        %2725 = vmatmul.bf16.gmra.mxu0 %v1401
        %v2726 = vpop.f32.mrf.mxu0
        %v2727 = vadd.f32 0.0, %v2726
        %v2728 = vpop.f32.mrf.mxu0
        %v2729 = vadd.f32 0.0, %v2728
        %2730 = vmatmul.bf16.gmra.mxu0 %v1402
        %v2731 = vpop.f32.mrf.mxu0
        %v2732 = vadd.f32 0.0, %v2731
        %v2733 = vpop.f32.mrf.mxu0
        %v2734 = vadd.f32 0.0, %v2733
        %2735 = vmatmul.bf16.gmra.mxu0 %v1403
        %v2736 = vpop.f32.mrf.mxu0
        %v2737 = vadd.f32 0.0, %v2736
        %v2738 = vpop.f32.mrf.mxu0
        %v2739 = vadd.f32 0.0, %v2738
        %2740 = vmatmul.bf16.gmra.mxu0 %v1404
        %v2741 = vpop.f32.mrf.mxu0
        %v2742 = vadd.f32 0.0, %v2741
        %v2743 = vpop.f32.mrf.mxu0
        %v2744 = vadd.f32 0.0, %v2743
        %2745 = vmatmul.bf16.gmra.mxu0 %v1405
        %v2746 = vpop.f32.mrf.mxu0
        %v2747 = vadd.f32 0.0, %v2746
        %v2748 = vpop.f32.mrf.mxu0
        %v2749 = vadd.f32 0.0, %v2748
        %2750 = vmatmul.bf16.gmra.mxu0 %v1406
        %v2751 = vpop.f32.mrf.mxu0
        %v2752 = vadd.f32 0.0, %v2751
        %v2753 = vpop.f32.mrf.mxu0
        %v2754 = vadd.f32 0.0, %v2753
        %2755 = vmatmul.bf16.gmra.mxu0 %v1407
        %v2756 = vpop.f32.mrf.mxu0
        %v2757 = vadd.f32 0.0, %v2756
        %v2758 = vpop.f32.mrf.mxu0
        %v2759 = vadd.f32 0.0, %v2758
        %2760 = vmatmul.bf16.gmra.mxu0 %v1408
        %v2761 = vpop.f32.mrf.mxu0
        %v2762 = vadd.f32 0.0, %v2761
        %v2763 = vpop.f32.mrf.mxu0
        %v2764 = vadd.f32 0.0, %v2763
        %2765 = vmatmul.bf16.gmra.mxu0 %v1409
        %v2766 = vpop.f32.mrf.mxu0
        %v2767 = vadd.f32 0.0, %v2766
        %v2768 = vpop.f32.mrf.mxu0
        %v2769 = vadd.f32 0.0, %v2768
        %2770 = vmatmul.bf16.gmra.mxu0 %v1410
        %v2771 = vpop.f32.mrf.mxu0
        %v2772 = vadd.f32 0.0, %v2771
        %v2773 = vpop.f32.mrf.mxu0
        %v2774 = vadd.f32 0.0, %v2773
        %2775 = vmatmul.bf16.gmra.mxu0 %v1411
        %v2776 = vpop.f32.mrf.mxu0
        %v2777 = vadd.f32 0.0, %v2776
        %v2778 = vpop.f32.mrf.mxu0
        %v2779 = vadd.f32 0.0, %v2778
        %2780 = vmatmul.bf16.gmra.mxu0 %v1412
        %v2781 = vpop.f32.mrf.mxu0
        %v2782 = vadd.f32 0.0, %v2781
        %v2783 = vpop.f32.mrf.mxu0
        %v2784 = vadd.f32 0.0, %v2783
        %2785 = vmatmul.bf16.gmra.mxu0 %v1413
        %v2786 = vpop.f32.mrf.mxu0
        %v2787 = vadd.f32 0.0, %v2786
        %v2788 = vpop.f32.mrf.mxu0
        %v2789 = vadd.f32 0.0, %v2788
        %2790 = vmatmul.bf16.gmra.mxu0 %v1414
        %v2791 = vpop.f32.mrf.mxu0
        %v2792 = vadd.f32 0.0, %v2791
        %v2793 = vpop.f32.mrf.mxu0
        %v2794 = vadd.f32 0.0, %v2793
        %2795 = vmatmul.bf16.gmra.mxu0 %v1415
        %v2796 = vpop.f32.mrf.mxu0
        %v2797 = vadd.f32 0.0, %v2796
        %v2798 = vpop.f32.mrf.mxu0
        %v2799 = vadd.f32 0.0, %v2798
        %2800 = vmatmul.bf16.gmra.mxu0 %v1416
        %v2801 = vpop.f32.mrf.mxu0
        %v2802 = vadd.f32 0.0, %v2801
        %v2803 = vpop.f32.mrf.mxu0
        %v2804 = vadd.f32 0.0, %v2803
        %2805 = vmatmul.bf16.gmra.mxu0 %v1417
        %v2806 = vpop.f32.mrf.mxu0
        %v2807 = vadd.f32 0.0, %v2806
        %v2808 = vpop.f32.mrf.mxu0
        %v2809 = vadd.f32 0.0, %v2808
        %2810 = vmatmul.bf16.gmra.mxu0 %v1418
        %v2811 = vpop.f32.mrf.mxu0
        %v2812 = vadd.f32 0.0, %v2811
        %v2813 = vpop.f32.mrf.mxu0
        %v2814 = vadd.f32 0.0, %v2813
        %2815 = vdwg.mxu0
        %2816 = vmatpush.bf16.msra.mxu0 %v2630
        %2817 = vmatpush.bf16.msra.mxu0 %v2628
        %2818 = vmatpush.bf16.msra.mxu0 %v2626
        %2819 = vmatpush.bf16.msra.mxu0 %v2624
        %2820 = vmatpush.bf16.msra.mxu0 %v2622
        %2821 = vmatpush.bf16.msra.mxu0 %v2620
        %2822 = vmatpush.bf16.msra.mxu0 %v2618
        %2823 = vmatpush.bf16.msra.mxu0 %v2616
        %2824 = vmatmul.bf16.gmra.mxu0 %v1387
        %v2825 = vpop.f32.mrf.mxu0
        %v2826 = vadd.f32 0.0, %v2825
        %v2827 = vpop.f32.mrf.mxu0
        %v2828 = vadd.f32 0.0, %v2827
        %2829 = vmatmul.bf16.gmra.mxu0 %v1388
        %v2830 = vpop.f32.mrf.mxu0
        %v2831 = vadd.f32 0.0, %v2830
        %v2832 = vpop.f32.mrf.mxu0
        %v2833 = vadd.f32 0.0, %v2832
        %2834 = vmatmul.bf16.gmra.mxu0 %v1389
        %v2835 = vpop.f32.mrf.mxu0
        %v2836 = vadd.f32 0.0, %v2835
        %v2837 = vpop.f32.mrf.mxu0
        %v2838 = vadd.f32 0.0, %v2837
        %2839 = vmatmul.bf16.gmra.mxu0 %v1390
        %v2840 = vpop.f32.mrf.mxu0
        %v2841 = vadd.f32 0.0, %v2840
        %v2842 = vpop.f32.mrf.mxu0
        %v2843 = vadd.f32 0.0, %v2842
        %2844 = vmatmul.bf16.gmra.mxu0 %v1391
        %v2845 = vpop.f32.mrf.mxu0
        %v2846 = vadd.f32 0.0, %v2845
        %v2847 = vpop.f32.mrf.mxu0
        %v2848 = vadd.f32 0.0, %v2847
        %2849 = vmatmul.bf16.gmra.mxu0 %v1392
        %v2850 = vpop.f32.mrf.mxu0
        %v2851 = vadd.f32 0.0, %v2850
        %v2852 = vpop.f32.mrf.mxu0
        %v2853 = vadd.f32 0.0, %v2852
        %2854 = vmatmul.bf16.gmra.mxu0 %v1393
        %v2855 = vpop.f32.mrf.mxu0
        %v2856 = vadd.f32 0.0, %v2855
        %v2857 = vpop.f32.mrf.mxu0
        %v2858 = vadd.f32 0.0, %v2857
        %2859 = vmatmul.bf16.gmra.mxu0 %v1394
        %v2860 = vpop.f32.mrf.mxu0
        %v2861 = vadd.f32 0.0, %v2860
        %v2862 = vpop.f32.mrf.mxu0
        %v2863 = vadd.f32 0.0, %v2862
        %2864 = vmatmul.bf16.gmra.mxu0 %v1395
        %v2865 = vpop.f32.mrf.mxu0
        %v2866 = vadd.f32 0.0, %v2865
        %v2867 = vpop.f32.mrf.mxu0
        %v2868 = vadd.f32 0.0, %v2867
        %2869 = vmatmul.bf16.gmra.mxu0 %v1396
        %v2870 = vpop.f32.mrf.mxu0
        %v2871 = vadd.f32 0.0, %v2870
        %v2872 = vpop.f32.mrf.mxu0
        %v2873 = vadd.f32 0.0, %v2872
        %2874 = vmatmul.bf16.gmra.mxu0 %v1397
        %v2875 = vpop.f32.mrf.mxu0
        %v2876 = vadd.f32 0.0, %v2875
        %v2877 = vpop.f32.mrf.mxu0
        %v2878 = vadd.f32 0.0, %v2877
        %2879 = vmatmul.bf16.gmra.mxu0 %v1398
        %v2880 = vpop.f32.mrf.mxu0
        %v2881 = vadd.f32 0.0, %v2880
        %v2882 = vpop.f32.mrf.mxu0
        %v2883 = vadd.f32 0.0, %v2882
        %2884 = vmatmul.bf16.gmra.mxu0 %v1399
        %v2885 = vpop.f32.mrf.mxu0
        %v2886 = vadd.f32 0.0, %v2885
        %v2887 = vpop.f32.mrf.mxu0
        %v2888 = vadd.f32 0.0, %v2887
        %2889 = vmatmul.bf16.gmra.mxu0 %v1400
        %v2890 = vpop.f32.mrf.mxu0
        %v2891 = vadd.f32 0.0, %v2890
        %v2892 = vpop.f32.mrf.mxu0
        %v2893 = vadd.f32 0.0, %v2892
        %2894 = vmatmul.bf16.gmra.mxu0 %v1401
        %v2895 = vpop.f32.mrf.mxu0
        %v2896 = vadd.f32 0.0, %v2895
        %v2897 = vpop.f32.mrf.mxu0
        %v2898 = vadd.f32 0.0, %v2897
        %2899 = vmatmul.bf16.gmra.mxu0 %v1402
        %v2900 = vpop.f32.mrf.mxu0
        %v2901 = vadd.f32 0.0, %v2900
        %v2902 = vpop.f32.mrf.mxu0
        %v2903 = vadd.f32 0.0, %v2902
        %2904 = vmatmul.bf16.gmra.mxu0 %v1403
        %v2905 = vpop.f32.mrf.mxu0
        %v2906 = vadd.f32 0.0, %v2905
        %v2907 = vpop.f32.mrf.mxu0
        %v2908 = vadd.f32 0.0, %v2907
        %2909 = vmatmul.bf16.gmra.mxu0 %v1404
        %v2910 = vpop.f32.mrf.mxu0
        %v2911 = vadd.f32 0.0, %v2910
        %v2912 = vpop.f32.mrf.mxu0
        %v2913 = vadd.f32 0.0, %v2912
        %2914 = vmatmul.bf16.gmra.mxu0 %v1405
        %v2915 = vpop.f32.mrf.mxu0
        %v2916 = vadd.f32 0.0, %v2915
        %v2917 = vpop.f32.mrf.mxu0
        %v2918 = vadd.f32 0.0, %v2917
        %2919 = vmatmul.bf16.gmra.mxu0 %v1406
        %v2920 = vpop.f32.mrf.mxu0
        %v2921 = vadd.f32 0.0, %v2920
        %v2922 = vpop.f32.mrf.mxu0
        %v2923 = vadd.f32 0.0, %v2922
        %2924 = vmatmul.bf16.gmra.mxu0 %v1407
        %v2925 = vpop.f32.mrf.mxu0
        %v2926 = vadd.f32 0.0, %v2925
        %v2927 = vpop.f32.mrf.mxu0
        %v2928 = vadd.f32 0.0, %v2927
        %2929 = vmatmul.bf16.gmra.mxu0 %v1408
        %v2930 = vpop.f32.mrf.mxu0
        %v2931 = vadd.f32 0.0, %v2930
        %v2932 = vpop.f32.mrf.mxu0
        %v2933 = vadd.f32 0.0, %v2932
        %2934 = vmatmul.bf16.gmra.mxu0 %v1409
        %v2935 = vpop.f32.mrf.mxu0
        %v2936 = vadd.f32 0.0, %v2935
        %v2937 = vpop.f32.mrf.mxu0
        %v2938 = vadd.f32 0.0, %v2937
        %2939 = vmatmul.bf16.gmra.mxu0 %v1410
        %v2940 = vpop.f32.mrf.mxu0
        %v2941 = vadd.f32 0.0, %v2940
        %v2942 = vpop.f32.mrf.mxu0
        %v2943 = vadd.f32 0.0, %v2942
        %2944 = vmatmul.bf16.gmra.mxu0 %v1411
        %v2945 = vpop.f32.mrf.mxu0
        %v2946 = vadd.f32 0.0, %v2945
        %v2947 = vpop.f32.mrf.mxu0
        %v2948 = vadd.f32 0.0, %v2947
        %2949 = vmatmul.bf16.gmra.mxu0 %v1412
        %v2950 = vpop.f32.mrf.mxu0
        %v2951 = vadd.f32 0.0, %v2950
        %v2952 = vpop.f32.mrf.mxu0
        %v2953 = vadd.f32 0.0, %v2952
        %2954 = vmatmul.bf16.gmra.mxu0 %v1413
        %v2955 = vpop.f32.mrf.mxu0
        %v2956 = vadd.f32 0.0, %v2955
        %v2957 = vpop.f32.mrf.mxu0
        %v2958 = vadd.f32 0.0, %v2957
        %2959 = vmatmul.bf16.gmra.mxu0 %v1414
        %v2960 = vpop.f32.mrf.mxu0
        %v2961 = vadd.f32 0.0, %v2960
        %v2962 = vpop.f32.mrf.mxu0
        %v2963 = vadd.f32 0.0, %v2962
        %2964 = vmatmul.bf16.gmra.mxu0 %v1415
        %v2965 = vpop.f32.mrf.mxu0
        %v2966 = vadd.f32 0.0, %v2965
        %v2967 = vpop.f32.mrf.mxu0
        %v2968 = vadd.f32 0.0, %v2967
        %2969 = vmatmul.bf16.gmra.mxu0 %v1416
        %v2970 = vpop.f32.mrf.mxu0
        %v2971 = vadd.f32 0.0, %v2970
        %v2972 = vpop.f32.mrf.mxu0
        %v2973 = vadd.f32 0.0, %v2972
        %2974 = vmatmul.bf16.gmra.mxu0 %v1417
        %v2975 = vpop.f32.mrf.mxu0
        %v2976 = vadd.f32 0.0, %v2975
        %v2977 = vpop.f32.mrf.mxu0
        %v2978 = vadd.f32 0.0, %v2977
        %2979 = vmatmul.bf16.gmra.mxu0 %v1418
        %v2980 = vpop.f32.mrf.mxu0
        %v2981 = vadd.f32 0.0, %v2980
        %v2982 = vpop.f32.mrf.mxu0
        %v2983 = vadd.f32 0.0, %v2982
        %2984 = vdwg.mxu0
        %v2985 = vmax.f32 %v2657, %v2662
        %v2986 = vmax.f32 %v2659, %v2664
        %v2987 = vmax.f32 %v2985, %v2667
        %v2988 = vmax.f32 %v2986, %v2669
        %v2989 = vmax.f32 %v2987, %v2672
        %v2990 = vmax.f32 %v2988, %v2674
        %v2991 = vmax.f32 %v2989, %v2677
        %v2992 = vmax.f32 %v2990, %v2679
        %v2993 = vmax.f32 %v2991, %v2682
        %v2994 = vmax.f32 %v2992, %v2684
        %v2995 = vmax.f32 %v2993, %v2687
        %v2996 = vmax.f32 %v2994, %v2689
        %v2997 = vmax.f32 %v2995, %v2692
        %v2998 = vmax.f32 %v2996, %v2694
        %v2999 = vmax.f32 %v2997, %v2697
        %v3000 = vmax.f32 %v2998, %v2699
        %v3001 = vmax.f32 %v2999, %v2702
        %v3002 = vmax.f32 %v3000, %v2704
        %v3003 = vmax.f32 %v3001, %v2707
        %v3004 = vmax.f32 %v3002, %v2709
        %v3005 = vmax.f32 %v3003, %v2712
        %v3006 = vmax.f32 %v3004, %v2714
        %v3007 = vmax.f32 %v3005, %v2717
        %v3008 = vmax.f32 %v3006, %v2719
        %v3009 = vmax.f32 %v3007, %v2722
        %v3010 = vmax.f32 %v3008, %v2724
        %v3011 = vmax.f32 %v3009, %v2727
        %v3012 = vmax.f32 %v3010, %v2729
        %v3013 = vmax.f32 %v3011, %v2732
        %v3014 = vmax.f32 %v3012, %v2734
        %v3015 = vmax.f32 %v3013, %v2737
        %v3016 = vmax.f32 %v3014, %v2739
        %v3017 = vmax.f32 %v3015, %v2742
        %v3018 = vmax.f32 %v3016, %v2744
        %v3019 = vmax.f32 %v3017, %v2747
        %v3020 = vmax.f32 %v3018, %v2749
        %v3021 = vmax.f32 %v3019, %v2752
        %v3022 = vmax.f32 %v3020, %v2754
        %v3023 = vmax.f32 %v3021, %v2757
        %v3024 = vmax.f32 %v3022, %v2759
        %v3025 = vmax.f32 %v3023, %v2762
        %v3026 = vmax.f32 %v3024, %v2764
        %v3027 = vmax.f32 %v3025, %v2767
        %v3028 = vmax.f32 %v3026, %v2769
        %v3029 = vmax.f32 %v3027, %v2772
        %v3030 = vmax.f32 %v3028, %v2774
        %v3031 = vmax.f32 %v3029, %v2777
        %v3032 = vmax.f32 %v3030, %v2779
        %v3033 = vmax.f32 %v3031, %v2782
        %v3034 = vmax.f32 %v3032, %v2784
        %v3035 = vmax.f32 %v3033, %v2787
        %v3036 = vmax.f32 %v3034, %v2789
        %v3037 = vmax.f32 %v3035, %v2792
        %v3038 = vmax.f32 %v3036, %v2794
        %v3039 = vmax.f32 %v3037, %v2797
        %v3040 = vmax.f32 %v3038, %v2799
        %v3041 = vmax.f32 %v3039, %v2802
        %v3042 = vmax.f32 %v3040, %v2804
        %v3043 = vmax.f32 %v3041, %v2807
        %v3044 = vmax.f32 %v3042, %v2809
        %v3045 = vmax.f32 %v3043, %v2812
        %v3046 = vmax.f32 %v3044, %v2814
        %v3047 = vmax.f32 %v3045, %v3046
        %v3048 = vmax.f32 %v2826, %v2831
        %v3049 = vmax.f32 %v2828, %v2833
        %v3050 = vmax.f32 %v3048, %v2836
        %v3051 = vmax.f32 %v3049, %v2838
        %v3052 = vmax.f32 %v3050, %v2841
        %v3053 = vmax.f32 %v3051, %v2843
        %v3054 = vmax.f32 %v3052, %v2846
        %v3055 = vmax.f32 %v3053, %v2848
        %v3056 = vmax.f32 %v3054, %v2851
        %v3057 = vmax.f32 %v3055, %v2853
        %v3058 = vmax.f32 %v3056, %v2856
        %v3059 = vmax.f32 %v3057, %v2858
        %v3060 = vmax.f32 %v3058, %v2861
        %v3061 = vmax.f32 %v3059, %v2863
        %v3062 = vmax.f32 %v3060, %v2866
        %v3063 = vmax.f32 %v3061, %v2868
        %v3064 = vmax.f32 %v3062, %v2871
        %v3065 = vmax.f32 %v3063, %v2873
        %v3066 = vmax.f32 %v3064, %v2876
        %v3067 = vmax.f32 %v3065, %v2878
        %v3068 = vmax.f32 %v3066, %v2881
        %v3069 = vmax.f32 %v3067, %v2883
        %v3070 = vmax.f32 %v3068, %v2886
        %v3071 = vmax.f32 %v3069, %v2888
        %v3072 = vmax.f32 %v3070, %v2891
        %v3073 = vmax.f32 %v3071, %v2893
        %v3074 = vmax.f32 %v3072, %v2896
        %v3075 = vmax.f32 %v3073, %v2898
        %v3076 = vmax.f32 %v3074, %v2901
        %v3077 = vmax.f32 %v3075, %v2903
        %v3078 = vmax.f32 %v3076, %v2906
        %v3079 = vmax.f32 %v3077, %v2908
        %v3080 = vmax.f32 %v3078, %v2911
        %v3081 = vmax.f32 %v3079, %v2913
        %v3082 = vmax.f32 %v3080, %v2916
        %v3083 = vmax.f32 %v3081, %v2918
        %v3084 = vmax.f32 %v3082, %v2921
        %v3085 = vmax.f32 %v3083, %v2923
        %v3086 = vmax.f32 %v3084, %v2926
        %v3087 = vmax.f32 %v3085, %v2928
        %v3088 = vmax.f32 %v3086, %v2931
        %v3089 = vmax.f32 %v3087, %v2933
        %v3090 = vmax.f32 %v3088, %v2936
        %v3091 = vmax.f32 %v3089, %v2938
        %v3092 = vmax.f32 %v3090, %v2941
        %v3093 = vmax.f32 %v3091, %v2943
        %v3094 = vmax.f32 %v3092, %v2946
        %v3095 = vmax.f32 %v3093, %v2948
        %v3096 = vmax.f32 %v3094, %v2951
        %v3097 = vmax.f32 %v3095, %v2953
        %v3098 = vmax.f32 %v3096, %v2956
        %v3099 = vmax.f32 %v3097, %v2958
        %v3100 = vmax.f32 %v3098, %v2961
        %v3101 = vmax.f32 %v3099, %v2963
        %v3102 = vmax.f32 %v3100, %v2966
        %v3103 = vmax.f32 %v3101, %v2968
        %v3104 = vmax.f32 %v3102, %v2971
        %v3105 = vmax.f32 %v3103, %v2973
        %v3106 = vmax.f32 %v3104, %v2976
        %v3107 = vmax.f32 %v3105, %v2978
        %v3108 = vmax.f32 %v3106, %v2981
        %v3109 = vmax.f32 %v3107, %v2983
        %v3110 = vmax.f32 %v3108, %v3109
        %v3111 = vld [vmem:[#allocation2 + $0x20] sm:$0xff]
        %v3112 = vld [vmem:[#allocation2 + $0x28] sm:$0xff]
        %v3113 = vmax.f32 %v3111, %v3047
        %v3114 = vmax.f32 %v3112, %v3110
        %3115 = vst [vmem:[#allocation2 + $0x20] sm:$0xff] %v3113
        %3116 = vst [vmem:[#allocation2 + $0x28] sm:$0xff] %v3114
        %v3117 = vld [vmem:[#allocation5 + $0x18] sm:$0xff]
        %v3118 = vld [vmem:[#allocation5 + $0x38] sm:$0xff]
        %v3119 = vld [vmem:[#allocation5 + $0x58] sm:$0xff]
        %v3120 = vld [vmem:[#allocation5 + $0x78] sm:$0xff]
        %v3121 = vld [vmem:[#allocation5 + $0x98] sm:$0xff]
        %v3122 = vld [vmem:[#allocation5 + $0xb8] sm:$0xff]
        %v3123 = vld [vmem:[#allocation5 + $0xd8] sm:$0xff]
        %v3124 = vld [vmem:[#allocation5 + $0xf8] sm:$0xff]
        %v3125 = vld [vmem:[#allocation5 + $0x118] sm:$0xff]
        %v3126 = vld [vmem:[#allocation5 + $0x138] sm:$0xff]
        %v3127 = vld [vmem:[#allocation5 + $0x158] sm:$0xff]
        %v3128 = vld [vmem:[#allocation5 + $0x178] sm:$0xff]
        %v3129 = vld [vmem:[#allocation5 + $0x198] sm:$0xff]
        %v3130 = vld [vmem:[#allocation5 + $0x1b8] sm:$0xff]
        %v3131 = vld [vmem:[#allocation5 + $0x1d8] sm:$0xff]
        %v3132 = vld [vmem:[#allocation5 + $0x1f8] sm:$0xff]
        %v3149 = vunpack.c.l.b16 %v3117
        %v3150 = vunpack.c.h.b16 %v3117
        %v3151 = vunpack.c.l.b16 %v3118
        %v3152 = vunpack.c.h.b16 %v3118
        %v3153 = vunpack.c.l.b16 %v3119
        %v3154 = vunpack.c.h.b16 %v3119
        %v3155 = vunpack.c.l.b16 %v3120
        %v3156 = vunpack.c.h.b16 %v3120
        %v3157 = vunpack.c.l.b16 %v3121
        %v3158 = vunpack.c.h.b16 %v3121
        %v3159 = vunpack.c.l.b16 %v3122
        %v3160 = vunpack.c.h.b16 %v3122
        %v3161 = vunpack.c.l.b16 %v3123
        %v3162 = vunpack.c.h.b16 %v3123
        %v3163 = vunpack.c.l.b16 %v3124
        %v3164 = vunpack.c.h.b16 %v3124
        %v3165 = vunpack.c.l.b16 %v3125
        %v3166 = vunpack.c.h.b16 %v3125
        %v3167 = vunpack.c.l.b16 %v3126
        %v3168 = vunpack.c.h.b16 %v3126
        %v3169 = vunpack.c.l.b16 %v3127
        %v3170 = vunpack.c.h.b16 %v3127
        %v3171 = vunpack.c.l.b16 %v3128
        %v3172 = vunpack.c.h.b16 %v3128
        %v3173 = vunpack.c.l.b16 %v3129
        %v3174 = vunpack.c.h.b16 %v3129
        %v3175 = vunpack.c.l.b16 %v3130
        %v3176 = vunpack.c.h.b16 %v3130
        %v3177 = vunpack.c.l.b16 %v3131
        %v3178 = vunpack.c.h.b16 %v3131
        %v3179 = vunpack.c.l.b16 %v3132
        %v3180 = vunpack.c.h.b16 %v3132
        %v3181 = vpack.c.b16 %v3151, %v3149
        %v3182 = vpack.c.b16 %v3152, %v3150
        %v3183 = vpack.c.b16 %v3155, %v3153
        %v3184 = vpack.c.b16 %v3156, %v3154
        %v3185 = vpack.c.b16 %v3159, %v3157
        %v3186 = vpack.c.b16 %v3160, %v3158
        %v3187 = vpack.c.b16 %v3163, %v3161
        %v3188 = vpack.c.b16 %v3164, %v3162
        %v3189 = vpack.c.b16 %v3167, %v3165
        %v3190 = vpack.c.b16 %v3168, %v3166
        %v3191 = vpack.c.b16 %v3171, %v3169
        %v3192 = vpack.c.b16 %v3172, %v3170
        %v3193 = vpack.c.b16 %v3175, %v3173
        %v3194 = vpack.c.b16 %v3176, %v3174
        %v3195 = vpack.c.b16 %v3179, %v3177
        %v3196 = vpack.c.b16 %v3180, %v3178
        %3213 = vmatpush.bf16.msra.mxu0 %v3195
        %3214 = vmatpush.bf16.msra.mxu0 %v3193
        %3215 = vmatpush.bf16.msra.mxu0 %v3191
        %3216 = vmatpush.bf16.msra.mxu0 %v3189
        %3217 = vmatpush.bf16.msra.mxu0 %v3187
        %3218 = vmatpush.bf16.msra.mxu0 %v3185
        %3219 = vmatpush.bf16.msra.mxu0 %v3183
        %3220 = vmatpush.bf16.msra.mxu0 %v3181
        %3221 = vmatmul.bf16.gmra.mxu0 %v1387
        %v3222 = vpop.f32.mrf.mxu0
        %v3223 = vadd.f32 0.0, %v3222
        %v3224 = vpop.f32.mrf.mxu0
        %v3225 = vadd.f32 0.0, %v3224
        %3226 = vmatmul.bf16.gmra.mxu0 %v1388
        %v3227 = vpop.f32.mrf.mxu0
        %v3228 = vadd.f32 0.0, %v3227
        %v3229 = vpop.f32.mrf.mxu0
        %v3230 = vadd.f32 0.0, %v3229
        %3231 = vmatmul.bf16.gmra.mxu0 %v1389
        %v3232 = vpop.f32.mrf.mxu0
        %v3233 = vadd.f32 0.0, %v3232
        %v3234 = vpop.f32.mrf.mxu0
        %v3235 = vadd.f32 0.0, %v3234
        %3236 = vmatmul.bf16.gmra.mxu0 %v1390
        %v3237 = vpop.f32.mrf.mxu0
        %v3238 = vadd.f32 0.0, %v3237
        %v3239 = vpop.f32.mrf.mxu0
        %v3240 = vadd.f32 0.0, %v3239
        %3241 = vmatmul.bf16.gmra.mxu0 %v1391
        %v3242 = vpop.f32.mrf.mxu0
        %v3243 = vadd.f32 0.0, %v3242
        %v3244 = vpop.f32.mrf.mxu0
        %v3245 = vadd.f32 0.0, %v3244
        %3246 = vmatmul.bf16.gmra.mxu0 %v1392
        %v3247 = vpop.f32.mrf.mxu0
        %v3248 = vadd.f32 0.0, %v3247
        %v3249 = vpop.f32.mrf.mxu0
        %v3250 = vadd.f32 0.0, %v3249
        %3251 = vmatmul.bf16.gmra.mxu0 %v1393
        %v3252 = vpop.f32.mrf.mxu0
        %v3253 = vadd.f32 0.0, %v3252
        %v3254 = vpop.f32.mrf.mxu0
        %v3255 = vadd.f32 0.0, %v3254
        %3256 = vmatmul.bf16.gmra.mxu0 %v1394
        %v3257 = vpop.f32.mrf.mxu0
        %v3258 = vadd.f32 0.0, %v3257
        %v3259 = vpop.f32.mrf.mxu0
        %v3260 = vadd.f32 0.0, %v3259
        %3261 = vmatmul.bf16.gmra.mxu0 %v1395
        %v3262 = vpop.f32.mrf.mxu0
        %v3263 = vadd.f32 0.0, %v3262
        %v3264 = vpop.f32.mrf.mxu0
        %v3265 = vadd.f32 0.0, %v3264
        %3266 = vmatmul.bf16.gmra.mxu0 %v1396
        %v3267 = vpop.f32.mrf.mxu0
        %v3268 = vadd.f32 0.0, %v3267
        %v3269 = vpop.f32.mrf.mxu0
        %v3270 = vadd.f32 0.0, %v3269
        %3271 = vmatmul.bf16.gmra.mxu0 %v1397
        %v3272 = vpop.f32.mrf.mxu0
        %v3273 = vadd.f32 0.0, %v3272
        %v3274 = vpop.f32.mrf.mxu0
        %v3275 = vadd.f32 0.0, %v3274
        %3276 = vmatmul.bf16.gmra.mxu0 %v1398
        %v3277 = vpop.f32.mrf.mxu0
        %v3278 = vadd.f32 0.0, %v3277
        %v3279 = vpop.f32.mrf.mxu0
        %v3280 = vadd.f32 0.0, %v3279
        %3281 = vmatmul.bf16.gmra.mxu0 %v1399
        %v3282 = vpop.f32.mrf.mxu0
        %v3283 = vadd.f32 0.0, %v3282
        %v3284 = vpop.f32.mrf.mxu0
        %v3285 = vadd.f32 0.0, %v3284
        %3286 = vmatmul.bf16.gmra.mxu0 %v1400
        %v3287 = vpop.f32.mrf.mxu0
        %v3288 = vadd.f32 0.0, %v3287
        %v3289 = vpop.f32.mrf.mxu0
        %v3290 = vadd.f32 0.0, %v3289
        %3291 = vmatmul.bf16.gmra.mxu0 %v1401
        %v3292 = vpop.f32.mrf.mxu0
        %v3293 = vadd.f32 0.0, %v3292
        %v3294 = vpop.f32.mrf.mxu0
        %v3295 = vadd.f32 0.0, %v3294
        %3296 = vmatmul.bf16.gmra.mxu0 %v1402
        %v3297 = vpop.f32.mrf.mxu0
        %v3298 = vadd.f32 0.0, %v3297
        %v3299 = vpop.f32.mrf.mxu0
        %v3300 = vadd.f32 0.0, %v3299
        %3301 = vmatmul.bf16.gmra.mxu0 %v1403
        %v3302 = vpop.f32.mrf.mxu0
        %v3303 = vadd.f32 0.0, %v3302
        %v3304 = vpop.f32.mrf.mxu0
        %v3305 = vadd.f32 0.0, %v3304
        %3306 = vmatmul.bf16.gmra.mxu0 %v1404
        %v3307 = vpop.f32.mrf.mxu0
        %v3308 = vadd.f32 0.0, %v3307
        %v3309 = vpop.f32.mrf.mxu0
        %v3310 = vadd.f32 0.0, %v3309
        %3311 = vmatmul.bf16.gmra.mxu0 %v1405
        %v3312 = vpop.f32.mrf.mxu0
        %v3313 = vadd.f32 0.0, %v3312
        %v3314 = vpop.f32.mrf.mxu0
        %v3315 = vadd.f32 0.0, %v3314
        %3316 = vmatmul.bf16.gmra.mxu0 %v1406
        %v3317 = vpop.f32.mrf.mxu0
        %v3318 = vadd.f32 0.0, %v3317
        %v3319 = vpop.f32.mrf.mxu0
        %v3320 = vadd.f32 0.0, %v3319
        %3321 = vmatmul.bf16.gmra.mxu0 %v1407
        %v3322 = vpop.f32.mrf.mxu0
        %v3323 = vadd.f32 0.0, %v3322
        %v3324 = vpop.f32.mrf.mxu0
        %v3325 = vadd.f32 0.0, %v3324
        %3326 = vmatmul.bf16.gmra.mxu0 %v1408
        %v3327 = vpop.f32.mrf.mxu0
        %v3328 = vadd.f32 0.0, %v3327
        %v3329 = vpop.f32.mrf.mxu0
        %v3330 = vadd.f32 0.0, %v3329
        %3331 = vmatmul.bf16.gmra.mxu0 %v1409
        %v3332 = vpop.f32.mrf.mxu0
        %v3333 = vadd.f32 0.0, %v3332
        %v3334 = vpop.f32.mrf.mxu0
        %v3335 = vadd.f32 0.0, %v3334
        %3336 = vmatmul.bf16.gmra.mxu0 %v1410
        %v3337 = vpop.f32.mrf.mxu0
        %v3338 = vadd.f32 0.0, %v3337
        %v3339 = vpop.f32.mrf.mxu0
        %v3340 = vadd.f32 0.0, %v3339
        %3341 = vmatmul.bf16.gmra.mxu0 %v1411
        %v3342 = vpop.f32.mrf.mxu0
        %v3343 = vadd.f32 0.0, %v3342
        %v3344 = vpop.f32.mrf.mxu0
        %v3345 = vadd.f32 0.0, %v3344
        %3346 = vmatmul.bf16.gmra.mxu0 %v1412
        %v3347 = vpop.f32.mrf.mxu0
        %v3348 = vadd.f32 0.0, %v3347
        %v3349 = vpop.f32.mrf.mxu0
        %v3350 = vadd.f32 0.0, %v3349
        %3351 = vmatmul.bf16.gmra.mxu0 %v1413
        %v3352 = vpop.f32.mrf.mxu0
        %v3353 = vadd.f32 0.0, %v3352
        %v3354 = vpop.f32.mrf.mxu0
        %v3355 = vadd.f32 0.0, %v3354
        %3356 = vmatmul.bf16.gmra.mxu0 %v1414
        %v3357 = vpop.f32.mrf.mxu0
        %v3358 = vadd.f32 0.0, %v3357
        %v3359 = vpop.f32.mrf.mxu0
        %v3360 = vadd.f32 0.0, %v3359
        %3361 = vmatmul.bf16.gmra.mxu0 %v1415
        %v3362 = vpop.f32.mrf.mxu0
        %v3363 = vadd.f32 0.0, %v3362
        %v3364 = vpop.f32.mrf.mxu0
        %v3365 = vadd.f32 0.0, %v3364
        %3366 = vmatmul.bf16.gmra.mxu0 %v1416
        %v3367 = vpop.f32.mrf.mxu0
        %v3368 = vadd.f32 0.0, %v3367
        %v3369 = vpop.f32.mrf.mxu0
        %v3370 = vadd.f32 0.0, %v3369
        %3371 = vmatmul.bf16.gmra.mxu0 %v1417
        %v3372 = vpop.f32.mrf.mxu0
        %v3373 = vadd.f32 0.0, %v3372
        %v3374 = vpop.f32.mrf.mxu0
        %v3375 = vadd.f32 0.0, %v3374
        %3376 = vmatmul.bf16.gmra.mxu0 %v1418
        %v3377 = vpop.f32.mrf.mxu0
        %v3378 = vadd.f32 0.0, %v3377
        %v3379 = vpop.f32.mrf.mxu0
        %v3380 = vadd.f32 0.0, %v3379
        %3381 = vdwg.mxu0
        %3382 = vmatpush.bf16.msra.mxu0 %v3196
        %3383 = vmatpush.bf16.msra.mxu0 %v3194
        %3384 = vmatpush.bf16.msra.mxu0 %v3192
        %3385 = vmatpush.bf16.msra.mxu0 %v3190
        %3386 = vmatpush.bf16.msra.mxu0 %v3188
        %3387 = vmatpush.bf16.msra.mxu0 %v3186
        %3388 = vmatpush.bf16.msra.mxu0 %v3184
        %3389 = vmatpush.bf16.msra.mxu0 %v3182
        %3390 = vmatmul.bf16.gmra.mxu0 %v1387
        %v3391 = vpop.f32.mrf.mxu0
        %v3392 = vadd.f32 0.0, %v3391
        %v3393 = vpop.f32.mrf.mxu0
        %v3394 = vadd.f32 0.0, %v3393
        %3395 = vmatmul.bf16.gmra.mxu0 %v1388
        %v3396 = vpop.f32.mrf.mxu0
        %v3397 = vadd.f32 0.0, %v3396
        %v3398 = vpop.f32.mrf.mxu0
        %v3399 = vadd.f32 0.0, %v3398
        %3400 = vmatmul.bf16.gmra.mxu0 %v1389
        %v3401 = vpop.f32.mrf.mxu0
        %v3402 = vadd.f32 0.0, %v3401
        %v3403 = vpop.f32.mrf.mxu0
        %v3404 = vadd.f32 0.0, %v3403
        %3405 = vmatmul.bf16.gmra.mxu0 %v1390
        %v3406 = vpop.f32.mrf.mxu0
        %v3407 = vadd.f32 0.0, %v3406
        %v3408 = vpop.f32.mrf.mxu0
        %v3409 = vadd.f32 0.0, %v3408
        %3410 = vmatmul.bf16.gmra.mxu0 %v1391
        %v3411 = vpop.f32.mrf.mxu0
        %v3412 = vadd.f32 0.0, %v3411
        %v3413 = vpop.f32.mrf.mxu0
        %v3414 = vadd.f32 0.0, %v3413
        %3415 = vmatmul.bf16.gmra.mxu0 %v1392
        %v3416 = vpop.f32.mrf.mxu0
        %v3417 = vadd.f32 0.0, %v3416
        %v3418 = vpop.f32.mrf.mxu0
        %v3419 = vadd.f32 0.0, %v3418
        %3420 = vmatmul.bf16.gmra.mxu0 %v1393
        %v3421 = vpop.f32.mrf.mxu0
        %v3422 = vadd.f32 0.0, %v3421
        %v3423 = vpop.f32.mrf.mxu0
        %v3424 = vadd.f32 0.0, %v3423
        %3425 = vmatmul.bf16.gmra.mxu0 %v1394
        %v3426 = vpop.f32.mrf.mxu0
        %v3427 = vadd.f32 0.0, %v3426
        %v3428 = vpop.f32.mrf.mxu0
        %v3429 = vadd.f32 0.0, %v3428
        %3430 = vmatmul.bf16.gmra.mxu0 %v1395
        %v3431 = vpop.f32.mrf.mxu0
        %v3432 = vadd.f32 0.0, %v3431
        %v3433 = vpop.f32.mrf.mxu0
        %v3434 = vadd.f32 0.0, %v3433
        %3435 = vmatmul.bf16.gmra.mxu0 %v1396
        %v3436 = vpop.f32.mrf.mxu0
        %v3437 = vadd.f32 0.0, %v3436
        %v3438 = vpop.f32.mrf.mxu0
        %v3439 = vadd.f32 0.0, %v3438
        %3440 = vmatmul.bf16.gmra.mxu0 %v1397
        %v3441 = vpop.f32.mrf.mxu0
        %v3442 = vadd.f32 0.0, %v3441
        %v3443 = vpop.f32.mrf.mxu0
        %v3444 = vadd.f32 0.0, %v3443
        %3445 = vmatmul.bf16.gmra.mxu0 %v1398
        %v3446 = vpop.f32.mrf.mxu0
        %v3447 = vadd.f32 0.0, %v3446
        %v3448 = vpop.f32.mrf.mxu0
        %v3449 = vadd.f32 0.0, %v3448
        %3450 = vmatmul.bf16.gmra.mxu0 %v1399
        %v3451 = vpop.f32.mrf.mxu0
        %v3452 = vadd.f32 0.0, %v3451
        %v3453 = vpop.f32.mrf.mxu0
        %v3454 = vadd.f32 0.0, %v3453
        %3455 = vmatmul.bf16.gmra.mxu0 %v1400
        %v3456 = vpop.f32.mrf.mxu0
        %v3457 = vadd.f32 0.0, %v3456
        %v3458 = vpop.f32.mrf.mxu0
        %v3459 = vadd.f32 0.0, %v3458
        %3460 = vmatmul.bf16.gmra.mxu0 %v1401
        %v3461 = vpop.f32.mrf.mxu0
        %v3462 = vadd.f32 0.0, %v3461
        %v3463 = vpop.f32.mrf.mxu0
        %v3464 = vadd.f32 0.0, %v3463
        %3465 = vmatmul.bf16.gmra.mxu0 %v1402
        %v3466 = vpop.f32.mrf.mxu0
        %v3467 = vadd.f32 0.0, %v3466
        %v3468 = vpop.f32.mrf.mxu0
        %v3469 = vadd.f32 0.0, %v3468
        %3470 = vmatmul.bf16.gmra.mxu0 %v1403
        %v3471 = vpop.f32.mrf.mxu0
        %v3472 = vadd.f32 0.0, %v3471
        %v3473 = vpop.f32.mrf.mxu0
        %v3474 = vadd.f32 0.0, %v3473
        %3475 = vmatmul.bf16.gmra.mxu0 %v1404
        %v3476 = vpop.f32.mrf.mxu0
        %v3477 = vadd.f32 0.0, %v3476
        %v3478 = vpop.f32.mrf.mxu0
        %v3479 = vadd.f32 0.0, %v3478
        %3480 = vmatmul.bf16.gmra.mxu0 %v1405
        %v3481 = vpop.f32.mrf.mxu0
        %v3482 = vadd.f32 0.0, %v3481
        %v3483 = vpop.f32.mrf.mxu0
        %v3484 = vadd.f32 0.0, %v3483
        %3485 = vmatmul.bf16.gmra.mxu0 %v1406
        %v3486 = vpop.f32.mrf.mxu0
        %v3487 = vadd.f32 0.0, %v3486
        %v3488 = vpop.f32.mrf.mxu0
        %v3489 = vadd.f32 0.0, %v3488
        %3490 = vmatmul.bf16.gmra.mxu0 %v1407
        %v3491 = vpop.f32.mrf.mxu0
        %v3492 = vadd.f32 0.0, %v3491
        %v3493 = vpop.f32.mrf.mxu0
        %v3494 = vadd.f32 0.0, %v3493
        %3495 = vmatmul.bf16.gmra.mxu0 %v1408
        %v3496 = vpop.f32.mrf.mxu0
        %v3497 = vadd.f32 0.0, %v3496
        %v3498 = vpop.f32.mrf.mxu0
        %v3499 = vadd.f32 0.0, %v3498
        %3500 = vmatmul.bf16.gmra.mxu0 %v1409
        %v3501 = vpop.f32.mrf.mxu0
        %v3502 = vadd.f32 0.0, %v3501
        %v3503 = vpop.f32.mrf.mxu0
        %v3504 = vadd.f32 0.0, %v3503
        %3505 = vmatmul.bf16.gmra.mxu0 %v1410
        %v3506 = vpop.f32.mrf.mxu0
        %v3507 = vadd.f32 0.0, %v3506
        %v3508 = vpop.f32.mrf.mxu0
        %v3509 = vadd.f32 0.0, %v3508
        %3510 = vmatmul.bf16.gmra.mxu0 %v1411
        %v3511 = vpop.f32.mrf.mxu0
        %v3512 = vadd.f32 0.0, %v3511
        %v3513 = vpop.f32.mrf.mxu0
        %v3514 = vadd.f32 0.0, %v3513
        %3515 = vmatmul.bf16.gmra.mxu0 %v1412
        %v3516 = vpop.f32.mrf.mxu0
        %v3517 = vadd.f32 0.0, %v3516
        %v3518 = vpop.f32.mrf.mxu0
        %v3519 = vadd.f32 0.0, %v3518
        %3520 = vmatmul.bf16.gmra.mxu0 %v1413
        %v3521 = vpop.f32.mrf.mxu0
        %v3522 = vadd.f32 0.0, %v3521
        %v3523 = vpop.f32.mrf.mxu0
        %v3524 = vadd.f32 0.0, %v3523
        %3525 = vmatmul.bf16.gmra.mxu0 %v1414
        %v3526 = vpop.f32.mrf.mxu0
        %v3527 = vadd.f32 0.0, %v3526
        %v3528 = vpop.f32.mrf.mxu0
        %v3529 = vadd.f32 0.0, %v3528
        %3530 = vmatmul.bf16.gmra.mxu0 %v1415
        %v3531 = vpop.f32.mrf.mxu0
        %v3532 = vadd.f32 0.0, %v3531
        %v3533 = vpop.f32.mrf.mxu0
        %v3534 = vadd.f32 0.0, %v3533
        %3535 = vmatmul.bf16.gmra.mxu0 %v1416
        %v3536 = vpop.f32.mrf.mxu0
        %v3537 = vadd.f32 0.0, %v3536
        %v3538 = vpop.f32.mrf.mxu0
        %v3539 = vadd.f32 0.0, %v3538
        %3540 = vmatmul.bf16.gmra.mxu0 %v1417
        %v3541 = vpop.f32.mrf.mxu0
        %v3542 = vadd.f32 0.0, %v3541
        %v3543 = vpop.f32.mrf.mxu0
        %v3544 = vadd.f32 0.0, %v3543
        %3545 = vmatmul.bf16.gmra.mxu0 %v1418
        %v3546 = vpop.f32.mrf.mxu0
        %v3547 = vadd.f32 0.0, %v3546
        %v3548 = vpop.f32.mrf.mxu0
        %v3549 = vadd.f32 0.0, %v3548
        %3550 = vdwg.mxu0
        %v3551 = vmax.f32 %v3223, %v3228
        %v3552 = vmax.f32 %v3225, %v3230
        %v3553 = vmax.f32 %v3551, %v3233
        %v3554 = vmax.f32 %v3552, %v3235
        %v3555 = vmax.f32 %v3553, %v3238
        %v3556 = vmax.f32 %v3554, %v3240
        %v3557 = vmax.f32 %v3555, %v3243
        %v3558 = vmax.f32 %v3556, %v3245
        %v3559 = vmax.f32 %v3557, %v3248
        %v3560 = vmax.f32 %v3558, %v3250
        %v3561 = vmax.f32 %v3559, %v3253
        %v3562 = vmax.f32 %v3560, %v3255
        %v3563 = vmax.f32 %v3561, %v3258
        %v3564 = vmax.f32 %v3562, %v3260
        %v3565 = vmax.f32 %v3563, %v3263
        %v3566 = vmax.f32 %v3564, %v3265
        %v3567 = vmax.f32 %v3565, %v3268
        %v3568 = vmax.f32 %v3566, %v3270
        %v3569 = vmax.f32 %v3567, %v3273
        %v3570 = vmax.f32 %v3568, %v3275
        %v3571 = vmax.f32 %v3569, %v3278
        %v3572 = vmax.f32 %v3570, %v3280
        %v3573 = vmax.f32 %v3571, %v3283
        %v3574 = vmax.f32 %v3572, %v3285
        %v3575 = vmax.f32 %v3573, %v3288
        %v3576 = vmax.f32 %v3574, %v3290
        %v3577 = vmax.f32 %v3575, %v3293
        %v3578 = vmax.f32 %v3576, %v3295
        %v3579 = vmax.f32 %v3577, %v3298
        %v3580 = vmax.f32 %v3578, %v3300
        %v3581 = vmax.f32 %v3579, %v3303
        %v3582 = vmax.f32 %v3580, %v3305
        %v3583 = vmax.f32 %v3581, %v3308
        %v3584 = vmax.f32 %v3582, %v3310
        %v3585 = vmax.f32 %v3583, %v3313
        %v3586 = vmax.f32 %v3584, %v3315
        %v3587 = vmax.f32 %v3585, %v3318
        %v3588 = vmax.f32 %v3586, %v3320
        %v3589 = vmax.f32 %v3587, %v3323
        %v3590 = vmax.f32 %v3588, %v3325
        %v3591 = vmax.f32 %v3589, %v3328
        %v3592 = vmax.f32 %v3590, %v3330
        %v3593 = vmax.f32 %v3591, %v3333
        %v3594 = vmax.f32 %v3592, %v3335
        %v3595 = vmax.f32 %v3593, %v3338
        %v3596 = vmax.f32 %v3594, %v3340
        %v3597 = vmax.f32 %v3595, %v3343
        %v3598 = vmax.f32 %v3596, %v3345
        %v3599 = vmax.f32 %v3597, %v3348
        %v3600 = vmax.f32 %v3598, %v3350
        %v3601 = vmax.f32 %v3599, %v3353
        %v3602 = vmax.f32 %v3600, %v3355
        %v3603 = vmax.f32 %v3601, %v3358
        %v3604 = vmax.f32 %v3602, %v3360
        %v3605 = vmax.f32 %v3603, %v3363
        %v3606 = vmax.f32 %v3604, %v3365
        %v3607 = vmax.f32 %v3605, %v3368
        %v3608 = vmax.f32 %v3606, %v3370
        %v3609 = vmax.f32 %v3607, %v3373
        %v3610 = vmax.f32 %v3608, %v3375
        %v3611 = vmax.f32 %v3609, %v3378
        %v3612 = vmax.f32 %v3610, %v3380
        %v3613 = vmax.f32 %v3611, %v3612
        %v3614 = vmax.f32 %v3392, %v3397
        %v3615 = vmax.f32 %v3394, %v3399
        %v3616 = vmax.f32 %v3614, %v3402
        %v3617 = vmax.f32 %v3615, %v3404
        %v3618 = vmax.f32 %v3616, %v3407
        %v3619 = vmax.f32 %v3617, %v3409
        %v3620 = vmax.f32 %v3618, %v3412
        %v3621 = vmax.f32 %v3619, %v3414
        %v3622 = vmax.f32 %v3620, %v3417
        %v3623 = vmax.f32 %v3621, %v3419
        %v3624 = vmax.f32 %v3622, %v3422
        %v3625 = vmax.f32 %v3623, %v3424
        %v3626 = vmax.f32 %v3624, %v3427
        %v3627 = vmax.f32 %v3625, %v3429
        %v3628 = vmax.f32 %v3626, %v3432
        %v3629 = vmax.f32 %v3627, %v3434
        %v3630 = vmax.f32 %v3628, %v3437
        %v3631 = vmax.f32 %v3629, %v3439
        %v3632 = vmax.f32 %v3630, %v3442
        %v3633 = vmax.f32 %v3631, %v3444
        %v3634 = vmax.f32 %v3632, %v3447
        %v3635 = vmax.f32 %v3633, %v3449
        %v3636 = vmax.f32 %v3634, %v3452
        %v3637 = vmax.f32 %v3635, %v3454
        %v3638 = vmax.f32 %v3636, %v3457
        %v3639 = vmax.f32 %v3637, %v3459
        %v3640 = vmax.f32 %v3638, %v3462
        %v3641 = vmax.f32 %v3639, %v3464
        %v3642 = vmax.f32 %v3640, %v3467
        %v3643 = vmax.f32 %v3641, %v3469
        %v3644 = vmax.f32 %v3642, %v3472
        %v3645 = vmax.f32 %v3643, %v3474
        %v3646 = vmax.f32 %v3644, %v3477
        %v3647 = vmax.f32 %v3645, %v3479
        %v3648 = vmax.f32 %v3646, %v3482
        %v3649 = vmax.f32 %v3647, %v3484
        %v3650 = vmax.f32 %v3648, %v3487
        %v3651 = vmax.f32 %v3649, %v3489
        %v3652 = vmax.f32 %v3650, %v3492
        %v3653 = vmax.f32 %v3651, %v3494
        %v3654 = vmax.f32 %v3652, %v3497
        %v3655 = vmax.f32 %v3653, %v3499
        %v3656 = vmax.f32 %v3654, %v3502
        %v3657 = vmax.f32 %v3655, %v3504
        %v3658 = vmax.f32 %v3656, %v3507
        %v3659 = vmax.f32 %v3657, %v3509
        %v3660 = vmax.f32 %v3658, %v3512
        %v3661 = vmax.f32 %v3659, %v3514
        %v3662 = vmax.f32 %v3660, %v3517
        %v3663 = vmax.f32 %v3661, %v3519
        %v3664 = vmax.f32 %v3662, %v3522
        %v3665 = vmax.f32 %v3663, %v3524
        %v3666 = vmax.f32 %v3664, %v3527
        %v3667 = vmax.f32 %v3665, %v3529
        %v3668 = vmax.f32 %v3666, %v3532
        %v3669 = vmax.f32 %v3667, %v3534
        %v3670 = vmax.f32 %v3668, %v3537
        %v3671 = vmax.f32 %v3669, %v3539
        %v3672 = vmax.f32 %v3670, %v3542
        %v3673 = vmax.f32 %v3671, %v3544
        %v3674 = vmax.f32 %v3672, %v3547
        %v3675 = vmax.f32 %v3673, %v3549
        %v3676 = vmax.f32 %v3674, %v3675
        %v3677 = vld [vmem:[#allocation2 + $0x30] sm:$0xff]
        %v3678 = vld [vmem:[#allocation2 + $0x38] sm:$0xff]
        %v3679 = vmax.f32 %v3677, %v3613
        %v3680 = vmax.f32 %v3678, %v3676
        %3681 = vst [vmem:[#allocation2 + $0x30] sm:$0xff] %v3679
        %3682 = vst [vmem:[#allocation2 + $0x38] sm:$0xff] %v3680
        %p3683 = scmp.eq.s32.totalorder %s34, 1
        // Predicated region
        $region97: #{stnkd_forward.1} parent=71 // pred_check
          %p3684 = pneg %p3683
        $region98: #{stnkd_forward.1} parent=71 // pred_check_branch
          %3686 = sbr.rel (%p3684) target = $region100
        $region99: #{stnkd_forward.1} parent=71 // pred_region
          %v3687 = vld [vmem:[#allocation2] sm:$0xff]
          %v3688 = vld [vmem:[#allocation2 + $0x8] sm:$0xff]
          %v3689 = vld [vmem:[#allocation2 + $0x10] sm:$0xff]
          %v3690 = vld [vmem:[#allocation2 + $0x18] sm:$0xff]
          %v3691 = vld [vmem:[#allocation2 + $0x20] sm:$0xff]
          %v3692 = vld [vmem:[#allocation2 + $0x28] sm:$0xff]
          %v3693 = vld [vmem:[#allocation2 + $0x30] sm:$0xff]
          %v3694 = vld [vmem:[#allocation2 + $0x38] sm:$0xff]
          %v3695 = vrot.slane %v3687, 4
          %v3696 = vmax.f32 %v3687, %v3695
          %v3697 = vrot.slane %v3696, 2
          %v3698 = vmax.f32 %v3696, %v3697
          %v3699 = vrot.slane %v3698, 1
          %v3700 = vmax.f32 %v3698, %v3699
          %v3701 = vrot.slane %v3688, 4
          %v3702 = vmax.f32 %v3688, %v3701
          %v3703 = vrot.slane %v3702, 2
          %v3704 = vmax.f32 %v3702, %v3703
          %v3705 = vrot.slane %v3704, 1
          %v3706 = vmax.f32 %v3704, %v3705
          %v3707 = vrot.slane %v3689, 4
          %v3708 = vmax.f32 %v3689, %v3707
          %v3709 = vrot.slane %v3708, 2
          %v3710 = vmax.f32 %v3708, %v3709
          %v3711 = vrot.slane %v3710, 1
          %v3712 = vmax.f32 %v3710, %v3711
          %v3713 = vrot.slane %v3690, 4
          %v3714 = vmax.f32 %v3690, %v3713
          %v3715 = vrot.slane %v3714, 2
          %v3716 = vmax.f32 %v3714, %v3715
          %v3717 = vrot.slane %v3716, 1
          %v3718 = vmax.f32 %v3716, %v3717
          %v3719 = vrot.slane %v3691, 4
          %v3720 = vmax.f32 %v3691, %v3719
          %v3721 = vrot.slane %v3720, 2
          %v3722 = vmax.f32 %v3720, %v3721
          %v3723 = vrot.slane %v3722, 1
          %v3724 = vmax.f32 %v3722, %v3723
          %v3725 = vrot.slane %v3692, 4
          %v3726 = vmax.f32 %v3692, %v3725
          %v3727 = vrot.slane %v3726, 2
          %v3728 = vmax.f32 %v3726, %v3727
          %v3729 = vrot.slane %v3728, 1
          %v3730 = vmax.f32 %v3728, %v3729
          %v3731 = vrot.slane %v3693, 4
          %v3732 = vmax.f32 %v3693, %v3731
          %v3733 = vrot.slane %v3732, 2
          %v3734 = vmax.f32 %v3732, %v3733
          %v3735 = vrot.slane %v3734, 1
          %v3736 = vmax.f32 %v3734, %v3735
          %v3737 = vrot.slane %v3694, 4
          %v3738 = vmax.f32 %v3694, %v3737
          %v3739 = vrot.slane %v3738, 2
          %v3740 = vmax.f32 %v3738, %v3739
          %v3741 = vrot.slane %v3740, 1
          %v3742 = vmax.f32 %v3740, %v3741
          %v3743 = vld [vmem:[%s6] sm:$0xff]
          %v3745 = vperm.slane %v3743, 0
          %v3746 = vperm.slane %v3743, 1
          %v3747 = vperm.slane %v3743, 2
          %v3748 = vperm.slane %v3743, 3
          %v3749 = vperm.slane %v3743, 4
          %v3750 = vperm.slane %v3743, 5
          %v3751 = vperm.slane %v3743, 6
          %v3752 = vperm.slane %v3743, 7
          %v3761 = vadd.f32 %v3700, %v3745
          %v3762 = vadd.f32 %v3706, %v3746
          %v3763 = vadd.f32 %v3712, %v3747
          %v3764 = vadd.f32 %v3718, %v3748
          %v3765 = vadd.f32 %v3724, %v3749
          %v3766 = vadd.f32 %v3730, %v3750
          %v3767 = vadd.f32 %v3736, %v3751
          %v3768 = vadd.f32 %v3742, %v3752
          %v3769 = vmax.f32 %v3761, 0.0
          %v3770 = vmax.f32 %v3762, 0.0
          %v3771 = vmax.f32 %v3763, 0.0
          %v3772 = vmax.f32 %v3764, 0.0
          %v3773 = vmax.f32 %v3765, 0.0
          %v3774 = vmax.f32 %v3766, 0.0
          %v3775 = vmax.f32 %v3767, 0.0
          %v3776 = vmax.f32 %v3768, 0.0
          %v3777 = vperm.slane %v3769, 0
          %v3778 = vperm.slane %v3770, 0
          %v3779 = vperm.slane %v3771, 0
          %v3780 = vperm.slane %v3772, 0
          %v3781 = vperm.slane %v3773, 0
          %v3782 = vperm.slane %v3774, 0
          %v3783 = vperm.slane %v3775, 0
          %v3784 = vperm.slane %v3776, 0
          %v3785 = vpack.c.bf16 %v3777, %v3777
          %v3786 = vpack.c.bf16 %v3778, %v3778
          %v3787 = vpack.c.bf16 %v3779, %v3779
          %v3788 = vpack.c.bf16 %v3780, %v3780
          %v3789 = vpack.c.bf16 %v3781, %v3781
          %v3790 = vpack.c.bf16 %v3782, %v3782
          %v3791 = vpack.c.bf16 %v3783, %v3783
          %v3792 = vpack.c.bf16 %v3784, %v3784
          %v3793 = vld [vmem:[#allocation7] sm:$0xff]
          %v3794 = vld [vmem:[#allocation7 + $0x8] sm:$0xff]
          %v3795 = vld [vmem:[#allocation7 + $0x10] sm:$0xff]
          %v3796 = vld [vmem:[#allocation7 + $0x18] sm:$0xff]
          %v3797 = vld [vmem:[#allocation7 + $0x20] sm:$0xff]
          %v3798 = vld [vmem:[#allocation7 + $0x28] sm:$0xff]
          %v3799 = vld [vmem:[#allocation7 + $0x30] sm:$0xff]
          %v3800 = vld [vmem:[#allocation7 + $0x38] sm:$0xff]
          %v3801 = vld [vmem:[#allocation7 + $0x40] sm:$0xff]
          %v3802 = vld [vmem:[#allocation7 + $0x48] sm:$0xff]
          %v3803 = vld [vmem:[#allocation7 + $0x50] sm:$0xff]
          %v3804 = vld [vmem:[#allocation7 + $0x58] sm:$0xff]
          %v3805 = vld [vmem:[#allocation7 + $0x60] sm:$0xff]
          %v3806 = vld [vmem:[#allocation7 + $0x68] sm:$0xff]
          %v3807 = vld [vmem:[#allocation7 + $0x70] sm:$0xff]
          %v3808 = vld [vmem:[#allocation7 + $0x78] sm:$0xff]
          %v3809 = vld [vmem:[#allocation7 + $0x80] sm:$0xff]
          %v3810 = vld [vmem:[#allocation7 + $0x88] sm:$0xff]
          %v3811 = vld [vmem:[#allocation7 + $0x90] sm:$0xff]
          %v3812 = vld [vmem:[#allocation7 + $0x98] sm:$0xff]
          %v3813 = vld [vmem:[#allocation7 + $0xa0] sm:$0xff]
          %v3814 = vld [vmem:[#allocation7 + $0xa8] sm:$0xff]
          %v3815 = vld [vmem:[#allocation7 + $0xb0] sm:$0xff]
          %v3816 = vld [vmem:[#allocation7 + $0xb8] sm:$0xff]
          %v3817 = vld [vmem:[#allocation7 + $0xc0] sm:$0xff]
          %v3818 = vld [vmem:[#allocation7 + $0xc8] sm:$0xff]
          %v3819 = vld [vmem:[#allocation7 + $0xd0] sm:$0xff]
          %v3820 = vld [vmem:[#allocation7 + $0xd8] sm:$0xff]
          %v3821 = vld [vmem:[#allocation7 + $0xe0] sm:$0xff]
          %v3822 = vld [vmem:[#allocation7 + $0xe8] sm:$0xff]
          %v3823 = vld [vmem:[#allocation7 + $0xf0] sm:$0xff]
          %v3824 = vld [vmem:[#allocation7 + $0xf8] sm:$0xff]
          %v3825 = vld [vmem:[#allocation7 + $0x100] sm:$0xff]
          %v3826 = vld [vmem:[#allocation7 + $0x108] sm:$0xff]
          %v3827 = vld [vmem:[#allocation7 + $0x110] sm:$0xff]
          %v3828 = vld [vmem:[#allocation7 + $0x118] sm:$0xff]
          %v3829 = vld [vmem:[#allocation7 + $0x120] sm:$0xff]
          %v3830 = vld [vmem:[#allocation7 + $0x128] sm:$0xff]
          %v3831 = vld [vmem:[#allocation7 + $0x130] sm:$0xff]
          %v3832 = vld [vmem:[#allocation7 + $0x138] sm:$0xff]
          %v3833 = vld [vmem:[#allocation7 + $0x140] sm:$0xff]
          %v3834 = vld [vmem:[#allocation7 + $0x148] sm:$0xff]
          %v3835 = vld [vmem:[#allocation7 + $0x150] sm:$0xff]
          %v3836 = vld [vmem:[#allocation7 + $0x158] sm:$0xff]
          %v3837 = vld [vmem:[#allocation7 + $0x160] sm:$0xff]
          %v3838 = vld [vmem:[#allocation7 + $0x168] sm:$0xff]
          %v3839 = vld [vmem:[#allocation7 + $0x170] sm:$0xff]
          %v3840 = vld [vmem:[#allocation7 + $0x178] sm:$0xff]
          %v3841 = vld [vmem:[#allocation7 + $0x180] sm:$0xff]
          %v3842 = vld [vmem:[#allocation7 + $0x188] sm:$0xff]
          %v3843 = vld [vmem:[#allocation7 + $0x190] sm:$0xff]
          %v3844 = vld [vmem:[#allocation7 + $0x198] sm:$0xff]
          %v3845 = vld [vmem:[#allocation7 + $0x1a0] sm:$0xff]
          %v3846 = vld [vmem:[#allocation7 + $0x1a8] sm:$0xff]
          %v3847 = vld [vmem:[#allocation7 + $0x1b0] sm:$0xff]
          %v3848 = vld [vmem:[#allocation7 + $0x1b8] sm:$0xff]
          %v3849 = vld [vmem:[#allocation7 + $0x1c0] sm:$0xff]
          %v3850 = vld [vmem:[#allocation7 + $0x1c8] sm:$0xff]
          %v3851 = vld [vmem:[#allocation7 + $0x1d0] sm:$0xff]
          %v3852 = vld [vmem:[#allocation7 + $0x1d8] sm:$0xff]
          %v3853 = vld [vmem:[#allocation7 + $0x1e0] sm:$0xff]
          %v3854 = vld [vmem:[#allocation7 + $0x1e8] sm:$0xff]
          %v3855 = vld [vmem:[#allocation7 + $0x1f0] sm:$0xff]
          %v3856 = vld [vmem:[#allocation7 + $0x1f8] sm:$0xff]
          %v3857 = vld [vmem:[#allocation7 + $0x200] sm:$0xff]
          %v3858 = vld [vmem:[#allocation7 + $0x208] sm:$0xff]
          %v3859 = vld [vmem:[#allocation7 + $0x210] sm:$0xff]
          %v3860 = vld [vmem:[#allocation7 + $0x218] sm:$0xff]
          %v3861 = vld [vmem:[#allocation7 + $0x220] sm:$0xff]
          %v3862 = vld [vmem:[#allocation7 + $0x228] sm:$0xff]
          %v3863 = vld [vmem:[#allocation7 + $0x230] sm:$0xff]
          %v3864 = vld [vmem:[#allocation7 + $0x238] sm:$0xff]
          %v3865 = vld [vmem:[#allocation7 + $0x240] sm:$0xff]
          %v3866 = vld [vmem:[#allocation7 + $0x248] sm:$0xff]
          %v3867 = vld [vmem:[#allocation7 + $0x250] sm:$0xff]
          %v3868 = vld [vmem:[#allocation7 + $0x258] sm:$0xff]
          %v3869 = vld [vmem:[#allocation7 + $0x260] sm:$0xff]
          %v3870 = vld [vmem:[#allocation7 + $0x268] sm:$0xff]
          %v3871 = vld [vmem:[#allocation7 + $0x270] sm:$0xff]
          %v3872 = vld [vmem:[#allocation7 + $0x278] sm:$0xff]
          %v3873 = vld [vmem:[#allocation7 + $0x280] sm:$0xff]
          %v3874 = vld [vmem:[#allocation7 + $0x288] sm:$0xff]
          %v3875 = vld [vmem:[#allocation7 + $0x290] sm:$0xff]
          %v3876 = vld [vmem:[#allocation7 + $0x298] sm:$0xff]
          %v3877 = vld [vmem:[#allocation7 + $0x2a0] sm:$0xff]
          %v3878 = vld [vmem:[#allocation7 + $0x2a8] sm:$0xff]
          %v3879 = vld [vmem:[#allocation7 + $0x2b0] sm:$0xff]
          %v3880 = vld [vmem:[#allocation7 + $0x2b8] sm:$0xff]
          %v3881 = vld [vmem:[#allocation7 + $0x2c0] sm:$0xff]
          %v3882 = vld [vmem:[#allocation7 + $0x2c8] sm:$0xff]
          %v3883 = vld [vmem:[#allocation7 + $0x2d0] sm:$0xff]
          %v3884 = vld [vmem:[#allocation7 + $0x2d8] sm:$0xff]
          %v3885 = vld [vmem:[#allocation7 + $0x2e0] sm:$0xff]
          %v3886 = vld [vmem:[#allocation7 + $0x2e8] sm:$0xff]
          %v3887 = vld [vmem:[#allocation7 + $0x2f0] sm:$0xff]
          %v3888 = vld [vmem:[#allocation7 + $0x2f8] sm:$0xff]
          %v3889 = vld [vmem:[#allocation7 + $0x300] sm:$0xff]
          %v3890 = vld [vmem:[#allocation7 + $0x308] sm:$0xff]
          %v3891 = vld [vmem:[#allocation7 + $0x310] sm:$0xff]
          %v3892 = vld [vmem:[#allocation7 + $0x318] sm:$0xff]
          %v3893 = vld [vmem:[#allocation7 + $0x320] sm:$0xff]
          %v3894 = vld [vmem:[#allocation7 + $0x328] sm:$0xff]
          %v3895 = vld [vmem:[#allocation7 + $0x330] sm:$0xff]
          %v3896 = vld [vmem:[#allocation7 + $0x338] sm:$0xff]
          %v3897 = vld [vmem:[#allocation7 + $0x340] sm:$0xff]
          %v3898 = vld [vmem:[#allocation7 + $0x348] sm:$0xff]
          %v3899 = vld [vmem:[#allocation7 + $0x350] sm:$0xff]
          %v3900 = vld [vmem:[#allocation7 + $0x358] sm:$0xff]
          %v3901 = vld [vmem:[#allocation7 + $0x360] sm:$0xff]
          %v3902 = vld [vmem:[#allocation7 + $0x368] sm:$0xff]
          %v3903 = vld [vmem:[#allocation7 + $0x370] sm:$0xff]
          %v3904 = vld [vmem:[#allocation7 + $0x378] sm:$0xff]
          %v3905 = vld [vmem:[#allocation7 + $0x380] sm:$0xff]
          %v3906 = vld [vmem:[#allocation7 + $0x388] sm:$0xff]
          %v3907 = vld [vmem:[#allocation7 + $0x390] sm:$0xff]
          %v3908 = vld [vmem:[#allocation7 + $0x398] sm:$0xff]
          %v3909 = vld [vmem:[#allocation7 + $0x3a0] sm:$0xff]
          %v3910 = vld [vmem:[#allocation7 + $0x3a8] sm:$0xff]
          %v3911 = vld [vmem:[#allocation7 + $0x3b0] sm:$0xff]
          %v3912 = vld [vmem:[#allocation7 + $0x3b8] sm:$0xff]
          %v3913 = vld [vmem:[#allocation7 + $0x3c0] sm:$0xff]
          %v3914 = vld [vmem:[#allocation7 + $0x3c8] sm:$0xff]
          %v3915 = vld [vmem:[#allocation7 + $0x3d0] sm:$0xff]
          %v3916 = vld [vmem:[#allocation7 + $0x3d8] sm:$0xff]
          %v3917 = vld [vmem:[#allocation7 + $0x3e0] sm:$0xff]
          %v3918 = vld [vmem:[#allocation7 + $0x3e8] sm:$0xff]
          %v3919 = vld [vmem:[#allocation7 + $0x3f0] sm:$0xff]
          %v3920 = vld [vmem:[#allocation7 + $0x3f8] sm:$0xff]
          %v3921 = vld [vmem:[#allocation7 + $0x400] sm:$0xff]
          %v3922 = vld [vmem:[#allocation7 + $0x408] sm:$0xff]
          %v3923 = vld [vmem:[#allocation7 + $0x410] sm:$0xff]
          %v3924 = vld [vmem:[#allocation7 + $0x418] sm:$0xff]
          %v3925 = vld [vmem:[#allocation7 + $0x420] sm:$0xff]
          %v3926 = vld [vmem:[#allocation7 + $0x428] sm:$0xff]
          %v3927 = vld [vmem:[#allocation7 + $0x430] sm:$0xff]
          %v3928 = vld [vmem:[#allocation7 + $0x438] sm:$0xff]
          %v3929 = vld [vmem:[#allocation7 + $0x440] sm:$0xff]
          %v3930 = vld [vmem:[#allocation7 + $0x448] sm:$0xff]
          %v3931 = vld [vmem:[#allocation7 + $0x450] sm:$0xff]
          %v3932 = vld [vmem:[#allocation7 + $0x458] sm:$0xff]
          %v3933 = vld [vmem:[#allocation7 + $0x460] sm:$0xff]
          %v3934 = vld [vmem:[#allocation7 + $0x468] sm:$0xff]
          %v3935 = vld [vmem:[#allocation7 + $0x470] sm:$0xff]
          %v3936 = vld [vmem:[#allocation7 + $0x478] sm:$0xff]
          %v3937 = vld [vmem:[#allocation7 + $0x480] sm:$0xff]
          %v3938 = vld [vmem:[#allocation7 + $0x488] sm:$0xff]
          %v3939 = vld [vmem:[#allocation7 + $0x490] sm:$0xff]
          %v3940 = vld [vmem:[#allocation7 + $0x498] sm:$0xff]
          %v3941 = vld [vmem:[#allocation7 + $0x4a0] sm:$0xff]
          %v3942 = vld [vmem:[#allocation7 + $0x4a8] sm:$0xff]
          %v3943 = vld [vmem:[#allocation7 + $0x4b0] sm:$0xff]
          %v3944 = vld [vmem:[#allocation7 + $0x4b8] sm:$0xff]
          %v3945 = vld [vmem:[#allocation7 + $0x4c0] sm:$0xff]
          %v3946 = vld [vmem:[#allocation7 + $0x4c8] sm:$0xff]
          %v3947 = vld [vmem:[#allocation7 + $0x4d0] sm:$0xff]
          %v3948 = vld [vmem:[#allocation7 + $0x4d8] sm:$0xff]
          %v3949 = vld [vmem:[#allocation7 + $0x4e0] sm:$0xff]
          %v3950 = vld [vmem:[#allocation7 + $0x4e8] sm:$0xff]
          %v3951 = vld [vmem:[#allocation7 + $0x4f0] sm:$0xff]
          %v3952 = vld [vmem:[#allocation7 + $0x4f8] sm:$0xff]
          %v3953 = vld [vmem:[#allocation7 + $0x500] sm:$0xff]
          %v3954 = vld [vmem:[#allocation7 + $0x508] sm:$0xff]
          %v3955 = vld [vmem:[#allocation7 + $0x510] sm:$0xff]
          %v3956 = vld [vmem:[#allocation7 + $0x518] sm:$0xff]
          %v3957 = vld [vmem:[#allocation7 + $0x520] sm:$0xff]
          %v3958 = vld [vmem:[#allocation7 + $0x528] sm:$0xff]
          %v3959 = vld [vmem:[#allocation7 + $0x530] sm:$0xff]
          %v3960 = vld [vmem:[#allocation7 + $0x538] sm:$0xff]
          %v3961 = vld [vmem:[#allocation7 + $0x540] sm:$0xff]
          %v3962 = vld [vmem:[#allocation7 + $0x548] sm:$0xff]
          %v3963 = vld [vmem:[#allocation7 + $0x550] sm:$0xff]
          %v3964 = vld [vmem:[#allocation7 + $0x558] sm:$0xff]
          %v3965 = vld [vmem:[#allocation7 + $0x560] sm:$0xff]
          %v3966 = vld [vmem:[#allocation7 + $0x568] sm:$0xff]
          %v3967 = vld [vmem:[#allocation7 + $0x570] sm:$0xff]
          %v3968 = vld [vmem:[#allocation7 + $0x578] sm:$0xff]
          %v3969 = vld [vmem:[#allocation7 + $0x580] sm:$0xff]
          %v3970 = vld [vmem:[#allocation7 + $0x588] sm:$0xff]
          %v3971 = vld [vmem:[#allocation7 + $0x590] sm:$0xff]
          %v3972 = vld [vmem:[#allocation7 + $0x598] sm:$0xff]
          %v3973 = vld [vmem:[#allocation7 + $0x5a0] sm:$0xff]
          %v3974 = vld [vmem:[#allocation7 + $0x5a8] sm:$0xff]
          %v3975 = vld [vmem:[#allocation7 + $0x5b0] sm:$0xff]
          %v3976 = vld [vmem:[#allocation7 + $0x5b8] sm:$0xff]
          %v3977 = vld [vmem:[#allocation7 + $0x5c0] sm:$0xff]
          %v3978 = vld [vmem:[#allocation7 + $0x5c8] sm:$0xff]
          %v3979 = vld [vmem:[#allocation7 + $0x5d0] sm:$0xff]
          %v3980 = vld [vmem:[#allocation7 + $0x5d8] sm:$0xff]
          %v3981 = vld [vmem:[#allocation7 + $0x5e0] sm:$0xff]
          %v3982 = vld [vmem:[#allocation7 + $0x5e8] sm:$0xff]
          %v3983 = vld [vmem:[#allocation7 + $0x5f0] sm:$0xff]
          %v3984 = vld [vmem:[#allocation7 + $0x5f8] sm:$0xff]
          %v3985 = vld [vmem:[#allocation7 + $0x600] sm:$0xff]
          %v3986 = vld [vmem:[#allocation7 + $0x608] sm:$0xff]
          %v3987 = vld [vmem:[#allocation7 + $0x610] sm:$0xff]
          %v3988 = vld [vmem:[#allocation7 + $0x618] sm:$0xff]
          %v3989 = vld [vmem:[#allocation7 + $0x620] sm:$0xff]
          %v3990 = vld [vmem:[#allocation7 + $0x628] sm:$0xff]
          %v3991 = vld [vmem:[#allocation7 + $0x630] sm:$0xff]
          %v3992 = vld [vmem:[#allocation7 + $0x638] sm:$0xff]
          %v3993 = vld [vmem:[#allocation7 + $0x640] sm:$0xff]
          %v3994 = vld [vmem:[#allocation7 + $0x648] sm:$0xff]
          %v3995 = vld [vmem:[#allocation7 + $0x650] sm:$0xff]
          %v3996 = vld [vmem:[#allocation7 + $0x658] sm:$0xff]
          %v3997 = vld [vmem:[#allocation7 + $0x660] sm:$0xff]
          %v3998 = vld [vmem:[#allocation7 + $0x668] sm:$0xff]
          %v3999 = vld [vmem:[#allocation7 + $0x670] sm:$0xff]
          %v4000 = vld [vmem:[#allocation7 + $0x678] sm:$0xff]
          %v4001 = vld [vmem:[#allocation7 + $0x680] sm:$0xff]
          %v4002 = vld [vmem:[#allocation7 + $0x688] sm:$0xff]
          %v4003 = vld [vmem:[#allocation7 + $0x690] sm:$0xff]
          %v4004 = vld [vmem:[#allocation7 + $0x698] sm:$0xff]
          %v4005 = vld [vmem:[#allocation7 + $0x6a0] sm:$0xff]
          %v4006 = vld [vmem:[#allocation7 + $0x6a8] sm:$0xff]
          %v4007 = vld [vmem:[#allocation7 + $0x6b0] sm:$0xff]
          %v4008 = vld [vmem:[#allocation7 + $0x6b8] sm:$0xff]
          %v4009 = vld [vmem:[#allocation7 + $0x6c0] sm:$0xff]
          %v4010 = vld [vmem:[#allocation7 + $0x6c8] sm:$0xff]
          %v4011 = vld [vmem:[#allocation7 + $0x6d0] sm:$0xff]
          %v4012 = vld [vmem:[#allocation7 + $0x6d8] sm:$0xff]
          %v4013 = vld [vmem:[#allocation7 + $0x6e0] sm:$0xff]
          %v4014 = vld [vmem:[#allocation7 + $0x6e8] sm:$0xff]
          %v4015 = vld [vmem:[#allocation7 + $0x6f0] sm:$0xff]
          %v4016 = vld [vmem:[#allocation7 + $0x6f8] sm:$0xff]
          %v4017 = vld [vmem:[#allocation7 + $0x700] sm:$0xff]
          %v4018 = vld [vmem:[#allocation7 + $0x708] sm:$0xff]
          %v4019 = vld [vmem:[#allocation7 + $0x710] sm:$0xff]
          %v4020 = vld [vmem:[#allocation7 + $0x718] sm:$0xff]
          %v4021 = vld [vmem:[#allocation7 + $0x720] sm:$0xff]
          %v4022 = vld [vmem:[#allocation7 + $0x728] sm:$0xff]
          %v4023 = vld [vmem:[#allocation7 + $0x730] sm:$0xff]
          %v4024 = vld [vmem:[#allocation7 + $0x738] sm:$0xff]
          %v4025 = vld [vmem:[#allocation7 + $0x740] sm:$0xff]
          %v4026 = vld [vmem:[#allocation7 + $0x748] sm:$0xff]
          %v4027 = vld [vmem:[#allocation7 + $0x750] sm:$0xff]
          %v4028 = vld [vmem:[#allocation7 + $0x758] sm:$0xff]
          %v4029 = vld [vmem:[#allocation7 + $0x760] sm:$0xff]
          %v4030 = vld [vmem:[#allocation7 + $0x768] sm:$0xff]
          %v4031 = vld [vmem:[#allocation7 + $0x770] sm:$0xff]
          %v4032 = vld [vmem:[#allocation7 + $0x778] sm:$0xff]
          %v4033 = vld [vmem:[#allocation7 + $0x780] sm:$0xff]
          %v4034 = vld [vmem:[#allocation7 + $0x788] sm:$0xff]
          %v4035 = vld [vmem:[#allocation7 + $0x790] sm:$0xff]
          %v4036 = vld [vmem:[#allocation7 + $0x798] sm:$0xff]
          %v4037 = vld [vmem:[#allocation7 + $0x7a0] sm:$0xff]
          %v4038 = vld [vmem:[#allocation7 + $0x7a8] sm:$0xff]
          %v4039 = vld [vmem:[#allocation7 + $0x7b0] sm:$0xff]
          %v4040 = vld [vmem:[#allocation7 + $0x7b8] sm:$0xff]
          %v4041 = vld [vmem:[#allocation7 + $0x7c0] sm:$0xff]
          %v4042 = vld [vmem:[#allocation7 + $0x7c8] sm:$0xff]
          %v4043 = vld [vmem:[#allocation7 + $0x7d0] sm:$0xff]
          %v4044 = vld [vmem:[#allocation7 + $0x7d8] sm:$0xff]
          %v4045 = vld [vmem:[#allocation7 + $0x7e0] sm:$0xff]
          %v4046 = vld [vmem:[#allocation7 + $0x7e8] sm:$0xff]
          %v4047 = vld [vmem:[#allocation7 + $0x7f0] sm:$0xff]
          %v4048 = vld [vmem:[#allocation7 + $0x7f8] sm:$0xff]
          %v4049 = vld [vmem:[%s8] sm:$0xf]
          %v4051 = vperm.slane %v4049, 0
          %v4052 = vperm.slane %v4049, 1
          %v4053 = vperm.slane %v4049, 2
          %v4054 = vperm.slane %v4049, 3
          %v4315 = vunpack.c.l.b16 %v3793
          %v4316 = vunpack.c.h.b16 %v3793
          %v4317 = vunpack.c.l.b16 %v3794
          %v4318 = vunpack.c.h.b16 %v3794
          %v4319 = vunpack.c.l.b16 %v3795
          %v4320 = vunpack.c.h.b16 %v3795
          %v4321 = vunpack.c.l.b16 %v3796
          %v4322 = vunpack.c.h.b16 %v3796
          %v4323 = vunpack.c.l.b16 %v3797
          %v4324 = vunpack.c.h.b16 %v3797
          %v4325 = vunpack.c.l.b16 %v3798
          %v4326 = vunpack.c.h.b16 %v3798
          %v4327 = vunpack.c.l.b16 %v3799
          %v4328 = vunpack.c.h.b16 %v3799
          %v4329 = vunpack.c.l.b16 %v3800
          %v4330 = vunpack.c.h.b16 %v3800
          %v4331 = vunpack.c.l.b16 %v3801
          %v4332 = vunpack.c.h.b16 %v3801
          %v4333 = vunpack.c.l.b16 %v3802
          %v4334 = vunpack.c.h.b16 %v3802
          %v4335 = vunpack.c.l.b16 %v3803
          %v4336 = vunpack.c.h.b16 %v3803
          %v4337 = vunpack.c.l.b16 %v3804
          %v4338 = vunpack.c.h.b16 %v3804
          %v4339 = vunpack.c.l.b16 %v3805
          %v4340 = vunpack.c.h.b16 %v3805
          %v4341 = vunpack.c.l.b16 %v3806
          %v4342 = vunpack.c.h.b16 %v3806
          %v4343 = vunpack.c.l.b16 %v3807
          %v4344 = vunpack.c.h.b16 %v3807
          %v4345 = vunpack.c.l.b16 %v3808
          %v4346 = vunpack.c.h.b16 %v3808
          %v4347 = vunpack.c.l.b16 %v3809
          %v4348 = vunpack.c.h.b16 %v3809
          %v4349 = vunpack.c.l.b16 %v3810
          %v4350 = vunpack.c.h.b16 %v3810
          %v4351 = vunpack.c.l.b16 %v3811
          %v4352 = vunpack.c.h.b16 %v3811
          %v4353 = vunpack.c.l.b16 %v3812
          %v4354 = vunpack.c.h.b16 %v3812
          %v4355 = vunpack.c.l.b16 %v3813
          %v4356 = vunpack.c.h.b16 %v3813
          %v4357 = vunpack.c.l.b16 %v3814
          %v4358 = vunpack.c.h.b16 %v3814
          %v4359 = vunpack.c.l.b16 %v3815
          %v4360 = vunpack.c.h.b16 %v3815
          %v4361 = vunpack.c.l.b16 %v3816
          %v4362 = vunpack.c.h.b16 %v3816
          %v4363 = vunpack.c.l.b16 %v3817
          %v4364 = vunpack.c.h.b16 %v3817
          %v4365 = vunpack.c.l.b16 %v3818
          %v4366 = vunpack.c.h.b16 %v3818
          %v4367 = vunpack.c.l.b16 %v3819
          %v4368 = vunpack.c.h.b16 %v3819
          %v4369 = vunpack.c.l.b16 %v3820
          %v4370 = vunpack.c.h.b16 %v3820
          %v4371 = vunpack.c.l.b16 %v3821
          %v4372 = vunpack.c.h.b16 %v3821
          %v4373 = vunpack.c.l.b16 %v3822
          %v4374 = vunpack.c.h.b16 %v3822
          %v4375 = vunpack.c.l.b16 %v3823
          %v4376 = vunpack.c.h.b16 %v3823
          %v4377 = vunpack.c.l.b16 %v3824
          %v4378 = vunpack.c.h.b16 %v3824
          %v4379 = vunpack.c.l.b16 %v3825
          %v4380 = vunpack.c.h.b16 %v3825
          %v4381 = vunpack.c.l.b16 %v3826
          %v4382 = vunpack.c.h.b16 %v3826
          %v4383 = vunpack.c.l.b16 %v3827
          %v4384 = vunpack.c.h.b16 %v3827
          %v4385 = vunpack.c.l.b16 %v3828
          %v4386 = vunpack.c.h.b16 %v3828
          %v4387 = vunpack.c.l.b16 %v3829
          %v4388 = vunpack.c.h.b16 %v3829
          %v4389 = vunpack.c.l.b16 %v3830
          %v4390 = vunpack.c.h.b16 %v3830
          %v4391 = vunpack.c.l.b16 %v3831
          %v4392 = vunpack.c.h.b16 %v3831
          %v4393 = vunpack.c.l.b16 %v3832
          %v4394 = vunpack.c.h.b16 %v3832
          %v4395 = vunpack.c.l.b16 %v3833
          %v4396 = vunpack.c.h.b16 %v3833
          %v4397 = vunpack.c.l.b16 %v3834
          %v4398 = vunpack.c.h.b16 %v3834
          %v4399 = vunpack.c.l.b16 %v3835
          %v4400 = vunpack.c.h.b16 %v3835
          %v4401 = vunpack.c.l.b16 %v3836
          %v4402 = vunpack.c.h.b16 %v3836
          %v4403 = vunpack.c.l.b16 %v3837
          %v4404 = vunpack.c.h.b16 %v3837
          %v4405 = vunpack.c.l.b16 %v3838
          %v4406 = vunpack.c.h.b16 %v3838
          %v4407 = vunpack.c.l.b16 %v3839
          %v4408 = vunpack.c.h.b16 %v3839
          %v4409 = vunpack.c.l.b16 %v3840
          %v4410 = vunpack.c.h.b16 %v3840
          %v4411 = vunpack.c.l.b16 %v3841
          %v4412 = vunpack.c.h.b16 %v3841
          %v4413 = vunpack.c.l.b16 %v3842
          %v4414 = vunpack.c.h.b16 %v3842
          %v4415 = vunpack.c.l.b16 %v3843
          %v4416 = vunpack.c.h.b16 %v3843
          %v4417 = vunpack.c.l.b16 %v3844
          %v4418 = vunpack.c.h.b16 %v3844
          %v4419 = vunpack.c.l.b16 %v3845
          %v4420 = vunpack.c.h.b16 %v3845
          %v4421 = vunpack.c.l.b16 %v3846
          %v4422 = vunpack.c.h.b16 %v3846
          %v4423 = vunpack.c.l.b16 %v3847
          %v4424 = vunpack.c.h.b16 %v3847
          %v4425 = vunpack.c.l.b16 %v3848
          %v4426 = vunpack.c.h.b16 %v3848
          %v4427 = vunpack.c.l.b16 %v3849
          %v4428 = vunpack.c.h.b16 %v3849
          %v4429 = vunpack.c.l.b16 %v3850
          %v4430 = vunpack.c.h.b16 %v3850
          %v4431 = vunpack.c.l.b16 %v3851
          %v4432 = vunpack.c.h.b16 %v3851
          %v4433 = vunpack.c.l.b16 %v3852
          %v4434 = vunpack.c.h.b16 %v3852
          %v4435 = vunpack.c.l.b16 %v3853
          %v4436 = vunpack.c.h.b16 %v3853
          %v4437 = vunpack.c.l.b16 %v3854
          %v4438 = vunpack.c.h.b16 %v3854
          %v4439 = vunpack.c.l.b16 %v3855
          %v4440 = vunpack.c.h.b16 %v3855
          %v4441 = vunpack.c.l.b16 %v3856
          %v4442 = vunpack.c.h.b16 %v3856
          %v4443 = vunpack.c.l.b16 %v3857
          %v4444 = vunpack.c.h.b16 %v3857
          %v4445 = vunpack.c.l.b16 %v3858
          %v4446 = vunpack.c.h.b16 %v3858
          %v4447 = vunpack.c.l.b16 %v3859
          %v4448 = vunpack.c.h.b16 %v3859
          %v4449 = vunpack.c.l.b16 %v3860
          %v4450 = vunpack.c.h.b16 %v3860
          %v4451 = vunpack.c.l.b16 %v3861
          %v4452 = vunpack.c.h.b16 %v3861
          %v4453 = vunpack.c.l.b16 %v3862
          %v4454 = vunpack.c.h.b16 %v3862
          %v4455 = vunpack.c.l.b16 %v3863
          %v4456 = vunpack.c.h.b16 %v3863
          %v4457 = vunpack.c.l.b16 %v3864
          %v4458 = vunpack.c.h.b16 %v3864
          %v4459 = vunpack.c.l.b16 %v3865
          %v4460 = vunpack.c.h.b16 %v3865
          %v4461 = vunpack.c.l.b16 %v3866
          %v4462 = vunpack.c.h.b16 %v3866
          %v4463 = vunpack.c.l.b16 %v3867
          %v4464 = vunpack.c.h.b16 %v3867
          %v4465 = vunpack.c.l.b16 %v3868
          %v4466 = vunpack.c.h.b16 %v3868
          %v4467 = vunpack.c.l.b16 %v3869
          %v4468 = vunpack.c.h.b16 %v3869
          %v4469 = vunpack.c.l.b16 %v3870
          %v4470 = vunpack.c.h.b16 %v3870
          %v4471 = vunpack.c.l.b16 %v3871
          %v4472 = vunpack.c.h.b16 %v3871
          %v4473 = vunpack.c.l.b16 %v3872
          %v4474 = vunpack.c.h.b16 %v3872
          %v4475 = vunpack.c.l.b16 %v3873
          %v4476 = vunpack.c.h.b16 %v3873
          %v4477 = vunpack.c.l.b16 %v3874
          %v4478 = vunpack.c.h.b16 %v3874
          %v4479 = vunpack.c.l.b16 %v3875
          %v4480 = vunpack.c.h.b16 %v3875
          %v4481 = vunpack.c.l.b16 %v3876
          %v4482 = vunpack.c.h.b16 %v3876
          %v4483 = vunpack.c.l.b16 %v3877
          %v4484 = vunpack.c.h.b16 %v3877
          %v4485 = vunpack.c.l.b16 %v3878
          %v4486 = vunpack.c.h.b16 %v3878
          %v4487 = vunpack.c.l.b16 %v3879
          %v4488 = vunpack.c.h.b16 %v3879
          %v4489 = vunpack.c.l.b16 %v3880
          %v4490 = vunpack.c.h.b16 %v3880
          %v4491 = vunpack.c.l.b16 %v3881
          %v4492 = vunpack.c.h.b16 %v3881
          %v4493 = vunpack.c.l.b16 %v3882
          %v4494 = vunpack.c.h.b16 %v3882
          %v4495 = vunpack.c.l.b16 %v3883
          %v4496 = vunpack.c.h.b16 %v3883
          %v4497 = vunpack.c.l.b16 %v3884
          %v4498 = vunpack.c.h.b16 %v3884
          %v4499 = vunpack.c.l.b16 %v3885
          %v4500 = vunpack.c.h.b16 %v3885
          %v4501 = vunpack.c.l.b16 %v3886
          %v4502 = vunpack.c.h.b16 %v3886
          %v4503 = vunpack.c.l.b16 %v3887
          %v4504 = vunpack.c.h.b16 %v3887
          %v4505 = vunpack.c.l.b16 %v3888
          %v4506 = vunpack.c.h.b16 %v3888
          %v4507 = vunpack.c.l.b16 %v3889
          %v4508 = vunpack.c.h.b16 %v3889
          %v4509 = vunpack.c.l.b16 %v3890
          %v4510 = vunpack.c.h.b16 %v3890
          %v4511 = vunpack.c.l.b16 %v3891
          %v4512 = vunpack.c.h.b16 %v3891
          %v4513 = vunpack.c.l.b16 %v3892
          %v4514 = vunpack.c.h.b16 %v3892
          %v4515 = vunpack.c.l.b16 %v3893
          %v4516 = vunpack.c.h.b16 %v3893
          %v4517 = vunpack.c.l.b16 %v3894
          %v4518 = vunpack.c.h.b16 %v3894
          %v4519 = vunpack.c.l.b16 %v3895
          %v4520 = vunpack.c.h.b16 %v3895
          %v4521 = vunpack.c.l.b16 %v3896
          %v4522 = vunpack.c.h.b16 %v3896
          %v4523 = vunpack.c.l.b16 %v3897
          %v4524 = vunpack.c.h.b16 %v3897
          %v4525 = vunpack.c.l.b16 %v3898
          %v4526 = vunpack.c.h.b16 %v3898
          %v4527 = vunpack.c.l.b16 %v3899
          %v4528 = vunpack.c.h.b16 %v3899
          %v4529 = vunpack.c.l.b16 %v3900
          %v4530 = vunpack.c.h.b16 %v3900
          %v4531 = vunpack.c.l.b16 %v3901
          %v4532 = vunpack.c.h.b16 %v3901
          %v4533 = vunpack.c.l.b16 %v3902
          %v4534 = vunpack.c.h.b16 %v3902
          %v4535 = vunpack.c.l.b16 %v3903
          %v4536 = vunpack.c.h.b16 %v3903
          %v4537 = vunpack.c.l.b16 %v3904
          %v4538 = vunpack.c.h.b16 %v3904
          %v4539 = vunpack.c.l.b16 %v3905
          %v4540 = vunpack.c.h.b16 %v3905
          %v4541 = vunpack.c.l.b16 %v3906
          %v4542 = vunpack.c.h.b16 %v3906
          %v4543 = vunpack.c.l.b16 %v3907
          %v4544 = vunpack.c.h.b16 %v3907
          %v4545 = vunpack.c.l.b16 %v3908
          %v4546 = vunpack.c.h.b16 %v3908
          %v4547 = vunpack.c.l.b16 %v3909
          %v4548 = vunpack.c.h.b16 %v3909
          %v4549 = vunpack.c.l.b16 %v3910
          %v4550 = vunpack.c.h.b16 %v3910
          %v4551 = vunpack.c.l.b16 %v3911
          %v4552 = vunpack.c.h.b16 %v3911
          %v4553 = vunpack.c.l.b16 %v3912
          %v4554 = vunpack.c.h.b16 %v3912
          %v4555 = vunpack.c.l.b16 %v3913
          %v4556 = vunpack.c.h.b16 %v3913
          %v4557 = vunpack.c.l.b16 %v3914
          %v4558 = vunpack.c.h.b16 %v3914
          %v4559 = vunpack.c.l.b16 %v3915
          %v4560 = vunpack.c.h.b16 %v3915
          %v4561 = vunpack.c.l.b16 %v3916
          %v4562 = vunpack.c.h.b16 %v3916
          %v4563 = vunpack.c.l.b16 %v3917
          %v4564 = vunpack.c.h.b16 %v3917
          %v4565 = vunpack.c.l.b16 %v3918
          %v4566 = vunpack.c.h.b16 %v3918
          %v4567 = vunpack.c.l.b16 %v3919
          %v4568 = vunpack.c.h.b16 %v3919
          %v4569 = vunpack.c.l.b16 %v3920
          %v4570 = vunpack.c.h.b16 %v3920
          %v4571 = vunpack.c.l.b16 %v3921
          %v4572 = vunpack.c.h.b16 %v3921
          %v4573 = vunpack.c.l.b16 %v3922
          %v4574 = vunpack.c.h.b16 %v3922
          %v4575 = vunpack.c.l.b16 %v3923
          %v4576 = vunpack.c.h.b16 %v3923
          %v4577 = vunpack.c.l.b16 %v3924
          %v4578 = vunpack.c.h.b16 %v3924
          %v4579 = vunpack.c.l.b16 %v3925
          %v4580 = vunpack.c.h.b16 %v3925
          %v4581 = vunpack.c.l.b16 %v3926
          %v4582 = vunpack.c.h.b16 %v3926
          %v4583 = vunpack.c.l.b16 %v3927
          %v4584 = vunpack.c.h.b16 %v3927
          %v4585 = vunpack.c.l.b16 %v3928
          %v4586 = vunpack.c.h.b16 %v3928
          %v4587 = vunpack.c.l.b16 %v3929
          %v4588 = vunpack.c.h.b16 %v3929
          %v4589 = vunpack.c.l.b16 %v3930
          %v4590 = vunpack.c.h.b16 %v3930
          %v4591 = vunpack.c.l.b16 %v3931
          %v4592 = vunpack.c.h.b16 %v3931
          %v4593 = vunpack.c.l.b16 %v3932
          %v4594 = vunpack.c.h.b16 %v3932
          %v4595 = vunpack.c.l.b16 %v3933
          %v4596 = vunpack.c.h.b16 %v3933
          %v4597 = vunpack.c.l.b16 %v3934
          %v4598 = vunpack.c.h.b16 %v3934
          %v4599 = vunpack.c.l.b16 %v3935
          %v4600 = vunpack.c.h.b16 %v3935
          %v4601 = vunpack.c.l.b16 %v3936
          %v4602 = vunpack.c.h.b16 %v3936
          %v4603 = vunpack.c.l.b16 %v3937
          %v4604 = vunpack.c.h.b16 %v3937
          %v4605 = vunpack.c.l.b16 %v3938
          %v4606 = vunpack.c.h.b16 %v3938
          %v4607 = vunpack.c.l.b16 %v3939
          %v4608 = vunpack.c.h.b16 %v3939
          %v4609 = vunpack.c.l.b16 %v3940
          %v4610 = vunpack.c.h.b16 %v3940
          %v4611 = vunpack.c.l.b16 %v3941
          %v4612 = vunpack.c.h.b16 %v3941
          %v4613 = vunpack.c.l.b16 %v3942
          %v4614 = vunpack.c.h.b16 %v3942
          %v4615 = vunpack.c.l.b16 %v3943
          %v4616 = vunpack.c.h.b16 %v3943
          %v4617 = vunpack.c.l.b16 %v3944
          %v4618 = vunpack.c.h.b16 %v3944
          %v4619 = vunpack.c.l.b16 %v3945
          %v4620 = vunpack.c.h.b16 %v3945
          %v4621 = vunpack.c.l.b16 %v3946
          %v4622 = vunpack.c.h.b16 %v3946
          %v4623 = vunpack.c.l.b16 %v3947
          %v4624 = vunpack.c.h.b16 %v3947
          %v4625 = vunpack.c.l.b16 %v3948
          %v4626 = vunpack.c.h.b16 %v3948
          %v4627 = vunpack.c.l.b16 %v3949
          %v4628 = vunpack.c.h.b16 %v3949
          %v4629 = vunpack.c.l.b16 %v3950
          %v4630 = vunpack.c.h.b16 %v3950
          %v4631 = vunpack.c.l.b16 %v3951
          %v4632 = vunpack.c.h.b16 %v3951
          %v4633 = vunpack.c.l.b16 %v3952
          %v4634 = vunpack.c.h.b16 %v3952
          %v4635 = vunpack.c.l.b16 %v3953
          %v4636 = vunpack.c.h.b16 %v3953
          %v4637 = vunpack.c.l.b16 %v3954
          %v4638 = vunpack.c.h.b16 %v3954
          %v4639 = vunpack.c.l.b16 %v3955
          %v4640 = vunpack.c.h.b16 %v3955
          %v4641 = vunpack.c.l.b16 %v3956
          %v4642 = vunpack.c.h.b16 %v3956
          %v4643 = vunpack.c.l.b16 %v3957
          %v4644 = vunpack.c.h.b16 %v3957
          %v4645 = vunpack.c.l.b16 %v3958
          %v4646 = vunpack.c.h.b16 %v3958
          %v4647 = vunpack.c.l.b16 %v3959
          %v4648 = vunpack.c.h.b16 %v3959
          %v4649 = vunpack.c.l.b16 %v3960
          %v4650 = vunpack.c.h.b16 %v3960
          %v4651 = vunpack.c.l.b16 %v3961
          %v4652 = vunpack.c.h.b16 %v3961
          %v4653 = vunpack.c.l.b16 %v3962
          %v4654 = vunpack.c.h.b16 %v3962
          %v4655 = vunpack.c.l.b16 %v3963
          %v4656 = vunpack.c.h.b16 %v3963
          %v4657 = vunpack.c.l.b16 %v3964
          %v4658 = vunpack.c.h.b16 %v3964
          %v4659 = vunpack.c.l.b16 %v3965
          %v4660 = vunpack.c.h.b16 %v3965
          %v4661 = vunpack.c.l.b16 %v3966
          %v4662 = vunpack.c.h.b16 %v3966
          %v4663 = vunpack.c.l.b16 %v3967
          %v4664 = vunpack.c.h.b16 %v3967
          %v4665 = vunpack.c.l.b16 %v3968
          %v4666 = vunpack.c.h.b16 %v3968
          %v4667 = vunpack.c.l.b16 %v3969
          %v4668 = vunpack.c.h.b16 %v3969
          %v4669 = vunpack.c.l.b16 %v3970
          %v4670 = vunpack.c.h.b16 %v3970
          %v4671 = vunpack.c.l.b16 %v3971
          %v4672 = vunpack.c.h.b16 %v3971
          %v4673 = vunpack.c.l.b16 %v3972
          %v4674 = vunpack.c.h.b16 %v3972
          %v4675 = vunpack.c.l.b16 %v3973
          %v4676 = vunpack.c.h.b16 %v3973
          %v4677 = vunpack.c.l.b16 %v3974
          %v4678 = vunpack.c.h.b16 %v3974
          %v4679 = vunpack.c.l.b16 %v3975
          %v4680 = vunpack.c.h.b16 %v3975
          %v4681 = vunpack.c.l.b16 %v3976
          %v4682 = vunpack.c.h.b16 %v3976
          %v4683 = vunpack.c.l.b16 %v3977
          %v4684 = vunpack.c.h.b16 %v3977
          %v4685 = vunpack.c.l.b16 %v3978
          %v4686 = vunpack.c.h.b16 %v3978
          %v4687 = vunpack.c.l.b16 %v3979
          %v4688 = vunpack.c.h.b16 %v3979
          %v4689 = vunpack.c.l.b16 %v3980
          %v4690 = vunpack.c.h.b16 %v3980
          %v4691 = vunpack.c.l.b16 %v3981
          %v4692 = vunpack.c.h.b16 %v3981
          %v4693 = vunpack.c.l.b16 %v3982
          %v4694 = vunpack.c.h.b16 %v3982
          %v4695 = vunpack.c.l.b16 %v3983
          %v4696 = vunpack.c.h.b16 %v3983
          %v4697 = vunpack.c.l.b16 %v3984
          %v4698 = vunpack.c.h.b16 %v3984
          %v4699 = vunpack.c.l.b16 %v3985
          %v4700 = vunpack.c.h.b16 %v3985
          %v4701 = vunpack.c.l.b16 %v3986
          %v4702 = vunpack.c.h.b16 %v3986
          %v4703 = vunpack.c.l.b16 %v3987
          %v4704 = vunpack.c.h.b16 %v3987
          %v4705 = vunpack.c.l.b16 %v3988
          %v4706 = vunpack.c.h.b16 %v3988
          %v4707 = vunpack.c.l.b16 %v3989
          %v4708 = vunpack.c.h.b16 %v3989
          %v4709 = vunpack.c.l.b16 %v3990
          %v4710 = vunpack.c.h.b16 %v3990
          %v4711 = vunpack.c.l.b16 %v3991
          %v4712 = vunpack.c.h.b16 %v3991
          %v4713 = vunpack.c.l.b16 %v3992
          %v4714 = vunpack.c.h.b16 %v3992
          %v4715 = vunpack.c.l.b16 %v3993
          %v4716 = vunpack.c.h.b16 %v3993
          %v4717 = vunpack.c.l.b16 %v3994
          %v4718 = vunpack.c.h.b16 %v3994
          %v4719 = vunpack.c.l.b16 %v3995
          %v4720 = vunpack.c.h.b16 %v3995
          %v4721 = vunpack.c.l.b16 %v3996
          %v4722 = vunpack.c.h.b16 %v3996
          %v4723 = vunpack.c.l.b16 %v3997
          %v4724 = vunpack.c.h.b16 %v3997
          %v4725 = vunpack.c.l.b16 %v3998
          %v4726 = vunpack.c.h.b16 %v3998
          %v4727 = vunpack.c.l.b16 %v3999
          %v4728 = vunpack.c.h.b16 %v3999
          %v4729 = vunpack.c.l.b16 %v4000
          %v4730 = vunpack.c.h.b16 %v4000
          %v4731 = vunpack.c.l.b16 %v4001
          %v4732 = vunpack.c.h.b16 %v4001
          %v4733 = vunpack.c.l.b16 %v4002
          %v4734 = vunpack.c.h.b16 %v4002
          %v4735 = vunpack.c.l.b16 %v4003
          %v4736 = vunpack.c.h.b16 %v4003
          %v4737 = vunpack.c.l.b16 %v4004
          %v4738 = vunpack.c.h.b16 %v4004
          %v4739 = vunpack.c.l.b16 %v4005
          %v4740 = vunpack.c.h.b16 %v4005
          %v4741 = vunpack.c.l.b16 %v4006
          %v4742 = vunpack.c.h.b16 %v4006
          %v4743 = vunpack.c.l.b16 %v4007
          %v4744 = vunpack.c.h.b16 %v4007
          %v4745 = vunpack.c.l.b16 %v4008
          %v4746 = vunpack.c.h.b16 %v4008
          %v4747 = vunpack.c.l.b16 %v4009
          %v4748 = vunpack.c.h.b16 %v4009
          %v4749 = vunpack.c.l.b16 %v4010
          %v4750 = vunpack.c.h.b16 %v4010
          %v4751 = vunpack.c.l.b16 %v4011
          %v4752 = vunpack.c.h.b16 %v4011
          %v4753 = vunpack.c.l.b16 %v4012
          %v4754 = vunpack.c.h.b16 %v4012
          %v4755 = vunpack.c.l.b16 %v4013
          %v4756 = vunpack.c.h.b16 %v4013
          %v4757 = vunpack.c.l.b16 %v4014
          %v4758 = vunpack.c.h.b16 %v4014
          %v4759 = vunpack.c.l.b16 %v4015
          %v4760 = vunpack.c.h.b16 %v4015
          %v4761 = vunpack.c.l.b16 %v4016
          %v4762 = vunpack.c.h.b16 %v4016
          %v4763 = vunpack.c.l.b16 %v4017
          %v4764 = vunpack.c.h.b16 %v4017
          %v4765 = vunpack.c.l.b16 %v4018
          %v4766 = vunpack.c.h.b16 %v4018
          %v4767 = vunpack.c.l.b16 %v4019
          %v4768 = vunpack.c.h.b16 %v4019
          %v4769 = vunpack.c.l.b16 %v4020
          %v4770 = vunpack.c.h.b16 %v4020
          %v4771 = vunpack.c.l.b16 %v4021
          %v4772 = vunpack.c.h.b16 %v4021
          %v4773 = vunpack.c.l.b16 %v4022
          %v4774 = vunpack.c.h.b16 %v4022
          %v4775 = vunpack.c.l.b16 %v4023
          %v4776 = vunpack.c.h.b16 %v4023
          %v4777 = vunpack.c.l.b16 %v4024
          %v4778 = vunpack.c.h.b16 %v4024
          %v4779 = vunpack.c.l.b16 %v4025
          %v4780 = vunpack.c.h.b16 %v4025
          %v4781 = vunpack.c.l.b16 %v4026
          %v4782 = vunpack.c.h.b16 %v4026
          %v4783 = vunpack.c.l.b16 %v4027
          %v4784 = vunpack.c.h.b16 %v4027
          %v4785 = vunpack.c.l.b16 %v4028
          %v4786 = vunpack.c.h.b16 %v4028
          %v4787 = vunpack.c.l.b16 %v4029
          %v4788 = vunpack.c.h.b16 %v4029
          %v4789 = vunpack.c.l.b16 %v4030
          %v4790 = vunpack.c.h.b16 %v4030
          %v4791 = vunpack.c.l.b16 %v4031
          %v4792 = vunpack.c.h.b16 %v4031
          %v4793 = vunpack.c.l.b16 %v4032
          %v4794 = vunpack.c.h.b16 %v4032
          %v4795 = vunpack.c.l.b16 %v4033
          %v4796 = vunpack.c.h.b16 %v4033
          %v4797 = vunpack.c.l.b16 %v4034
          %v4798 = vunpack.c.h.b16 %v4034
          %v4799 = vunpack.c.l.b16 %v4035
          %v4800 = vunpack.c.h.b16 %v4035
          %v4801 = vunpack.c.l.b16 %v4036
          %v4802 = vunpack.c.h.b16 %v4036
          %v4803 = vunpack.c.l.b16 %v4037
          %v4804 = vunpack.c.h.b16 %v4037
          %v4805 = vunpack.c.l.b16 %v4038
          %v4806 = vunpack.c.h.b16 %v4038
          %v4807 = vunpack.c.l.b16 %v4039
          %v4808 = vunpack.c.h.b16 %v4039
          %v4809 = vunpack.c.l.b16 %v4040
          %v4810 = vunpack.c.h.b16 %v4040
          %v4811 = vunpack.c.l.b16 %v4041
          %v4812 = vunpack.c.h.b16 %v4041
          %v4813 = vunpack.c.l.b16 %v4042
          %v4814 = vunpack.c.h.b16 %v4042
          %v4815 = vunpack.c.l.b16 %v4043
          %v4816 = vunpack.c.h.b16 %v4043
          %v4817 = vunpack.c.l.b16 %v4044
          %v4818 = vunpack.c.h.b16 %v4044
          %v4819 = vunpack.c.l.b16 %v4045
          %v4820 = vunpack.c.h.b16 %v4045
          %v4821 = vunpack.c.l.b16 %v4046
          %v4822 = vunpack.c.h.b16 %v4046
          %v4823 = vunpack.c.l.b16 %v4047
          %v4824 = vunpack.c.h.b16 %v4047
          %v4825 = vunpack.c.l.b16 %v4048
          %v4826 = vunpack.c.h.b16 %v4048
          %v4827 = vpack.c.b16 %v4319, %v4315
          %v4828 = vpack.c.b16 %v4320, %v4316
          %v4829 = vpack.c.b16 %v4321, %v4317
          %v4830 = vpack.c.b16 %v4322, %v4318
          %v4831 = vpack.c.b16 %v4327, %v4323
          %v4832 = vpack.c.b16 %v4328, %v4324
          %v4833 = vpack.c.b16 %v4329, %v4325
          %v4834 = vpack.c.b16 %v4330, %v4326
          %v4835 = vpack.c.b16 %v4335, %v4331
          %v4836 = vpack.c.b16 %v4336, %v4332
          %v4837 = vpack.c.b16 %v4337, %v4333
          %v4838 = vpack.c.b16 %v4338, %v4334
          %v4839 = vpack.c.b16 %v4343, %v4339
          %v4840 = vpack.c.b16 %v4344, %v4340
          %v4841 = vpack.c.b16 %v4345, %v4341
          %v4842 = vpack.c.b16 %v4346, %v4342
          %v4843 = vpack.c.b16 %v4351, %v4347
          %v4844 = vpack.c.b16 %v4352, %v4348
          %v4845 = vpack.c.b16 %v4353, %v4349
          %v4846 = vpack.c.b16 %v4354, %v4350
          %v4847 = vpack.c.b16 %v4359, %v4355
          %v4848 = vpack.c.b16 %v4360, %v4356
          %v4849 = vpack.c.b16 %v4361, %v4357
          %v4850 = vpack.c.b16 %v4362, %v4358
          %v4851 = vpack.c.b16 %v4367, %v4363
          %v4852 = vpack.c.b16 %v4368, %v4364
          %v4853 = vpack.c.b16 %v4369, %v4365
          %v4854 = vpack.c.b16 %v4370, %v4366
          %v4855 = vpack.c.b16 %v4375, %v4371
          %v4856 = vpack.c.b16 %v4376, %v4372
          %v4857 = vpack.c.b16 %v4377, %v4373
          %v4858 = vpack.c.b16 %v4378, %v4374
          %v4859 = vpack.c.b16 %v4383, %v4379
          %v4860 = vpack.c.b16 %v4384, %v4380
          %v4861 = vpack.c.b16 %v4385, %v4381
          %v4862 = vpack.c.b16 %v4386, %v4382
          %v4863 = vpack.c.b16 %v4391, %v4387
          %v4864 = vpack.c.b16 %v4392, %v4388
          %v4865 = vpack.c.b16 %v4393, %v4389
          %v4866 = vpack.c.b16 %v4394, %v4390
          %v4867 = vpack.c.b16 %v4399, %v4395
          %v4868 = vpack.c.b16 %v4400, %v4396
          %v4869 = vpack.c.b16 %v4401, %v4397
          %v4870 = vpack.c.b16 %v4402, %v4398
          %v4871 = vpack.c.b16 %v4407, %v4403
          %v4872 = vpack.c.b16 %v4408, %v4404
          %v4873 = vpack.c.b16 %v4409, %v4405
          %v4874 = vpack.c.b16 %v4410, %v4406
          %v4875 = vpack.c.b16 %v4415, %v4411
          %v4876 = vpack.c.b16 %v4416, %v4412
          %v4877 = vpack.c.b16 %v4417, %v4413
          %v4878 = vpack.c.b16 %v4418, %v4414
          %v4879 = vpack.c.b16 %v4423, %v4419
          %v4880 = vpack.c.b16 %v4424, %v4420
          %v4881 = vpack.c.b16 %v4425, %v4421
          %v4882 = vpack.c.b16 %v4426, %v4422
          %v4883 = vpack.c.b16 %v4431, %v4427
          %v4884 = vpack.c.b16 %v4432, %v4428
          %v4885 = vpack.c.b16 %v4433, %v4429
          %v4886 = vpack.c.b16 %v4434, %v4430
          %v4887 = vpack.c.b16 %v4439, %v4435
          %v4888 = vpack.c.b16 %v4440, %v4436
          %v4889 = vpack.c.b16 %v4441, %v4437
          %v4890 = vpack.c.b16 %v4442, %v4438
          %v4891 = vpack.c.b16 %v4447, %v4443
          %v4892 = vpack.c.b16 %v4448, %v4444
          %v4893 = vpack.c.b16 %v4449, %v4445
          %v4894 = vpack.c.b16 %v4450, %v4446
          %v4895 = vpack.c.b16 %v4455, %v4451
          %v4896 = vpack.c.b16 %v4456, %v4452
          %v4897 = vpack.c.b16 %v4457, %v4453
          %v4898 = vpack.c.b16 %v4458, %v4454
          %v4899 = vpack.c.b16 %v4463, %v4459
          %v4900 = vpack.c.b16 %v4464, %v4460
          %v4901 = vpack.c.b16 %v4465, %v4461
          %v4902 = vpack.c.b16 %v4466, %v4462
          %v4903 = vpack.c.b16 %v4471, %v4467
          %v4904 = vpack.c.b16 %v4472, %v4468
          %v4905 = vpack.c.b16 %v4473, %v4469
          %v4906 = vpack.c.b16 %v4474, %v4470
          %v4907 = vpack.c.b16 %v4479, %v4475
          %v4908 = vpack.c.b16 %v4480, %v4476
          %v4909 = vpack.c.b16 %v4481, %v4477
          %v4910 = vpack.c.b16 %v4482, %v4478
          %v4911 = vpack.c.b16 %v4487, %v4483
          %v4912 = vpack.c.b16 %v4488, %v4484
          %v4913 = vpack.c.b16 %v4489, %v4485
          %v4914 = vpack.c.b16 %v4490, %v4486
          %v4915 = vpack.c.b16 %v4495, %v4491
          %v4916 = vpack.c.b16 %v4496, %v4492
          %v4917 = vpack.c.b16 %v4497, %v4493
          %v4918 = vpack.c.b16 %v4498, %v4494
          %v4919 = vpack.c.b16 %v4503, %v4499
          %v4920 = vpack.c.b16 %v4504, %v4500
          %v4921 = vpack.c.b16 %v4505, %v4501
          %v4922 = vpack.c.b16 %v4506, %v4502
          %v4923 = vpack.c.b16 %v4511, %v4507
          %v4924 = vpack.c.b16 %v4512, %v4508
          %v4925 = vpack.c.b16 %v4513, %v4509
          %v4926 = vpack.c.b16 %v4514, %v4510
          %v4927 = vpack.c.b16 %v4519, %v4515
          %v4928 = vpack.c.b16 %v4520, %v4516
          %v4929 = vpack.c.b16 %v4521, %v4517
          %v4930 = vpack.c.b16 %v4522, %v4518
          %v4931 = vpack.c.b16 %v4527, %v4523
          %v4932 = vpack.c.b16 %v4528, %v4524
          %v4933 = vpack.c.b16 %v4529, %v4525
          %v4934 = vpack.c.b16 %v4530, %v4526
          %v4935 = vpack.c.b16 %v4535, %v4531
          %v4936 = vpack.c.b16 %v4536, %v4532
          %v4937 = vpack.c.b16 %v4537, %v4533
          %v4938 = vpack.c.b16 %v4538, %v4534
          %v4939 = vpack.c.b16 %v4543, %v4539
          %v4940 = vpack.c.b16 %v4544, %v4540
          %v4941 = vpack.c.b16 %v4545, %v4541
          %v4942 = vpack.c.b16 %v4546, %v4542
          %v4943 = vpack.c.b16 %v4551, %v4547
          %v4944 = vpack.c.b16 %v4552, %v4548
          %v4945 = vpack.c.b16 %v4553, %v4549
          %v4946 = vpack.c.b16 %v4554, %v4550
          %v4947 = vpack.c.b16 %v4559, %v4555
          %v4948 = vpack.c.b16 %v4560, %v4556
          %v4949 = vpack.c.b16 %v4561, %v4557
          %v4950 = vpack.c.b16 %v4562, %v4558
          %v4951 = vpack.c.b16 %v4567, %v4563
          %v4952 = vpack.c.b16 %v4568, %v4564
          %v4953 = vpack.c.b16 %v4569, %v4565
          %v4954 = vpack.c.b16 %v4570, %v4566
          %v4955 = vpack.c.b16 %v4575, %v4571
          %v4956 = vpack.c.b16 %v4576, %v4572
          %v4957 = vpack.c.b16 %v4577, %v4573
          %v4958 = vpack.c.b16 %v4578, %v4574
          %v4959 = vpack.c.b16 %v4583, %v4579
          %v4960 = vpack.c.b16 %v4584, %v4580
          %v4961 = vpack.c.b16 %v4585, %v4581
          %v4962 = vpack.c.b16 %v4586, %v4582
          %v4963 = vpack.c.b16 %v4591, %v4587
          %v4964 = vpack.c.b16 %v4592, %v4588
          %v4965 = vpack.c.b16 %v4593, %v4589
          %v4966 = vpack.c.b16 %v4594, %v4590
          %v4967 = vpack.c.b16 %v4599, %v4595
          %v4968 = vpack.c.b16 %v4600, %v4596
          %v4969 = vpack.c.b16 %v4601, %v4597
          %v4970 = vpack.c.b16 %v4602, %v4598
          %v4971 = vpack.c.b16 %v4607, %v4603
          %v4972 = vpack.c.b16 %v4608, %v4604
          %v4973 = vpack.c.b16 %v4609, %v4605
          %v4974 = vpack.c.b16 %v4610, %v4606
          %v4975 = vpack.c.b16 %v4615, %v4611
          %v4976 = vpack.c.b16 %v4616, %v4612
          %v4977 = vpack.c.b16 %v4617, %v4613
          %v4978 = vpack.c.b16 %v4618, %v4614
          %v4979 = vpack.c.b16 %v4623, %v4619
          %v4980 = vpack.c.b16 %v4624, %v4620
          %v4981 = vpack.c.b16 %v4625, %v4621
          %v4982 = vpack.c.b16 %v4626, %v4622
          %v4983 = vpack.c.b16 %v4631, %v4627
          %v4984 = vpack.c.b16 %v4632, %v4628
          %v4985 = vpack.c.b16 %v4633, %v4629
          %v4986 = vpack.c.b16 %v4634, %v4630
          %v4987 = vpack.c.b16 %v4639, %v4635
          %v4988 = vpack.c.b16 %v4640, %v4636
          %v4989 = vpack.c.b16 %v4641, %v4637
          %v4990 = vpack.c.b16 %v4642, %v4638
          %v4991 = vpack.c.b16 %v4647, %v4643
          %v4992 = vpack.c.b16 %v4648, %v4644
          %v4993 = vpack.c.b16 %v4649, %v4645
          %v4994 = vpack.c.b16 %v4650, %v4646
          %v4995 = vpack.c.b16 %v4655, %v4651
          %v4996 = vpack.c.b16 %v4656, %v4652
          %v4997 = vpack.c.b16 %v4657, %v4653
          %v4998 = vpack.c.b16 %v4658, %v4654
          %v4999 = vpack.c.b16 %v4663, %v4659
          %v5000 = vpack.c.b16 %v4664, %v4660
          %v5001 = vpack.c.b16 %v4665, %v4661
          %v5002 = vpack.c.b16 %v4666, %v4662
          %v5003 = vpack.c.b16 %v4671, %v4667
          %v5004 = vpack.c.b16 %v4672, %v4668
          %v5005 = vpack.c.b16 %v4673, %v4669
          %v5006 = vpack.c.b16 %v4674, %v4670
          %v5007 = vpack.c.b16 %v4679, %v4675
          %v5008 = vpack.c.b16 %v4680, %v4676
          %v5009 = vpack.c.b16 %v4681, %v4677
          %v5010 = vpack.c.b16 %v4682, %v4678
          %v5011 = vpack.c.b16 %v4687, %v4683
          %v5012 = vpack.c.b16 %v4688, %v4684
          %v5013 = vpack.c.b16 %v4689, %v4685
          %v5014 = vpack.c.b16 %v4690, %v4686
          %v5015 = vpack.c.b16 %v4695, %v4691
          %v5016 = vpack.c.b16 %v4696, %v4692
          %v5017 = vpack.c.b16 %v4697, %v4693
          %v5018 = vpack.c.b16 %v4698, %v4694
          %v5019 = vpack.c.b16 %v4703, %v4699
          %v5020 = vpack.c.b16 %v4704, %v4700
          %v5021 = vpack.c.b16 %v4705, %v4701
          %v5022 = vpack.c.b16 %v4706, %v4702
          %v5023 = vpack.c.b16 %v4711, %v4707
          %v5024 = vpack.c.b16 %v4712, %v4708
          %v5025 = vpack.c.b16 %v4713, %v4709
          %v5026 = vpack.c.b16 %v4714, %v4710
          %v5027 = vpack.c.b16 %v4719, %v4715
          %v5028 = vpack.c.b16 %v4720, %v4716
          %v5029 = vpack.c.b16 %v4721, %v4717
          %v5030 = vpack.c.b16 %v4722, %v4718
          %v5031 = vpack.c.b16 %v4727, %v4723
          %v5032 = vpack.c.b16 %v4728, %v4724
          %v5033 = vpack.c.b16 %v4729, %v4725
          %v5034 = vpack.c.b16 %v4730, %v4726
          %v5035 = vpack.c.b16 %v4735, %v4731
          %v5036 = vpack.c.b16 %v4736, %v4732
          %v5037 = vpack.c.b16 %v4737, %v4733
          %v5038 = vpack.c.b16 %v4738, %v4734
          %v5039 = vpack.c.b16 %v4743, %v4739
          %v5040 = vpack.c.b16 %v4744, %v4740
          %v5041 = vpack.c.b16 %v4745, %v4741
          %v5042 = vpack.c.b16 %v4746, %v4742
          %v5043 = vpack.c.b16 %v4751, %v4747
          %v5044 = vpack.c.b16 %v4752, %v4748
          %v5045 = vpack.c.b16 %v4753, %v4749
          %v5046 = vpack.c.b16 %v4754, %v4750
          %v5047 = vpack.c.b16 %v4759, %v4755
          %v5048 = vpack.c.b16 %v4760, %v4756
          %v5049 = vpack.c.b16 %v4761, %v4757
          %v5050 = vpack.c.b16 %v4762, %v4758
          %v5051 = vpack.c.b16 %v4767, %v4763
          %v5052 = vpack.c.b16 %v4768, %v4764
          %v5053 = vpack.c.b16 %v4769, %v4765
          %v5054 = vpack.c.b16 %v4770, %v4766
          %v5055 = vpack.c.b16 %v4775, %v4771
          %v5056 = vpack.c.b16 %v4776, %v4772
          %v5057 = vpack.c.b16 %v4777, %v4773
          %v5058 = vpack.c.b16 %v4778, %v4774
          %v5059 = vpack.c.b16 %v4783, %v4779
          %v5060 = vpack.c.b16 %v4784, %v4780
          %v5061 = vpack.c.b16 %v4785, %v4781
          %v5062 = vpack.c.b16 %v4786, %v4782
          %v5063 = vpack.c.b16 %v4791, %v4787
          %v5064 = vpack.c.b16 %v4792, %v4788
          %v5065 = vpack.c.b16 %v4793, %v4789
          %v5066 = vpack.c.b16 %v4794, %v4790
          %v5067 = vpack.c.b16 %v4799, %v4795
          %v5068 = vpack.c.b16 %v4800, %v4796
          %v5069 = vpack.c.b16 %v4801, %v4797
          %v5070 = vpack.c.b16 %v4802, %v4798
          %v5071 = vpack.c.b16 %v4807, %v4803
          %v5072 = vpack.c.b16 %v4808, %v4804
          %v5073 = vpack.c.b16 %v4809, %v4805
          %v5074 = vpack.c.b16 %v4810, %v4806
          %v5075 = vpack.c.b16 %v4815, %v4811
          %v5076 = vpack.c.b16 %v4816, %v4812
          %v5077 = vpack.c.b16 %v4817, %v4813
          %v5078 = vpack.c.b16 %v4818, %v4814
          %v5079 = vpack.c.b16 %v4823, %v4819
          %v5080 = vpack.c.b16 %v4824, %v4820
          %v5081 = vpack.c.b16 %v4825, %v4821
          %v5082 = vpack.c.b16 %v4826, %v4822
          %5339 = vmatpush.bf16.msra.mxu0 %v4855
          %5340 = vmatpush.bf16.msra.mxu0 %v4851
          %5341 = vmatpush.bf16.msra.mxu0 %v4847
          %5342 = vmatpush.bf16.msra.mxu0 %v4843
          %5343 = vmatpush.bf16.msra.mxu0 %v4839
          %5344 = vmatpush.bf16.msra.mxu0 %v4835
          %5345 = vmatpush.bf16.msra.mxu0 %v4831
          %5346 = vmatpush.bf16.msra.mxu0 %v4827
          %5347 = vmatmul.bf16.gmra.mxu0 %v3785
          %v5348 = vpop.f32.mrf.mxu0
          %v5349 = vadd.f32 %v4051, %v5348
          %v5350 = vpop.f32.mrf.mxu0
          %5351 = vdwg.mxu0
          %5352 = vmatpush.bf16.msra.mxu0 %v4887
          %5353 = vmatpush.bf16.msra.mxu0 %v4883
          %5354 = vmatpush.bf16.msra.mxu0 %v4879
          %5355 = vmatpush.bf16.msra.mxu0 %v4875
          %5356 = vmatpush.bf16.msra.mxu0 %v4871
          %5357 = vmatpush.bf16.msra.mxu0 %v4867
          %5358 = vmatpush.bf16.msra.mxu0 %v4863
          %5359 = vmatpush.bf16.msra.mxu0 %v4859
          %5360 = vmatmul.bf16.gmra.mxu0 %v3786
          %v5361 = vpop.f32.mrf.mxu0
          %v5362 = vadd.f32 %v5349, %v5361
          %v5363 = vpop.f32.mrf.mxu0
          %5364 = vdwg.mxu0
          %5365 = vmatpush.bf16.msra.mxu0 %v4919
          %5366 = vmatpush.bf16.msra.mxu0 %v4915
          %5367 = vmatpush.bf16.msra.mxu0 %v4911
          %5368 = vmatpush.bf16.msra.mxu0 %v4907
          %5369 = vmatpush.bf16.msra.mxu0 %v4903
          %5370 = vmatpush.bf16.msra.mxu0 %v4899
          %5371 = vmatpush.bf16.msra.mxu0 %v4895
          %5372 = vmatpush.bf16.msra.mxu0 %v4891
          %5373 = vmatmul.bf16.gmra.mxu0 %v3787
          %v5374 = vpop.f32.mrf.mxu0
          %v5375 = vadd.f32 %v5362, %v5374
          %v5376 = vpop.f32.mrf.mxu0
          %5377 = vdwg.mxu0
          %5378 = vmatpush.bf16.msra.mxu0 %v4951
          %5379 = vmatpush.bf16.msra.mxu0 %v4947
          %5380 = vmatpush.bf16.msra.mxu0 %v4943
          %5381 = vmatpush.bf16.msra.mxu0 %v4939
          %5382 = vmatpush.bf16.msra.mxu0 %v4935
          %5383 = vmatpush.bf16.msra.mxu0 %v4931
          %5384 = vmatpush.bf16.msra.mxu0 %v4927
          %5385 = vmatpush.bf16.msra.mxu0 %v4923
          %5386 = vmatmul.bf16.gmra.mxu0 %v3788
          %v5387 = vpop.f32.mrf.mxu0
          %v5388 = vadd.f32 %v5375, %v5387
          %v5389 = vpop.f32.mrf.mxu0
          %5390 = vdwg.mxu0
          %5391 = vmatpush.bf16.msra.mxu0 %v4983
          %5392 = vmatpush.bf16.msra.mxu0 %v4979
          %5393 = vmatpush.bf16.msra.mxu0 %v4975
          %5394 = vmatpush.bf16.msra.mxu0 %v4971
          %5395 = vmatpush.bf16.msra.mxu0 %v4967
          %5396 = vmatpush.bf16.msra.mxu0 %v4963
          %5397 = vmatpush.bf16.msra.mxu0 %v4959
          %5398 = vmatpush.bf16.msra.mxu0 %v4955
          %5399 = vmatmul.bf16.gmra.mxu0 %v3789
          %v5400 = vpop.f32.mrf.mxu0
          %v5401 = vadd.f32 %v5388, %v5400
          %v5402 = vpop.f32.mrf.mxu0
          %5403 = vdwg.mxu0
          %5404 = vmatpush.bf16.msra.mxu0 %v5015
          %5405 = vmatpush.bf16.msra.mxu0 %v5011
          %5406 = vmatpush.bf16.msra.mxu0 %v5007
          %5407 = vmatpush.bf16.msra.mxu0 %v5003
          %5408 = vmatpush.bf16.msra.mxu0 %v4999
          %5409 = vmatpush.bf16.msra.mxu0 %v4995
          %5410 = vmatpush.bf16.msra.mxu0 %v4991
          %5411 = vmatpush.bf16.msra.mxu0 %v4987
          %5412 = vmatmul.bf16.gmra.mxu0 %v3790
          %v5413 = vpop.f32.mrf.mxu0
          %v5414 = vadd.f32 %v5401, %v5413
          %v5415 = vpop.f32.mrf.mxu0
          %5416 = vdwg.mxu0
          %5417 = vmatpush.bf16.msra.mxu0 %v5047
          %5418 = vmatpush.bf16.msra.mxu0 %v5043
          %5419 = vmatpush.bf16.msra.mxu0 %v5039
          %5420 = vmatpush.bf16.msra.mxu0 %v5035
          %5421 = vmatpush.bf16.msra.mxu0 %v5031
          %5422 = vmatpush.bf16.msra.mxu0 %v5027
          %5423 = vmatpush.bf16.msra.mxu0 %v5023
          %5424 = vmatpush.bf16.msra.mxu0 %v5019
          %5425 = vmatmul.bf16.gmra.mxu0 %v3791
          %v5426 = vpop.f32.mrf.mxu0
          %v5427 = vadd.f32 %v5414, %v5426
          %v5428 = vpop.f32.mrf.mxu0
          %5429 = vdwg.mxu0
          %5430 = vmatpush.bf16.msra.mxu0 %v5079
          %5431 = vmatpush.bf16.msra.mxu0 %v5075
          %5432 = vmatpush.bf16.msra.mxu0 %v5071
          %5433 = vmatpush.bf16.msra.mxu0 %v5067
          %5434 = vmatpush.bf16.msra.mxu0 %v5063
          %5435 = vmatpush.bf16.msra.mxu0 %v5059
          %5436 = vmatpush.bf16.msra.mxu0 %v5055
          %5437 = vmatpush.bf16.msra.mxu0 %v5051
          %5438 = vmatmul.bf16.gmra.mxu0 %v3792
          %v5439 = vpop.f32.mrf.mxu0
          %v5440 = vadd.f32 %v5427, %v5439
          %v5441 = vpop.f32.mrf.mxu0
          %5442 = vdwg.mxu0
          %5443 = vmatpush.bf16.msra.mxu0 %v4856
          %5444 = vmatpush.bf16.msra.mxu0 %v4852
          %5445 = vmatpush.bf16.msra.mxu0 %v4848
          %5446 = vmatpush.bf16.msra.mxu0 %v4844
          %5447 = vmatpush.bf16.msra.mxu0 %v4840
          %5448 = vmatpush.bf16.msra.mxu0 %v4836
          %5449 = vmatpush.bf16.msra.mxu0 %v4832
          %5450 = vmatpush.bf16.msra.mxu0 %v4828
          %5451 = vmatmul.bf16.gmra.mxu0 %v3785
          %v5452 = vpop.f32.mrf.mxu0
          %v5453 = vadd.f32 %v4052, %v5452
          %v5454 = vpop.f32.mrf.mxu0
          %5455 = vdwg.mxu0
          %5456 = vmatpush.bf16.msra.mxu0 %v4888
          %5457 = vmatpush.bf16.msra.mxu0 %v4884
          %5458 = vmatpush.bf16.msra.mxu0 %v4880
          %5459 = vmatpush.bf16.msra.mxu0 %v4876
          %5460 = vmatpush.bf16.msra.mxu0 %v4872
          %5461 = vmatpush.bf16.msra.mxu0 %v4868
          %5462 = vmatpush.bf16.msra.mxu0 %v4864
          %5463 = vmatpush.bf16.msra.mxu0 %v4860
          %5464 = vmatmul.bf16.gmra.mxu0 %v3786
          %v5465 = vpop.f32.mrf.mxu0
          %v5466 = vadd.f32 %v5453, %v5465
          %v5467 = vpop.f32.mrf.mxu0
          %5468 = vdwg.mxu0
          %5469 = vmatpush.bf16.msra.mxu0 %v4920
          %5470 = vmatpush.bf16.msra.mxu0 %v4916
          %5471 = vmatpush.bf16.msra.mxu0 %v4912
          %5472 = vmatpush.bf16.msra.mxu0 %v4908
          %5473 = vmatpush.bf16.msra.mxu0 %v4904
          %5474 = vmatpush.bf16.msra.mxu0 %v4900
          %5475 = vmatpush.bf16.msra.mxu0 %v4896
          %5476 = vmatpush.bf16.msra.mxu0 %v4892
          %5477 = vmatmul.bf16.gmra.mxu0 %v3787
          %v5478 = vpop.f32.mrf.mxu0
          %v5479 = vadd.f32 %v5466, %v5478
          %v5480 = vpop.f32.mrf.mxu0
          %5481 = vdwg.mxu0
          %5482 = vmatpush.bf16.msra.mxu0 %v4952
          %5483 = vmatpush.bf16.msra.mxu0 %v4948
          %5484 = vmatpush.bf16.msra.mxu0 %v4944
          %5485 = vmatpush.bf16.msra.mxu0 %v4940
          %5486 = vmatpush.bf16.msra.mxu0 %v4936
          %5487 = vmatpush.bf16.msra.mxu0 %v4932
          %5488 = vmatpush.bf16.msra.mxu0 %v4928
          %5489 = vmatpush.bf16.msra.mxu0 %v4924
          %5490 = vmatmul.bf16.gmra.mxu0 %v3788
          %v5491 = vpop.f32.mrf.mxu0
          %v5492 = vadd.f32 %v5479, %v5491
          %v5493 = vpop.f32.mrf.mxu0
          %5494 = vdwg.mxu0
          %5495 = vmatpush.bf16.msra.mxu0 %v4984
          %5496 = vmatpush.bf16.msra.mxu0 %v4980
          %5497 = vmatpush.bf16.msra.mxu0 %v4976
          %5498 = vmatpush.bf16.msra.mxu0 %v4972
          %5499 = vmatpush.bf16.msra.mxu0 %v4968
          %5500 = vmatpush.bf16.msra.mxu0 %v4964
          %5501 = vmatpush.bf16.msra.mxu0 %v4960
          %5502 = vmatpush.bf16.msra.mxu0 %v4956
          %5503 = vmatmul.bf16.gmra.mxu0 %v3789
          %v5504 = vpop.f32.mrf.mxu0
          %v5505 = vadd.f32 %v5492, %v5504
          %v5506 = vpop.f32.mrf.mxu0
          %5507 = vdwg.mxu0
          %5508 = vmatpush.bf16.msra.mxu0 %v5016
          %5509 = vmatpush.bf16.msra.mxu0 %v5012
          %5510 = vmatpush.bf16.msra.mxu0 %v5008
          %5511 = vmatpush.bf16.msra.mxu0 %v5004
          %5512 = vmatpush.bf16.msra.mxu0 %v5000
          %5513 = vmatpush.bf16.msra.mxu0 %v4996
          %5514 = vmatpush.bf16.msra.mxu0 %v4992
          %5515 = vmatpush.bf16.msra.mxu0 %v4988
          %5516 = vmatmul.bf16.gmra.mxu0 %v3790
          %v5517 = vpop.f32.mrf.mxu0
          %v5518 = vadd.f32 %v5505, %v5517
          %v5519 = vpop.f32.mrf.mxu0
          %5520 = vdwg.mxu0
          %5521 = vmatpush.bf16.msra.mxu0 %v5048
          %5522 = vmatpush.bf16.msra.mxu0 %v5044
          %5523 = vmatpush.bf16.msra.mxu0 %v5040
          %5524 = vmatpush.bf16.msra.mxu0 %v5036
          %5525 = vmatpush.bf16.msra.mxu0 %v5032
          %5526 = vmatpush.bf16.msra.mxu0 %v5028
          %5527 = vmatpush.bf16.msra.mxu0 %v5024
          %5528 = vmatpush.bf16.msra.mxu0 %v5020
          %5529 = vmatmul.bf16.gmra.mxu0 %v3791
          %v5530 = vpop.f32.mrf.mxu0
          %v5531 = vadd.f32 %v5518, %v5530
          %v5532 = vpop.f32.mrf.mxu0
          %5533 = vdwg.mxu0
          %5534 = vmatpush.bf16.msra.mxu0 %v5080
          %5535 = vmatpush.bf16.msra.mxu0 %v5076
          %5536 = vmatpush.bf16.msra.mxu0 %v5072
          %5537 = vmatpush.bf16.msra.mxu0 %v5068
          %5538 = vmatpush.bf16.msra.mxu0 %v5064
          %5539 = vmatpush.bf16.msra.mxu0 %v5060
          %5540 = vmatpush.bf16.msra.mxu0 %v5056
          %5541 = vmatpush.bf16.msra.mxu0 %v5052
          %5542 = vmatmul.bf16.gmra.mxu0 %v3792
          %v5543 = vpop.f32.mrf.mxu0
          %v5544 = vadd.f32 %v5531, %v5543
          %v5545 = vpop.f32.mrf.mxu0
          %5546 = vdwg.mxu0
          %5547 = vmatpush.bf16.msra.mxu0 %v4857
          %5548 = vmatpush.bf16.msra.mxu0 %v4853
          %5549 = vmatpush.bf16.msra.mxu0 %v4849
          %5550 = vmatpush.bf16.msra.mxu0 %v4845
          %5551 = vmatpush.bf16.msra.mxu0 %v4841
          %5552 = vmatpush.bf16.msra.mxu0 %v4837
          %5553 = vmatpush.bf16.msra.mxu0 %v4833
          %5554 = vmatpush.bf16.msra.mxu0 %v4829
          %5555 = vmatmul.bf16.gmra.mxu0 %v3785
          %v5556 = vpop.f32.mrf.mxu0
          %v5557 = vadd.f32 %v4053, %v5556
          %v5558 = vpop.f32.mrf.mxu0
          %5559 = vdwg.mxu0
          %5560 = vmatpush.bf16.msra.mxu0 %v4889
          %5561 = vmatpush.bf16.msra.mxu0 %v4885
          %5562 = vmatpush.bf16.msra.mxu0 %v4881
          %5563 = vmatpush.bf16.msra.mxu0 %v4877
          %5564 = vmatpush.bf16.msra.mxu0 %v4873
          %5565 = vmatpush.bf16.msra.mxu0 %v4869
          %5566 = vmatpush.bf16.msra.mxu0 %v4865
          %5567 = vmatpush.bf16.msra.mxu0 %v4861
          %5568 = vmatmul.bf16.gmra.mxu0 %v3786
          %v5569 = vpop.f32.mrf.mxu0
          %v5570 = vadd.f32 %v5557, %v5569
          %v5571 = vpop.f32.mrf.mxu0
          %5572 = vdwg.mxu0
          %5573 = vmatpush.bf16.msra.mxu0 %v4921
          %5574 = vmatpush.bf16.msra.mxu0 %v4917
          %5575 = vmatpush.bf16.msra.mxu0 %v4913
          %5576 = vmatpush.bf16.msra.mxu0 %v4909
          %5577 = vmatpush.bf16.msra.mxu0 %v4905
          %5578 = vmatpush.bf16.msra.mxu0 %v4901
          %5579 = vmatpush.bf16.msra.mxu0 %v4897
          %5580 = vmatpush.bf16.msra.mxu0 %v4893
          %5581 = vmatmul.bf16.gmra.mxu0 %v3787
          %v5582 = vpop.f32.mrf.mxu0
          %v5583 = vadd.f32 %v5570, %v5582
          %v5584 = vpop.f32.mrf.mxu0
          %5585 = vdwg.mxu0
          %5586 = vmatpush.bf16.msra.mxu0 %v4953
          %5587 = vmatpush.bf16.msra.mxu0 %v4949
          %5588 = vmatpush.bf16.msra.mxu0 %v4945
          %5589 = vmatpush.bf16.msra.mxu0 %v4941
          %5590 = vmatpush.bf16.msra.mxu0 %v4937
          %5591 = vmatpush.bf16.msra.mxu0 %v4933
          %5592 = vmatpush.bf16.msra.mxu0 %v4929
          %5593 = vmatpush.bf16.msra.mxu0 %v4925
          %5594 = vmatmul.bf16.gmra.mxu0 %v3788
          %v5595 = vpop.f32.mrf.mxu0
          %v5596 = vadd.f32 %v5583, %v5595
          %v5597 = vpop.f32.mrf.mxu0
          %5598 = vdwg.mxu0
          %5599 = vmatpush.bf16.msra.mxu0 %v4985
          %5600 = vmatpush.bf16.msra.mxu0 %v4981
          %5601 = vmatpush.bf16.msra.mxu0 %v4977
          %5602 = vmatpush.bf16.msra.mxu0 %v4973
          %5603 = vmatpush.bf16.msra.mxu0 %v4969
          %5604 = vmatpush.bf16.msra.mxu0 %v4965
          %5605 = vmatpush.bf16.msra.mxu0 %v4961
          %5606 = vmatpush.bf16.msra.mxu0 %v4957
          %5607 = vmatmul.bf16.gmra.mxu0 %v3789
          %v5608 = vpop.f32.mrf.mxu0
          %v5609 = vadd.f32 %v5596, %v5608
          %v5610 = vpop.f32.mrf.mxu0
          %5611 = vdwg.mxu0
          %5612 = vmatpush.bf16.msra.mxu0 %v5017
          %5613 = vmatpush.bf16.msra.mxu0 %v5013
          %5614 = vmatpush.bf16.msra.mxu0 %v5009
          %5615 = vmatpush.bf16.msra.mxu0 %v5005
          %5616 = vmatpush.bf16.msra.mxu0 %v5001
          %5617 = vmatpush.bf16.msra.mxu0 %v4997
          %5618 = vmatpush.bf16.msra.mxu0 %v4993
          %5619 = vmatpush.bf16.msra.mxu0 %v4989
          %5620 = vmatmul.bf16.gmra.mxu0 %v3790
          %v5621 = vpop.f32.mrf.mxu0
          %v5622 = vadd.f32 %v5609, %v5621
          %v5623 = vpop.f32.mrf.mxu0
          %5624 = vdwg.mxu0
          %5625 = vmatpush.bf16.msra.mxu0 %v5049
          %5626 = vmatpush.bf16.msra.mxu0 %v5045
          %5627 = vmatpush.bf16.msra.mxu0 %v5041
          %5628 = vmatpush.bf16.msra.mxu0 %v5037
          %5629 = vmatpush.bf16.msra.mxu0 %v5033
          %5630 = vmatpush.bf16.msra.mxu0 %v5029
          %5631 = vmatpush.bf16.msra.mxu0 %v5025
          %5632 = vmatpush.bf16.msra.mxu0 %v5021
          %5633 = vmatmul.bf16.gmra.mxu0 %v3791
          %v5634 = vpop.f32.mrf.mxu0
          %v5635 = vadd.f32 %v5622, %v5634
          %v5636 = vpop.f32.mrf.mxu0
          %5637 = vdwg.mxu0
          %5638 = vmatpush.bf16.msra.mxu0 %v5081
          %5639 = vmatpush.bf16.msra.mxu0 %v5077
          %5640 = vmatpush.bf16.msra.mxu0 %v5073
          %5641 = vmatpush.bf16.msra.mxu0 %v5069
          %5642 = vmatpush.bf16.msra.mxu0 %v5065
          %5643 = vmatpush.bf16.msra.mxu0 %v5061
          %5644 = vmatpush.bf16.msra.mxu0 %v5057
          %5645 = vmatpush.bf16.msra.mxu0 %v5053
          %5646 = vmatmul.bf16.gmra.mxu0 %v3792
          %v5647 = vpop.f32.mrf.mxu0
          %v5648 = vadd.f32 %v5635, %v5647
          %v5649 = vpop.f32.mrf.mxu0
          %5650 = vdwg.mxu0
          %5651 = vmatpush.bf16.msra.mxu0 %v4858
          %5652 = vmatpush.bf16.msra.mxu0 %v4854
          %5653 = vmatpush.bf16.msra.mxu0 %v4850
          %5654 = vmatpush.bf16.msra.mxu0 %v4846
          %5655 = vmatpush.bf16.msra.mxu0 %v4842
          %5656 = vmatpush.bf16.msra.mxu0 %v4838
          %5657 = vmatpush.bf16.msra.mxu0 %v4834
          %5658 = vmatpush.bf16.msra.mxu0 %v4830
          %5659 = vmatmul.bf16.gmra.mxu0 %v3785
          %v5660 = vpop.f32.mrf.mxu0
          %v5661 = vadd.f32 %v4054, %v5660
          %v5662 = vpop.f32.mrf.mxu0
          %5663 = vdwg.mxu0
          %5664 = vmatpush.bf16.msra.mxu0 %v4890
          %5665 = vmatpush.bf16.msra.mxu0 %v4886
          %5666 = vmatpush.bf16.msra.mxu0 %v4882
          %5667 = vmatpush.bf16.msra.mxu0 %v4878
          %5668 = vmatpush.bf16.msra.mxu0 %v4874
          %5669 = vmatpush.bf16.msra.mxu0 %v4870
          %5670 = vmatpush.bf16.msra.mxu0 %v4866
          %5671 = vmatpush.bf16.msra.mxu0 %v4862
          %5672 = vmatmul.bf16.gmra.mxu0 %v3786
          %v5673 = vpop.f32.mrf.mxu0
          %v5674 = vadd.f32 %v5661, %v5673
          %v5675 = vpop.f32.mrf.mxu0
          %5676 = vdwg.mxu0
          %5677 = vmatpush.bf16.msra.mxu0 %v4922
          %5678 = vmatpush.bf16.msra.mxu0 %v4918
          %5679 = vmatpush.bf16.msra.mxu0 %v4914
          %5680 = vmatpush.bf16.msra.mxu0 %v4910
          %5681 = vmatpush.bf16.msra.mxu0 %v4906
          %5682 = vmatpush.bf16.msra.mxu0 %v4902
          %5683 = vmatpush.bf16.msra.mxu0 %v4898
          %5684 = vmatpush.bf16.msra.mxu0 %v4894
          %5685 = vmatmul.bf16.gmra.mxu0 %v3787
          %v5686 = vpop.f32.mrf.mxu0
          %v5687 = vadd.f32 %v5674, %v5686
          %v5688 = vpop.f32.mrf.mxu0
          %5689 = vdwg.mxu0
          %5690 = vmatpush.bf16.msra.mxu0 %v4954
          %5691 = vmatpush.bf16.msra.mxu0 %v4950
          %5692 = vmatpush.bf16.msra.mxu0 %v4946
          %5693 = vmatpush.bf16.msra.mxu0 %v4942
          %5694 = vmatpush.bf16.msra.mxu0 %v4938
          %5695 = vmatpush.bf16.msra.mxu0 %v4934
          %5696 = vmatpush.bf16.msra.mxu0 %v4930
          %5697 = vmatpush.bf16.msra.mxu0 %v4926
          %5698 = vmatmul.bf16.gmra.mxu0 %v3788
          %v5699 = vpop.f32.mrf.mxu0
          %v5700 = vadd.f32 %v5687, %v5699
          %v5701 = vpop.f32.mrf.mxu0
          %5702 = vdwg.mxu0
          %5703 = vmatpush.bf16.msra.mxu0 %v4986
          %5704 = vmatpush.bf16.msra.mxu0 %v4982
          %5705 = vmatpush.bf16.msra.mxu0 %v4978
          %5706 = vmatpush.bf16.msra.mxu0 %v4974
          %5707 = vmatpush.bf16.msra.mxu0 %v4970
          %5708 = vmatpush.bf16.msra.mxu0 %v4966
          %5709 = vmatpush.bf16.msra.mxu0 %v4962
          %5710 = vmatpush.bf16.msra.mxu0 %v4958
          %5711 = vmatmul.bf16.gmra.mxu0 %v3789
          %v5712 = vpop.f32.mrf.mxu0
          %v5713 = vadd.f32 %v5700, %v5712
          %v5714 = vpop.f32.mrf.mxu0
          %5715 = vdwg.mxu0
          %5716 = vmatpush.bf16.msra.mxu0 %v5018
          %5717 = vmatpush.bf16.msra.mxu0 %v5014
          %5718 = vmatpush.bf16.msra.mxu0 %v5010
          %5719 = vmatpush.bf16.msra.mxu0 %v5006
          %5720 = vmatpush.bf16.msra.mxu0 %v5002
          %5721 = vmatpush.bf16.msra.mxu0 %v4998
          %5722 = vmatpush.bf16.msra.mxu0 %v4994
          %5723 = vmatpush.bf16.msra.mxu0 %v4990
          %5724 = vmatmul.bf16.gmra.mxu0 %v3790
          %v5725 = vpop.f32.mrf.mxu0
          %v5726 = vadd.f32 %v5713, %v5725
          %v5727 = vpop.f32.mrf.mxu0
          %5728 = vdwg.mxu0
          %5729 = vmatpush.bf16.msra.mxu0 %v5050
          %5730 = vmatpush.bf16.msra.mxu0 %v5046
          %5731 = vmatpush.bf16.msra.mxu0 %v5042
          %5732 = vmatpush.bf16.msra.mxu0 %v5038
          %5733 = vmatpush.bf16.msra.mxu0 %v5034
          %5734 = vmatpush.bf16.msra.mxu0 %v5030
          %5735 = vmatpush.bf16.msra.mxu0 %v5026
          %5736 = vmatpush.bf16.msra.mxu0 %v5022
          %5737 = vmatmul.bf16.gmra.mxu0 %v3791
          %v5738 = vpop.f32.mrf.mxu0
          %v5739 = vadd.f32 %v5726, %v5738
          %v5740 = vpop.f32.mrf.mxu0
          %5741 = vdwg.mxu0
          %5742 = vmatpush.bf16.msra.mxu0 %v5082
          %5743 = vmatpush.bf16.msra.mxu0 %v5078
          %5744 = vmatpush.bf16.msra.mxu0 %v5074
          %5745 = vmatpush.bf16.msra.mxu0 %v5070
          %5746 = vmatpush.bf16.msra.mxu0 %v5066
          %5747 = vmatpush.bf16.msra.mxu0 %v5062
          %5748 = vmatpush.bf16.msra.mxu0 %v5058
          %5749 = vmatpush.bf16.msra.mxu0 %v5054
          %5750 = vmatmul.bf16.gmra.mxu0 %v3792
          %v5751 = vpop.f32.mrf.mxu0
          %v5752 = vadd.f32 %v5739, %v5751
          %v5753 = vpop.f32.mrf.mxu0
          %5754 = vdwg.mxu0
          %v5755 = vmax.f32 %v5440, 0.0
          %v5756 = vmax.f32 %v5544, 0.0
          %v5757 = vmax.f32 %v5648, 0.0
          %v5758 = vmax.f32 %v5752, 0.0
          %v5759 = vpack.c.bf16 %v5755, %v5755
          %v5760 = vpack.c.bf16 %v5756, %v5756
          %v5761 = vpack.c.bf16 %v5757, %v5757
          %v5762 = vpack.c.bf16 %v5758, %v5758
          %v5763 = vld [vmem:[#allocation8] sm:$0xff]
          %v5764 = vld [vmem:[#allocation8 + $0x8] sm:$0xff]
          %v5765 = vld [vmem:[#allocation8 + $0x10] sm:$0xff]
          %v5766 = vld [vmem:[#allocation8 + $0x18] sm:$0xff]
          %v5767 = vld [vmem:[#allocation8 + $0x20] sm:$0xff]
          %v5768 = vld [vmem:[#allocation8 + $0x28] sm:$0xff]
          %v5769 = vld [vmem:[#allocation8 + $0x30] sm:$0xff]
          %v5770 = vld [vmem:[#allocation8 + $0x38] sm:$0xff]
          %v5771 = vld [vmem:[#allocation8 + $0x40] sm:$0xff]
          %v5772 = vld [vmem:[#allocation8 + $0x48] sm:$0xff]
          %v5773 = vld [vmem:[#allocation8 + $0x50] sm:$0xff]
          %v5774 = vld [vmem:[#allocation8 + $0x58] sm:$0xff]
          %v5775 = vld [vmem:[#allocation8 + $0x60] sm:$0xff]
          %v5776 = vld [vmem:[#allocation8 + $0x68] sm:$0xff]
          %v5777 = vld [vmem:[#allocation8 + $0x70] sm:$0xff]
          %v5778 = vld [vmem:[#allocation8 + $0x78] sm:$0xff]
          %v5779 = vld [vmem:[#allocation8 + $0x80] sm:$0xff]
          %v5780 = vld [vmem:[#allocation8 + $0x88] sm:$0xff]
          %v5781 = vld [vmem:[#allocation8 + $0x90] sm:$0xff]
          %v5782 = vld [vmem:[#allocation8 + $0x98] sm:$0xff]
          %v5783 = vld [vmem:[#allocation8 + $0xa0] sm:$0xff]
          %v5784 = vld [vmem:[#allocation8 + $0xa8] sm:$0xff]
          %v5785 = vld [vmem:[#allocation8 + $0xb0] sm:$0xff]
          %v5786 = vld [vmem:[#allocation8 + $0xb8] sm:$0xff]
          %v5787 = vld [vmem:[#allocation8 + $0xc0] sm:$0xff]
          %v5788 = vld [vmem:[#allocation8 + $0xc8] sm:$0xff]
          %v5789 = vld [vmem:[#allocation8 + $0xd0] sm:$0xff]
          %v5790 = vld [vmem:[#allocation8 + $0xd8] sm:$0xff]
          %v5791 = vld [vmem:[#allocation8 + $0xe0] sm:$0xff]
          %v5792 = vld [vmem:[#allocation8 + $0xe8] sm:$0xff]
          %v5793 = vld [vmem:[#allocation8 + $0xf0] sm:$0xff]
          %v5794 = vld [vmem:[#allocation8 + $0xf8] sm:$0xff]
          %v5795 = vld [vmem:[#allocation8 + $0x100] sm:$0xff]
          %v5796 = vld [vmem:[#allocation8 + $0x108] sm:$0xff]
          %v5797 = vld [vmem:[#allocation8 + $0x110] sm:$0xff]
          %v5798 = vld [vmem:[#allocation8 + $0x118] sm:$0xff]
          %v5799 = vld [vmem:[#allocation8 + $0x120] sm:$0xff]
          %v5800 = vld [vmem:[#allocation8 + $0x128] sm:$0xff]
          %v5801 = vld [vmem:[#allocation8 + $0x130] sm:$0xff]
          %v5802 = vld [vmem:[#allocation8 + $0x138] sm:$0xff]
          %v5803 = vld [vmem:[#allocation8 + $0x140] sm:$0xff]
          %v5804 = vld [vmem:[#allocation8 + $0x148] sm:$0xff]
          %v5805 = vld [vmem:[#allocation8 + $0x150] sm:$0xff]
          %v5806 = vld [vmem:[#allocation8 + $0x158] sm:$0xff]
          %v5807 = vld [vmem:[#allocation8 + $0x160] sm:$0xff]
          %v5808 = vld [vmem:[#allocation8 + $0x168] sm:$0xff]
          %v5809 = vld [vmem:[#allocation8 + $0x170] sm:$0xff]
          %v5810 = vld [vmem:[#allocation8 + $0x178] sm:$0xff]
          %v5811 = vld [vmem:[#allocation8 + $0x180] sm:$0xff]
          %v5812 = vld [vmem:[#allocation8 + $0x188] sm:$0xff]
          %v5813 = vld [vmem:[#allocation8 + $0x190] sm:$0xff]
          %v5814 = vld [vmem:[#allocation8 + $0x198] sm:$0xff]
          %v5815 = vld [vmem:[#allocation8 + $0x1a0] sm:$0xff]
          %v5816 = vld [vmem:[#allocation8 + $0x1a8] sm:$0xff]
          %v5817 = vld [vmem:[#allocation8 + $0x1b0] sm:$0xff]
          %v5818 = vld [vmem:[#allocation8 + $0x1b8] sm:$0xff]
          %v5819 = vld [vmem:[#allocation8 + $0x1c0] sm:$0xff]
          %v5820 = vld [vmem:[#allocation8 + $0x1c8] sm:$0xff]
          %v5821 = vld [vmem:[#allocation8 + $0x1d0] sm:$0xff]
          %v5822 = vld [vmem:[#allocation8 + $0x1d8] sm:$0xff]
          %v5823 = vld [vmem:[#allocation8 + $0x1e0] sm:$0xff]
          %v5824 = vld [vmem:[#allocation8 + $0x1e8] sm:$0xff]
          %v5825 = vld [vmem:[#allocation8 + $0x1f0] sm:$0xff]
          %v5826 = vld [vmem:[#allocation8 + $0x1f8] sm:$0xff]
          %v5827 = vld [vmem:[%s10] sm:$0x3]
          %v5829 = vperm.slane %v5827, 0
          %v5830 = vperm.slane %v5827, 1
          %v5897 = vunpack.c.l.b16 %v5763
          %v5898 = vunpack.c.h.b16 %v5763
          %v5899 = vunpack.c.l.b16 %v5764
          %v5900 = vunpack.c.h.b16 %v5764
          %v5901 = vunpack.c.l.b16 %v5765
          %v5902 = vunpack.c.h.b16 %v5765
          %v5903 = vunpack.c.l.b16 %v5766
          %v5904 = vunpack.c.h.b16 %v5766
          %v5905 = vunpack.c.l.b16 %v5767
          %v5906 = vunpack.c.h.b16 %v5767
          %v5907 = vunpack.c.l.b16 %v5768
          %v5908 = vunpack.c.h.b16 %v5768
          %v5909 = vunpack.c.l.b16 %v5769
          %v5910 = vunpack.c.h.b16 %v5769
          %v5911 = vunpack.c.l.b16 %v5770
          %v5912 = vunpack.c.h.b16 %v5770
          %v5913 = vunpack.c.l.b16 %v5771
          %v5914 = vunpack.c.h.b16 %v5771
          %v5915 = vunpack.c.l.b16 %v5772
          %v5916 = vunpack.c.h.b16 %v5772
          %v5917 = vunpack.c.l.b16 %v5773
          %v5918 = vunpack.c.h.b16 %v5773
          %v5919 = vunpack.c.l.b16 %v5774
          %v5920 = vunpack.c.h.b16 %v5774
          %v5921 = vunpack.c.l.b16 %v5775
          %v5922 = vunpack.c.h.b16 %v5775
          %v5923 = vunpack.c.l.b16 %v5776
          %v5924 = vunpack.c.h.b16 %v5776
          %v5925 = vunpack.c.l.b16 %v5777
          %v5926 = vunpack.c.h.b16 %v5777
          %v5927 = vunpack.c.l.b16 %v5778
          %v5928 = vunpack.c.h.b16 %v5778
          %v5929 = vunpack.c.l.b16 %v5779
          %v5930 = vunpack.c.h.b16 %v5779
          %v5931 = vunpack.c.l.b16 %v5780
          %v5932 = vunpack.c.h.b16 %v5780
          %v5933 = vunpack.c.l.b16 %v5781
          %v5934 = vunpack.c.h.b16 %v5781
          %v5935 = vunpack.c.l.b16 %v5782
          %v5936 = vunpack.c.h.b16 %v5782
          %v5937 = vunpack.c.l.b16 %v5783
          %v5938 = vunpack.c.h.b16 %v5783
          %v5939 = vunpack.c.l.b16 %v5784
          %v5940 = vunpack.c.h.b16 %v5784
          %v5941 = vunpack.c.l.b16 %v5785
          %v5942 = vunpack.c.h.b16 %v5785
          %v5943 = vunpack.c.l.b16 %v5786
          %v5944 = vunpack.c.h.b16 %v5786
          %v5945 = vunpack.c.l.b16 %v5787
          %v5946 = vunpack.c.h.b16 %v5787
          %v5947 = vunpack.c.l.b16 %v5788
          %v5948 = vunpack.c.h.b16 %v5788
          %v5949 = vunpack.c.l.b16 %v5789
          %v5950 = vunpack.c.h.b16 %v5789
          %v5951 = vunpack.c.l.b16 %v5790
          %v5952 = vunpack.c.h.b16 %v5790
          %v5953 = vunpack.c.l.b16 %v5791
          %v5954 = vunpack.c.h.b16 %v5791
          %v5955 = vunpack.c.l.b16 %v5792
          %v5956 = vunpack.c.h.b16 %v5792
          %v5957 = vunpack.c.l.b16 %v5793
          %v5958 = vunpack.c.h.b16 %v5793
          %v5959 = vunpack.c.l.b16 %v5794
          %v5960 = vunpack.c.h.b16 %v5794
          %v5961 = vunpack.c.l.b16 %v5795
          %v5962 = vunpack.c.h.b16 %v5795
          %v5963 = vunpack.c.l.b16 %v5796
          %v5964 = vunpack.c.h.b16 %v5796
          %v5965 = vunpack.c.l.b16 %v5797
          %v5966 = vunpack.c.h.b16 %v5797
          %v5967 = vunpack.c.l.b16 %v5798
          %v5968 = vunpack.c.h.b16 %v5798
          %v5969 = vunpack.c.l.b16 %v5799
          %v5970 = vunpack.c.h.b16 %v5799
          %v5971 = vunpack.c.l.b16 %v5800
          %v5972 = vunpack.c.h.b16 %v5800
          %v5973 = vunpack.c.l.b16 %v5801
          %v5974 = vunpack.c.h.b16 %v5801
          %v5975 = vunpack.c.l.b16 %v5802
          %v5976 = vunpack.c.h.b16 %v5802
          %v5977 = vunpack.c.l.b16 %v5803
          %v5978 = vunpack.c.h.b16 %v5803
          %v5979 = vunpack.c.l.b16 %v5804
          %v5980 = vunpack.c.h.b16 %v5804
          %v5981 = vunpack.c.l.b16 %v5805
          %v5982 = vunpack.c.h.b16 %v5805
          %v5983 = vunpack.c.l.b16 %v5806
          %v5984 = vunpack.c.h.b16 %v5806
          %v5985 = vunpack.c.l.b16 %v5807
          %v5986 = vunpack.c.h.b16 %v5807
          %v5987 = vunpack.c.l.b16 %v5808
          %v5988 = vunpack.c.h.b16 %v5808
          %v5989 = vunpack.c.l.b16 %v5809
          %v5990 = vunpack.c.h.b16 %v5809
          %v5991 = vunpack.c.l.b16 %v5810
          %v5992 = vunpack.c.h.b16 %v5810
          %v5993 = vunpack.c.l.b16 %v5811
          %v5994 = vunpack.c.h.b16 %v5811
          %v5995 = vunpack.c.l.b16 %v5812
          %v5996 = vunpack.c.h.b16 %v5812
          %v5997 = vunpack.c.l.b16 %v5813
          %v5998 = vunpack.c.h.b16 %v5813
          %v5999 = vunpack.c.l.b16 %v5814
          %v6000 = vunpack.c.h.b16 %v5814
          %v6001 = vunpack.c.l.b16 %v5815
          %v6002 = vunpack.c.h.b16 %v5815
          %v6003 = vunpack.c.l.b16 %v5816
          %v6004 = vunpack.c.h.b16 %v5816
          %v6005 = vunpack.c.l.b16 %v5817
          %v6006 = vunpack.c.h.b16 %v5817
          %v6007 = vunpack.c.l.b16 %v5818
          %v6008 = vunpack.c.h.b16 %v5818
          %v6009 = vunpack.c.l.b16 %v5819
          %v6010 = vunpack.c.h.b16 %v5819
          %v6011 = vunpack.c.l.b16 %v5820
          %v6012 = vunpack.c.h.b16 %v5820
          %v6013 = vunpack.c.l.b16 %v5821
          %v6014 = vunpack.c.h.b16 %v5821
          %v6015 = vunpack.c.l.b16 %v5822
          %v6016 = vunpack.c.h.b16 %v5822
          %v6017 = vunpack.c.l.b16 %v5823
          %v6018 = vunpack.c.h.b16 %v5823
          %v6019 = vunpack.c.l.b16 %v5824
          %v6020 = vunpack.c.h.b16 %v5824
          %v6021 = vunpack.c.l.b16 %v5825
          %v6022 = vunpack.c.h.b16 %v5825
          %v6023 = vunpack.c.l.b16 %v5826
          %v6024 = vunpack.c.h.b16 %v5826
          %v6025 = vpack.c.b16 %v5899, %v5897
          %v6026 = vpack.c.b16 %v5900, %v5898
          %v6027 = vpack.c.b16 %v5903, %v5901
          %v6028 = vpack.c.b16 %v5904, %v5902
          %v6029 = vpack.c.b16 %v5907, %v5905
          %v6030 = vpack.c.b16 %v5908, %v5906
          %v6031 = vpack.c.b16 %v5911, %v5909
          %v6032 = vpack.c.b16 %v5912, %v5910
          %v6033 = vpack.c.b16 %v5915, %v5913
          %v6034 = vpack.c.b16 %v5916, %v5914
          %v6035 = vpack.c.b16 %v5919, %v5917
          %v6036 = vpack.c.b16 %v5920, %v5918
          %v6037 = vpack.c.b16 %v5923, %v5921
          %v6038 = vpack.c.b16 %v5924, %v5922
          %v6039 = vpack.c.b16 %v5927, %v5925
          %v6040 = vpack.c.b16 %v5928, %v5926
          %v6041 = vpack.c.b16 %v5931, %v5929
          %v6042 = vpack.c.b16 %v5932, %v5930
          %v6043 = vpack.c.b16 %v5935, %v5933
          %v6044 = vpack.c.b16 %v5936, %v5934
          %v6045 = vpack.c.b16 %v5939, %v5937
          %v6046 = vpack.c.b16 %v5940, %v5938
          %v6047 = vpack.c.b16 %v5943, %v5941
          %v6048 = vpack.c.b16 %v5944, %v5942
          %v6049 = vpack.c.b16 %v5947, %v5945
          %v6050 = vpack.c.b16 %v5948, %v5946
          %v6051 = vpack.c.b16 %v5951, %v5949
          %v6052 = vpack.c.b16 %v5952, %v5950
          %v6053 = vpack.c.b16 %v5955, %v5953
          %v6054 = vpack.c.b16 %v5956, %v5954
          %v6055 = vpack.c.b16 %v5959, %v5957
          %v6056 = vpack.c.b16 %v5960, %v5958
          %v6057 = vpack.c.b16 %v5963, %v5961
          %v6058 = vpack.c.b16 %v5964, %v5962
          %v6059 = vpack.c.b16 %v5967, %v5965
          %v6060 = vpack.c.b16 %v5968, %v5966
          %v6061 = vpack.c.b16 %v5971, %v5969
          %v6062 = vpack.c.b16 %v5972, %v5970
          %v6063 = vpack.c.b16 %v5975, %v5973
          %v6064 = vpack.c.b16 %v5976, %v5974
          %v6065 = vpack.c.b16 %v5979, %v5977
          %v6066 = vpack.c.b16 %v5980, %v5978
          %v6067 = vpack.c.b16 %v5983, %v5981
          %v6068 = vpack.c.b16 %v5984, %v5982
          %v6069 = vpack.c.b16 %v5987, %v5985
          %v6070 = vpack.c.b16 %v5988, %v5986
          %v6071 = vpack.c.b16 %v5991, %v5989
          %v6072 = vpack.c.b16 %v5992, %v5990
          %v6073 = vpack.c.b16 %v5995, %v5993
          %v6074 = vpack.c.b16 %v5996, %v5994
          %v6075 = vpack.c.b16 %v5999, %v5997
          %v6076 = vpack.c.b16 %v6000, %v5998
          %v6077 = vpack.c.b16 %v6003, %v6001
          %v6078 = vpack.c.b16 %v6004, %v6002
          %v6079 = vpack.c.b16 %v6007, %v6005
          %v6080 = vpack.c.b16 %v6008, %v6006
          %v6081 = vpack.c.b16 %v6011, %v6009
          %v6082 = vpack.c.b16 %v6012, %v6010
          %v6083 = vpack.c.b16 %v6015, %v6013
          %v6084 = vpack.c.b16 %v6016, %v6014
          %v6085 = vpack.c.b16 %v6019, %v6017
          %v6086 = vpack.c.b16 %v6020, %v6018
          %v6087 = vpack.c.b16 %v6023, %v6021
          %v6088 = vpack.c.b16 %v6024, %v6022
          %6153 = vmatpush.bf16.msra.mxu0 %v6039
          %6154 = vmatpush.bf16.msra.mxu0 %v6037
          %6155 = vmatpush.bf16.msra.mxu0 %v6035
          %6156 = vmatpush.bf16.msra.mxu0 %v6033
          %6157 = vmatpush.bf16.msra.mxu0 %v6031
          %6158 = vmatpush.bf16.msra.mxu0 %v6029
          %6159 = vmatpush.bf16.msra.mxu0 %v6027
          %6160 = vmatpush.bf16.msra.mxu0 %v6025
          %6161 = vmatmul.bf16.gmra.mxu0 %v5759
          %v6162 = vpop.f32.mrf.mxu0
          %v6163 = vadd.f32 %v5829, %v6162
          %v6164 = vpop.f32.mrf.mxu0
          %6165 = vdwg.mxu0
          %6166 = vmatpush.bf16.msra.mxu0 %v6055
          %6167 = vmatpush.bf16.msra.mxu0 %v6053
          %6168 = vmatpush.bf16.msra.mxu0 %v6051
          %6169 = vmatpush.bf16.msra.mxu0 %v6049
          %6170 = vmatpush.bf16.msra.mxu0 %v6047
          %6171 = vmatpush.bf16.msra.mxu0 %v6045
          %6172 = vmatpush.bf16.msra.mxu0 %v6043
          %6173 = vmatpush.bf16.msra.mxu0 %v6041
          %6174 = vmatmul.bf16.gmra.mxu0 %v5760
          %v6175 = vpop.f32.mrf.mxu0
          %v6176 = vadd.f32 %v6163, %v6175
          %v6177 = vpop.f32.mrf.mxu0
          %6178 = vdwg.mxu0
          %6179 = vmatpush.bf16.msra.mxu0 %v6071
          %6180 = vmatpush.bf16.msra.mxu0 %v6069
          %6181 = vmatpush.bf16.msra.mxu0 %v6067
          %6182 = vmatpush.bf16.msra.mxu0 %v6065
          %6183 = vmatpush.bf16.msra.mxu0 %v6063
          %6184 = vmatpush.bf16.msra.mxu0 %v6061
          %6185 = vmatpush.bf16.msra.mxu0 %v6059
          %6186 = vmatpush.bf16.msra.mxu0 %v6057
          %6187 = vmatmul.bf16.gmra.mxu0 %v5761
          %v6188 = vpop.f32.mrf.mxu0
          %v6189 = vadd.f32 %v6176, %v6188
          %v6190 = vpop.f32.mrf.mxu0
          %6191 = vdwg.mxu0
          %6192 = vmatpush.bf16.msra.mxu0 %v6087
          %6193 = vmatpush.bf16.msra.mxu0 %v6085
          %6194 = vmatpush.bf16.msra.mxu0 %v6083
          %6195 = vmatpush.bf16.msra.mxu0 %v6081
          %6196 = vmatpush.bf16.msra.mxu0 %v6079
          %6197 = vmatpush.bf16.msra.mxu0 %v6077
          %6198 = vmatpush.bf16.msra.mxu0 %v6075
          %6199 = vmatpush.bf16.msra.mxu0 %v6073
          %6200 = vmatmul.bf16.gmra.mxu0 %v5762
          %v6201 = vpop.f32.mrf.mxu0
          %v6202 = vadd.f32 %v6189, %v6201
          %v6203 = vpop.f32.mrf.mxu0
          %6204 = vdwg.mxu0
          %6205 = vmatpush.bf16.msra.mxu0 %v6040
          %6206 = vmatpush.bf16.msra.mxu0 %v6038
          %6207 = vmatpush.bf16.msra.mxu0 %v6036
          %6208 = vmatpush.bf16.msra.mxu0 %v6034
          %6209 = vmatpush.bf16.msra.mxu0 %v6032
          %6210 = vmatpush.bf16.msra.mxu0 %v6030
          %6211 = vmatpush.bf16.msra.mxu0 %v6028
          %6212 = vmatpush.bf16.msra.mxu0 %v6026
          %6213 = vmatmul.bf16.gmra.mxu0 %v5759
          %v6214 = vpop.f32.mrf.mxu0
          %v6215 = vadd.f32 %v5830, %v6214
          %v6216 = vpop.f32.mrf.mxu0
          %6217 = vdwg.mxu0
          %6218 = vmatpush.bf16.msra.mxu0 %v6056
          %6219 = vmatpush.bf16.msra.mxu0 %v6054
          %6220 = vmatpush.bf16.msra.mxu0 %v6052
          %6221 = vmatpush.bf16.msra.mxu0 %v6050
          %6222 = vmatpush.bf16.msra.mxu0 %v6048
          %6223 = vmatpush.bf16.msra.mxu0 %v6046
          %6224 = vmatpush.bf16.msra.mxu0 %v6044
          %6225 = vmatpush.bf16.msra.mxu0 %v6042
          %6226 = vmatmul.bf16.gmra.mxu0 %v5760
          %v6227 = vpop.f32.mrf.mxu0
          %v6228 = vadd.f32 %v6215, %v6227
          %v6229 = vpop.f32.mrf.mxu0
          %6230 = vdwg.mxu0
          %6231 = vmatpush.bf16.msra.mxu0 %v6072
          %6232 = vmatpush.bf16.msra.mxu0 %v6070
          %6233 = vmatpush.bf16.msra.mxu0 %v6068
          %6234 = vmatpush.bf16.msra.mxu0 %v6066
          %6235 = vmatpush.bf16.msra.mxu0 %v6064
          %6236 = vmatpush.bf16.msra.mxu0 %v6062
          %6237 = vmatpush.bf16.msra.mxu0 %v6060
          %6238 = vmatpush.bf16.msra.mxu0 %v6058
          %6239 = vmatmul.bf16.gmra.mxu0 %v5761
          %v6240 = vpop.f32.mrf.mxu0
          %v6241 = vadd.f32 %v6228, %v6240
          %v6242 = vpop.f32.mrf.mxu0
          %6243 = vdwg.mxu0
          %6244 = vmatpush.bf16.msra.mxu0 %v6088
          %6245 = vmatpush.bf16.msra.mxu0 %v6086
          %6246 = vmatpush.bf16.msra.mxu0 %v6084
          %6247 = vmatpush.bf16.msra.mxu0 %v6082
          %6248 = vmatpush.bf16.msra.mxu0 %v6080
          %6249 = vmatpush.bf16.msra.mxu0 %v6078
          %6250 = vmatpush.bf16.msra.mxu0 %v6076
          %6251 = vmatpush.bf16.msra.mxu0 %v6074
          %6252 = vmatmul.bf16.gmra.mxu0 %v5762
          %v6253 = vpop.f32.mrf.mxu0
          %v6254 = vadd.f32 %v6241, %v6253
          %v6255 = vpop.f32.mrf.mxu0
          %6256 = vdwg.mxu0
          %v6257 = vmax.f32 %v6202, 0.0
          %v6258 = vmax.f32 %v6254, 0.0
          %v6259 = vpack.c.bf16 %v6257, %v6257
          %v6260 = vpack.c.bf16 %v6258, %v6258
          %v6261 = vld [vmem:[#allocation10] sm:$0xff]
          %v6262 = vld [vmem:[#allocation10 + $0x8] sm:$0xff]
          %v6263 = vld [vmem:[#allocation10 + $0x10] sm:$0xff]
          %v6264 = vld [vmem:[#allocation10 + $0x18] sm:$0xff]
          %v6265 = vld [vmem:[#allocation10 + $0x20] sm:$0xff]
          %v6266 = vld [vmem:[#allocation10 + $0x28] sm:$0xff]
          %v6267 = vld [vmem:[#allocation10 + $0x30] sm:$0xff]
          %v6268 = vld [vmem:[#allocation10 + $0x38] sm:$0xff]
          %v6269 = vld [vmem:[#allocation10 + $0x40] sm:$0xff]
          %v6270 = vld [vmem:[#allocation10 + $0x48] sm:$0xff]
          %v6271 = vld [vmem:[#allocation10 + $0x50] sm:$0xff]
          %v6272 = vld [vmem:[#allocation10 + $0x58] sm:$0xff]
          %v6273 = vld [vmem:[#allocation10 + $0x60] sm:$0xff]
          %v6274 = vld [vmem:[#allocation10 + $0x68] sm:$0xff]
          %v6275 = vld [vmem:[#allocation10 + $0x70] sm:$0xff]
          %v6276 = vld [vmem:[#allocation10 + $0x78] sm:$0xff]
          %v6277 = vld [vmem:[#allocation10 + $0x80] sm:$0xff]
          %v6278 = vld [vmem:[#allocation10 + $0x88] sm:$0xff]
          %v6279 = vld [vmem:[#allocation10 + $0x90] sm:$0xff]
          %v6280 = vld [vmem:[#allocation10 + $0x98] sm:$0xff]
          %v6281 = vld [vmem:[#allocation10 + $0xa0] sm:$0xff]
          %v6282 = vld [vmem:[#allocation10 + $0xa8] sm:$0xff]
          %v6283 = vld [vmem:[#allocation10 + $0xb0] sm:$0xff]
          %v6284 = vld [vmem:[#allocation10 + $0xb8] sm:$0xff]
          %v6285 = vld [vmem:[#allocation10 + $0xc0] sm:$0xff]
          %v6286 = vld [vmem:[#allocation10 + $0xc8] sm:$0xff]
          %v6287 = vld [vmem:[#allocation10 + $0xd0] sm:$0xff]
          %v6288 = vld [vmem:[#allocation10 + $0xd8] sm:$0xff]
          %v6289 = vld [vmem:[#allocation10 + $0xe0] sm:$0xff]
          %v6290 = vld [vmem:[#allocation10 + $0xe8] sm:$0xff]
          %v6291 = vld [vmem:[#allocation10 + $0xf0] sm:$0xff]
          %v6292 = vld [vmem:[#allocation10 + $0xf8] sm:$0xff]
          %v6293 = vld [vmem:[%s12] sm:$0x3]
          %v6295 = vperm.slane %v6293, 0
          %v6296 = vperm.slane %v6293, 1
          %v6331 = vunpack.c.l.b16 %v6261
          %v6332 = vunpack.c.h.b16 %v6261
          %v6333 = vunpack.c.l.b16 %v6262
          %v6334 = vunpack.c.h.b16 %v6262
          %v6335 = vunpack.c.l.b16 %v6263
          %v6336 = vunpack.c.h.b16 %v6263
          %v6337 = vunpack.c.l.b16 %v6264
          %v6338 = vunpack.c.h.b16 %v6264
          %v6339 = vunpack.c.l.b16 %v6265
          %v6340 = vunpack.c.h.b16 %v6265
          %v6341 = vunpack.c.l.b16 %v6266
          %v6342 = vunpack.c.h.b16 %v6266
          %v6343 = vunpack.c.l.b16 %v6267
          %v6344 = vunpack.c.h.b16 %v6267
          %v6345 = vunpack.c.l.b16 %v6268
          %v6346 = vunpack.c.h.b16 %v6268
          %v6347 = vunpack.c.l.b16 %v6269
          %v6348 = vunpack.c.h.b16 %v6269
          %v6349 = vunpack.c.l.b16 %v6270
          %v6350 = vunpack.c.h.b16 %v6270
          %v6351 = vunpack.c.l.b16 %v6271
          %v6352 = vunpack.c.h.b16 %v6271
          %v6353 = vunpack.c.l.b16 %v6272
          %v6354 = vunpack.c.h.b16 %v6272
          %v6355 = vunpack.c.l.b16 %v6273
          %v6356 = vunpack.c.h.b16 %v6273
          %v6357 = vunpack.c.l.b16 %v6274
          %v6358 = vunpack.c.h.b16 %v6274
          %v6359 = vunpack.c.l.b16 %v6275
          %v6360 = vunpack.c.h.b16 %v6275
          %v6361 = vunpack.c.l.b16 %v6276
          %v6362 = vunpack.c.h.b16 %v6276
          %v6363 = vunpack.c.l.b16 %v6277
          %v6364 = vunpack.c.h.b16 %v6277
          %v6365 = vunpack.c.l.b16 %v6278
          %v6366 = vunpack.c.h.b16 %v6278
          %v6367 = vunpack.c.l.b16 %v6279
          %v6368 = vunpack.c.h.b16 %v6279
          %v6369 = vunpack.c.l.b16 %v6280
          %v6370 = vunpack.c.h.b16 %v6280
          %v6371 = vunpack.c.l.b16 %v6281
          %v6372 = vunpack.c.h.b16 %v6281
          %v6373 = vunpack.c.l.b16 %v6282
          %v6374 = vunpack.c.h.b16 %v6282
          %v6375 = vunpack.c.l.b16 %v6283
          %v6376 = vunpack.c.h.b16 %v6283
          %v6377 = vunpack.c.l.b16 %v6284
          %v6378 = vunpack.c.h.b16 %v6284
          %v6379 = vunpack.c.l.b16 %v6285
          %v6380 = vunpack.c.h.b16 %v6285
          %v6381 = vunpack.c.l.b16 %v6286
          %v6382 = vunpack.c.h.b16 %v6286
          %v6383 = vunpack.c.l.b16 %v6287
          %v6384 = vunpack.c.h.b16 %v6287
          %v6385 = vunpack.c.l.b16 %v6288
          %v6386 = vunpack.c.h.b16 %v6288
          %v6387 = vunpack.c.l.b16 %v6289
          %v6388 = vunpack.c.h.b16 %v6289
          %v6389 = vunpack.c.l.b16 %v6290
          %v6390 = vunpack.c.h.b16 %v6290
          %v6391 = vunpack.c.l.b16 %v6291
          %v6392 = vunpack.c.h.b16 %v6291
          %v6393 = vunpack.c.l.b16 %v6292
          %v6394 = vunpack.c.h.b16 %v6292
          %v6395 = vpack.c.b16 %v6333, %v6331
          %v6396 = vpack.c.b16 %v6334, %v6332
          %v6397 = vpack.c.b16 %v6337, %v6335
          %v6398 = vpack.c.b16 %v6338, %v6336
          %v6399 = vpack.c.b16 %v6341, %v6339
          %v6400 = vpack.c.b16 %v6342, %v6340
          %v6401 = vpack.c.b16 %v6345, %v6343
          %v6402 = vpack.c.b16 %v6346, %v6344
          %v6403 = vpack.c.b16 %v6349, %v6347
          %v6404 = vpack.c.b16 %v6350, %v6348
          %v6405 = vpack.c.b16 %v6353, %v6351
          %v6406 = vpack.c.b16 %v6354, %v6352
          %v6407 = vpack.c.b16 %v6357, %v6355
          %v6408 = vpack.c.b16 %v6358, %v6356
          %v6409 = vpack.c.b16 %v6361, %v6359
          %v6410 = vpack.c.b16 %v6362, %v6360
          %v6411 = vpack.c.b16 %v6365, %v6363
          %v6412 = vpack.c.b16 %v6366, %v6364
          %v6413 = vpack.c.b16 %v6369, %v6367
          %v6414 = vpack.c.b16 %v6370, %v6368
          %v6415 = vpack.c.b16 %v6373, %v6371
          %v6416 = vpack.c.b16 %v6374, %v6372
          %v6417 = vpack.c.b16 %v6377, %v6375
          %v6418 = vpack.c.b16 %v6378, %v6376
          %v6419 = vpack.c.b16 %v6381, %v6379
          %v6420 = vpack.c.b16 %v6382, %v6380
          %v6421 = vpack.c.b16 %v6385, %v6383
          %v6422 = vpack.c.b16 %v6386, %v6384
          %v6423 = vpack.c.b16 %v6389, %v6387
          %v6424 = vpack.c.b16 %v6390, %v6388
          %v6425 = vpack.c.b16 %v6393, %v6391
          %v6426 = vpack.c.b16 %v6394, %v6392
          %6459 = vmatpush.bf16.msra.mxu0 %v6409
          %6460 = vmatpush.bf16.msra.mxu0 %v6407
          %6461 = vmatpush.bf16.msra.mxu0 %v6405
          %6462 = vmatpush.bf16.msra.mxu0 %v6403
          %6463 = vmatpush.bf16.msra.mxu0 %v6401
          %6464 = vmatpush.bf16.msra.mxu0 %v6399
          %6465 = vmatpush.bf16.msra.mxu0 %v6397
          %6466 = vmatpush.bf16.msra.mxu0 %v6395
          %6467 = vmatmul.bf16.gmra.mxu0 %v6259
          %v6468 = vpop.f32.mrf.mxu0
          %v6469 = vadd.f32 %v6295, %v6468
          %v6470 = vpop.f32.mrf.mxu0
          %6471 = vdwg.mxu0
          %6472 = vmatpush.bf16.msra.mxu0 %v6425
          %6473 = vmatpush.bf16.msra.mxu0 %v6423
          %6474 = vmatpush.bf16.msra.mxu0 %v6421
          %6475 = vmatpush.bf16.msra.mxu0 %v6419
          %6476 = vmatpush.bf16.msra.mxu0 %v6417
          %6477 = vmatpush.bf16.msra.mxu0 %v6415
          %6478 = vmatpush.bf16.msra.mxu0 %v6413
          %6479 = vmatpush.bf16.msra.mxu0 %v6411
          %6480 = vmatmul.bf16.gmra.mxu0 %v6260
          %v6481 = vpop.f32.mrf.mxu0
          %v6482 = vadd.f32 %v6469, %v6481
          %v6483 = vpop.f32.mrf.mxu0
          %6484 = vdwg.mxu0
          %6485 = vmatpush.bf16.msra.mxu0 %v6410
          %6486 = vmatpush.bf16.msra.mxu0 %v6408
          %6487 = vmatpush.bf16.msra.mxu0 %v6406
          %6488 = vmatpush.bf16.msra.mxu0 %v6404
          %6489 = vmatpush.bf16.msra.mxu0 %v6402
          %6490 = vmatpush.bf16.msra.mxu0 %v6400
          %6491 = vmatpush.bf16.msra.mxu0 %v6398
          %6492 = vmatpush.bf16.msra.mxu0 %v6396
          %6493 = vmatmul.bf16.gmra.mxu0 %v6259
          %v6494 = vpop.f32.mrf.mxu0
          %v6495 = vadd.f32 %v6296, %v6494
          %v6496 = vpop.f32.mrf.mxu0
          %6497 = vdwg.mxu0
          %6498 = vmatpush.bf16.msra.mxu0 %v6426
          %6499 = vmatpush.bf16.msra.mxu0 %v6424
          %6500 = vmatpush.bf16.msra.mxu0 %v6422
          %6501 = vmatpush.bf16.msra.mxu0 %v6420
          %6502 = vmatpush.bf16.msra.mxu0 %v6418
          %6503 = vmatpush.bf16.msra.mxu0 %v6416
          %6504 = vmatpush.bf16.msra.mxu0 %v6414
          %6505 = vmatpush.bf16.msra.mxu0 %v6412
          %6506 = vmatmul.bf16.gmra.mxu0 %v6260
          %v6507 = vpop.f32.mrf.mxu0
          %v6508 = vadd.f32 %v6495, %v6507
          %v6509 = vpop.f32.mrf.mxu0
          %6510 = vdwg.mxu0
          %v6513 = vrot.slane %v6508, 7
          %vm6514 = vcmask 1040384
          %v6515 = vsel %vm6514, %v6482, %v6513
          %v6517 = vlaneseq
          %vm6518 = vcmp.ge.s32.totalorder %v6517, 0
          %vm6519 = vcmp.lt.s32.totalorder %v6517, 256
          %vm6520 = vmand %vm6518, %vm6519
          %6521 = vst.msk [vmem:[%s543] sm:$0x3] %vm6520, %v6515
        $region100: #{stnkd_forward.1} parent=71 // pred_fallthru
          _
        %p6522 = scmp.lt.s32.totalorder %s33, 1
        %s6523 = scalar_select %p6522, %s33, 1
        %s6524 = smul.addr %s6523, 2
        %s6525 = scalar_lea.vmem %s13, %s6524
        // Predicated region
        $region101: #{stnkd_forward.1} parent=71 // pred_check
          %p6526 = pneg %p339
        $region102: #{stnkd_forward.1} parent=71 // pred_check_branch
          %6528 = sbr.rel (%p6526) target = $region104
        $region103: #{stnkd_forward.1} parent=71 // pred_region
          _
        $region104: #{stnkd_forward.1} parent=71 // pred_fallthru
          _
      $region72: #{stnkd_forward.1} parent=5 // pred_fallthru
        _
      %p6529 = scmp.le.s32.totalorder 2, %s24
      // Predicated region
      $region105: #{stnkd_forward.1} parent=5 // pred_check
        %p6530 = pneg %p6529
      $region106: #{stnkd_forward.1} parent=5 // pred_check_branch
        %6532 = sbr.rel (%p6530) target = $region108
      $region107: #{stnkd_forward.1} parent=5 // pred_region
        %s6533 = ssub.s32 %s24, 2
        // Predicated region
        $region109: #{stnkd_forward.1} parent=107 // pred_check
          %p6534 = pneg %p345
        $region110: #{stnkd_forward.1} parent=107 // pred_check_branch
          %6536 = sbr.rel (%p6534) target = $region112
        $region111: #{stnkd_forward.1} parent=107 // pred_region
          %p6537 = scmp.lt.s32.totalorder %s35, 1
          %s6538 = scalar_select %p6537, %s35, 1
          %s6539 = smul.addr %s6538, 2
          %s6540 = scalar_lea.vmem %s13, %s6539
        $region112: #{stnkd_forward.1} parent=107 // pred_fallthru
          _
      $region108: #{stnkd_forward.1} parent=5 // pred_fallthru
        _
    $region6: #{stnkd_forward.1} parent=1 // loop_footer
      %s28 = sadd.s32 1, %s24
    $region7: #{stnkd_forward.1} parent=1 // loop_footer_branch
      %23 = sbr.rel target = $region3
    $region8: #{stnkd_forward.1} parent=1 // loop_exit
      _
    %6541 = vsyncpa [#allocation4], 1
    %s6542 = scalar_lea.sflag [#allocation4], 1
    %6543 = vsyncpa %s6542, 1
    %6544 = vsyncpa [#allocation6], 1
    %6545 = vsyncpa [#allocation9], 1

</llo_original>
